<compile_context>
chip_gen: v7x
topology: tpu7x:2x2x1
jax: 0.10.0
libtpu: 0.0.40
codegen_flags: <defaults>
</compile_context>

<pallas_src>
import math
from functools import partial

import jax
import jax.numpy as jnp
from jax.experimental import pallas as pl
from jax.experimental.pallas import tpu as pltpu

OUT_LANES = 128  # lane-dense padded width of the final output store


# ----------------------------- in-kernel helpers -----------------------------

def _layernorm(x, w, b, eps=1e-5):
    mu = jnp.mean(x, axis=-1, keepdims=True)
    xc = x - mu
    var = jnp.mean(xc * xc, axis=-1, keepdims=True)
    return xc * jax.lax.rsqrt(var + eps) * w + b


# ------------------------------- fused kernel --------------------------------

def fused_forward_kernel(
        x_ref, poolm_ref,
        wqkv_ref, bqkv_ref, wout_ref, bout_ref, ln1w_ref, ln1b_ref,
        w1_ref, b1_ref, w2_ref, b2_ref, ln2w_ref, ln2b_ref,
        hsum_ref, hexp_ref,
        gw_ref, gb_ref, ew_ref, eb_ref, gexp_ref, cfold_ref,
        o_ref, *, num_layers, nhead):
    x = x_ref[...]                       # (2*S, E) f32; rows = (seq-pos major, batch minor)
    R, E = x.shape
    S = R // 2
    dh = E // nhead
    scale = 1.0 / math.sqrt(dh)

    for l in range(num_layers):          # static unroll over stacked layer weights
        xb = x.astype(jnp.bfloat16)

        # Fused q|k|v projection: ONE lane-dense (R,E)@(E,3E) MXU matmul.
        qkv = (jnp.dot(xb, wqkv_ref[l], preferred_element_type=jnp.float32)
               + bqkv_ref[l])                                        # (R, 3E) f32
        # Partner rows (the other of the two sequence positions, same batch
        # element): swap the two S-row halves (static, sublane-tile aligned).
        qkv_p = jnp.concatenate([qkv[S:, :], qkv[:S, :]], axis=0)
        diff = qkv - qkv_p               # k_self-k_other at lanes [E:2E], v diff at [2E:3E]

        # Per-head score difference s_self - s_other via one constant block-sum matmul.
        ds = scale * jnp.dot((qkv[:, :E] * diff[:, E:2 * E]).astype(jnp.bfloat16),
                             hsum_ref[...],
                             preferred_element_type=jnp.float32)     # (R, nhead)
        # Length-2 softmax == sigmoid: EUP exp + approx reciprocal, no cross-lane max/sum.
        p = pl.reciprocal(1.0 + jnp.exp(-ds), approx=True)           # (R, nhead)
        # Lane-broadcast per-head probabilities with a constant (nhead, E) expand matmul.
        pexp = jnp.dot(p.astype(jnp.bfloat16), hexp_ref[...],
                       preferred_element_type=jnp.float32)           # (R, E)
        # ctx = p*v_self + (1-p)*v_other, purely elementwise.
        ctx = qkv_p[:, 2 * E:] + pexp * diff[:, 2 * E:]              # (R, E)
        attn = (jnp.dot(ctx.astype(jnp.bfloat16), wout_ref[l],
                        preferred_element_type=jnp.float32) + bout_ref[l])

        # residual + LN1, FFN (relu), residual + LN2 — elementwise kept in f32.
        y = _layernorm(x + attn, ln1w_ref[l], ln1b_ref[l])
        # FFN: bias+ReLU math in f32 (portable to v5e), intermediate STORED bf16
        # to halve the (R, dim_ff) vreg footprint on v6e/v7x.
        h1 = jnp.maximum(
            jnp.dot(y.astype(jnp.bfloat16), w1_ref[l],
                    preferred_element_type=jnp.float32) + b1_ref[l],
            0.0).astype(jnp.bfloat16)                                # (R, F) bf16
        ff = (jnp.dot(h1, w2_ref[l], preferred_element_type=jnp.float32)
              + b2_ref[l])
        x = _layernorm(y + ff, ln2w_ref[l], ln2b_ref[l])

    # Mean over the batch axis (torch.mean(memory, dim=1)) as a constant pooling matmul.
    pooled_b = jnp.dot(poolm_ref[...], x.astype(jnp.bfloat16),
                       preferred_element_type=jnp.float32).astype(jnp.bfloat16)  # (B, E)

    # MoE head: gate softmax (exact divide — runs once) + all experts in one matmul.
    g = (jnp.dot(pooled_b, gw_ref[...], preferred_element_type=jnp.float32)
         + gb_ref[...])                                              # (B, NE)
    g = g - jnp.max(g, axis=-1, keepdims=True)
    eg = jnp.exp(g)
    gate = eg / jnp.sum(eg, axis=-1, keepdims=True)                  # (B, NE) exact
    eo = (jnp.dot(pooled_b, ew_ref[...], preferred_element_type=jnp.float32)
          + eb_ref[...])                                             # (B, NE*C), cols = (e, c)
    ge = jnp.dot(gate.astype(jnp.bfloat16), gexp_ref[...],
                 preferred_element_type=jnp.float32)                 # gate broadcast to (B, NE*C)
    o_ref[...] = jnp.dot((ge * eo).astype(jnp.bfloat16), cfold_ref[...],
                         preferred_element_type=jnp.float32)         # (B, 128) lane-dense


# --------------------------------- wrapper ------------------------------------

def transformer_moe_forward(src, params, *, nhead):
    # TODO(synk): embedding gather + positional-encoding add left in plain JAX.
    emb = params['embedding'][src]                        # (B, S, E)
    B, S = src.shape
    E = emb.shape[-1]
    # TODO(synk): attention restructure specialises the length-2 attention axis
    # (src batch under batch_first=False); general lengths need the softmax path.
    assert B == 2, "kernel specialised to attention axis length 2"
    x = (emb + params['pe'][None, :S, :]).astype(jnp.float32).reshape(B * S, E)

    st, moe, ac = params['stack'], params['moe'], params['attn_const']
    L = st['wqkv'].shape[0]
    # pooling matrix: poolm[b, b*S + s] = 1/S  (1/8 is exact in bf16)
    poolm = (jnp.repeat(jnp.eye(B, dtype=jnp.float32), S, axis=1) / S
             ).astype(jnp.bfloat16)                       # (B, B*S)

    args = (x, poolm,
            st['wqkv'], st['bqkv'], st['wout_t'], st['bout'],
            st['ln1w'], st['ln1b'], st['w1_t'], st['b1'],
            st['w2_t'], st['b2'], st['ln2w'], st['ln2b'],
            ac['hsum'], ac['hexp'],
            moe['gw_t'], moe['gb'], moe['ew_flat'], moe['eb_flat'],
            moe['gexp'], moe['cfold'])

    vmem = pl.BlockSpec(memory_space=pltpu.MemorySpace.VMEM)
    out = pl.pallas_call(
        partial(fused_forward_kernel, num_layers=L, nhead=nhead),
        out_shape=jax.ShapeDtypeStruct((B, OUT_LANES), jnp.float32),
        in_specs=[vmem] * len(args),
        out_specs=vmem,
    )(*args)
    return out[:, :params['num_classes']]


# ------------------------------ parameter setup --------------------------------

def positional_encoding(max_len, d_model):
    pos = jnp.arange(max_len, dtype=jnp.float32)[:, None]
    div = jnp.exp(jnp.arange(0, d_model, 2, dtype=jnp.float32)
                  * (-math.log(10000.0) / d_model))
    pe = jnp.zeros((max_len, d_model), jnp.float32)
    pe = pe.at[:, 0::2].set(jnp.sin(pos * div))
    pe = pe.at[:, 1::2].set(jnp.cos(pos * div))
    return pe


def _u(key, shape, fan_in):
    b = 1.0 / math.sqrt(fan_in)
    return jax.random.uniform(key, shape, jnp.float32, -b, b)


def init_params(key, vocab_size, d_model, nhead, num_layers, num_classes,
                num_experts, dim_feedforward, max_len=64):
    assert num_classes <= OUT_LANES
    E, F = d_model, dim_feedforward
    dh = E // nhead
    nk = 4 + 10 * num_layers + 2 * num_experts
    ks = iter(jax.random.split(key, nk))
    params = {
        'embedding': jax.random.normal(next(ks), (vocab_size, E), jnp.float32),
        'pe': positional_encoding(max_len, E),
        'num_classes': num_classes,
    }

    names = ('wqkv', 'bqkv', 'wout_t', 'bout', 'ln1w', 'ln1b',
             'w1_t', 'b1', 'w2_t', 'b2', 'ln2w', 'ln2b')
    per = {n: [] for n in names}
    for _ in range(num_layers):
        wq = _u(next(ks), (E, E), E)
        wk = _u(next(ks), (E, E), E)
        wv = _u(next(ks), (E, E), E)
        bqkv = _u(next(ks), (1, 3 * E), E)
        wout = _u(next(ks), (E, E), E)
        w1 = _u(next(ks), (F, E), E)
        w2 = _u(next(ks), (E, F), F)
        per['wqkv'].append(jnp.concatenate([wq.T, wk.T, wv.T], axis=1))   # (E, 3E)
        per['bqkv'].append(bqkv)                                          # (1, 3E)
        per['wout_t'].append(wout.T)
        per['bout'].append(_u(next(ks), (1, E), E))
        per['ln1w'].append(jnp.ones((1, E), jnp.float32))
        per['ln1b'].append(jnp.zeros((1, E), jnp.float32))
        per['w1_t'].append(w1.T)
        per['b1'].append(_u(next(ks), (1, F), E))
        per['w2_t'].append(w2.T)
        per['b2'].append(_u(next(ks), (1, E), F))
        per['ln2w'].append(jnp.ones((1, E), jnp.float32))
        per['ln2b'].append(jnp.zeros((1, E), jnp.float32))

    bf16_names = {'wqkv', 'wout_t', 'w1_t', 'w2_t'}
    stack = {}
    for n in names:
        arr = jnp.stack(per[n], axis=0)                   # leading L axis
        stack[n] = arr.astype(jnp.bfloat16) if n in bf16_names else arr
    params['stack'] = stack

    # attention constants: per-head block-sum (E, nhead) and expand (nhead, E)
    head_mask = (jnp.arange(E)[:, None] // dh
                 == jnp.arange(nhead)[None, :]).astype(jnp.float32)
    params['attn_const'] = {'hsum': head_mask.astype(jnp.bfloat16),
                            'hexp': head_mask.T.astype(jnp.bfloat16)}

    gate_w = _u(next(ks), (num_experts, E), E)            # (NE, E)
    gate_b = _u(next(ks), (1, num_experts), E)
    expert_w = jnp.stack([_u(next(ks), (num_classes, E), E)
                          for _ in range(num_experts)], axis=0)   # (NE, C, E)
    expert_b = jnp.stack([_u(next(ks), (num_classes,), E)
                          for _ in range(num_experts)], axis=0)   # (NE, C)
    nec = num_experts * num_classes
    ew_flat = jnp.transpose(expert_w, (2, 0, 1)).reshape(E, nec)  # cols = (e, c)
    eb_flat = expert_b.reshape(1, nec)
    # gate-expand: (NE, NE*C) with gexp[e, e*C + c] = 1
    gexp = jnp.repeat(jnp.eye(num_experts, dtype=jnp.float32), num_classes, axis=1)
    # class-fold: (NE*C, OUT_LANES) with cfold[e*C + c, c] = 1 (zero-padded lanes)
    cfold = jnp.tile(jnp.eye(num_classes, dtype=jnp.float32), (num_experts, 1))
    cfold = jnp.pad(cfold, ((0, 0), (0, OUT_LANES - num_classes)))
    params['moe'] = {
        'gw_t': gate_w.T.astype(jnp.bfloat16),            # (E, NE)
        'gb': gate_b,                                     # (1, NE)
        'ew_flat': ew_flat.astype(jnp.bfloat16),          # (E, NE*C)
        'eb_flat': eb_flat,                               # (1, NE*C)
        'gexp': gexp.astype(jnp.bfloat16),                # (NE, NE*C) exact 0/1
        'cfold': cfold.astype(jnp.bfloat16),              # (NE*C, 128) exact 0/1
    }
    return params


# ------------------------------------ main --------------------------------------

if __name__ == "__main__":
    # small shapes consistent with the module
    B, S = 2, 8
    vocab_size, d_model, nhead = 100, 32, 4
    num_layers, num_classes, num_experts = 2, 4, 4
    dim_feedforward = 2048   # nn.TransformerEncoderLayer default

    key = jax.random.PRNGKey(0)
    kp, kx = jax.random.split(key)
    params = init_params(kp, vocab_size, d_model, nhead, num_layers,
                         num_classes, num_experts, dim_feedforward)
    src = jax.random.randint(kx, (B, S), 0, vocab_size, dtype=jnp.int32)

    out = transformer_moe_forward(src, params, nhead=nhead)
    out = jax.block_until_ready(out)
    assert out.shape == (B, num_classes) and out.dtype == jnp.float32
    assert bool(jnp.all(jnp.isfinite(out)))
    print("KERNEL_OK")
</pallas_src>

<mosaic_0001>
module attributes {stable_mosaic.version = 11 : i64} {
  func.func @fused_forward_kernel(%arg0: memref<16x32xf32, #tpu.memory_space<vmem>>, %arg1: memref<2x16xbf16, #tpu.memory_space<vmem>>, %arg2: memref<2x32x96xbf16, #tpu.memory_space<vmem>>, %arg3: memref<2x1x96xf32, #tpu.memory_space<vmem>>, %arg4: memref<2x32x32xbf16, #tpu.memory_space<vmem>>, %arg5: memref<2x1x32xf32, #tpu.memory_space<vmem>>, %arg6: memref<2x1x32xf32, #tpu.memory_space<vmem>>, %arg7: memref<2x1x32xf32, #tpu.memory_space<vmem>>, %arg8: memref<2x32x2048xbf16, #tpu.memory_space<vmem>>, %arg9: memref<2x1x2048xf32, #tpu.memory_space<vmem>>, %arg10: memref<2x2048x32xbf16, #tpu.memory_space<vmem>>, %arg11: memref<2x1x32xf32, #tpu.memory_space<vmem>>, %arg12: memref<2x1x32xf32, #tpu.memory_space<vmem>>, %arg13: memref<2x1x32xf32, #tpu.memory_space<vmem>>, %arg14: memref<32x4xbf16, #tpu.memory_space<vmem>>, %arg15: memref<4x32xbf16, #tpu.memory_space<vmem>>, %arg16: memref<32x4xbf16, #tpu.memory_space<vmem>>, %arg17: memref<1x4xf32, #tpu.memory_space<vmem>>, %arg18: memref<32x16xbf16, #tpu.memory_space<vmem>>, %arg19: memref<1x16xf32, #tpu.memory_space<vmem>>, %arg20: memref<4x16xbf16, #tpu.memory_space<vmem>>, %arg21: memref<16x128xbf16, #tpu.memory_space<vmem>>, %arg22: memref<2x128xf32, #tpu.memory_space<vmem>>) attributes {dimension_semantics = [], scalar_prefetch = 0 : i64, scratch_operands = 0 : i64, tpu.core_type = #tpu.core_type<tc>} {
    %c0 = arith.constant 0 : index
    %c0_0 = arith.constant 0 : index
    %0 = vector.load %arg0[%c0, %c0_0] : memref<16x32xf32, #tpu.memory_space<vmem>>, vector<16x32xf32>
    %1 = arith.truncf %0 : vector<16x32xf32> to vector<16x32xbf16>
    %c0_1 = arith.constant 0 : index
    %c0_2 = arith.constant 0 : index
    %c0_3 = arith.constant 0 : index
    %2 = vector.load %arg2[%c0_1, %c0_2, %c0_3] : memref<2x32x96xbf16, #tpu.memory_space<vmem>>, vector<1x32x96xbf16>
    %3 = vector.shape_cast %2 : vector<1x32x96xbf16> to vector<32x96xbf16>
    %cst = arith.constant dense<0.000000e+00> : vector<16x96xf32>
    %4 = tpu.matmul %1, %3, %cst {dimension_numbers = #tpu.dot_dimension_numbers<[1], [0], [0], [1], [0, 0, 1, 1], [], []>} : vector<16x32xbf16>, vector<32x96xbf16>, vector<16x96xf32> -> vector<16x96xf32>
    %c0_4 = arith.constant 0 : index
    %c0_5 = arith.constant 0 : index
    %c0_6 = arith.constant 0 : index
    %5 = vector.load %arg3[%c0_4, %c0_5, %c0_6] : memref<2x1x96xf32, #tpu.memory_space<vmem>>, vector<1x1x96xf32>
    %6 = vector.shape_cast %5 : vector<1x1x96xf32> to vector<1x96xf32>
    %7 = vector.broadcast %6 : vector<1x96xf32> to vector<16x96xf32>
    %8 = arith.addf %4, %7 : vector<16x96xf32>
    %9 = vector.extract_strided_slice %8 {offsets = [8, 0], sizes = [8, 96], strides = [1, 1]} : vector<16x96xf32> to vector<8x96xf32>
    %10 = vector.extract_strided_slice %8 {offsets = [0, 0], sizes = [8, 96], strides = [1, 1]} : vector<16x96xf32> to vector<8x96xf32>
    %11 = tpu.concatenate %9, %10 in 0 : vector<8x96xf32>, vector<8x96xf32> -> vector<16x96xf32>
    %12 = arith.subf %8, %11 : vector<16x96xf32>
    %13 = vector.extract_strided_slice %8 {offsets = [0, 0], sizes = [16, 32], strides = [1, 1]} : vector<16x96xf32> to vector<16x32xf32>
    %14 = vector.extract_strided_slice %12 {offsets = [0, 32], sizes = [16, 32], strides = [1, 1]} : vector<16x96xf32> to vector<16x32xf32>
    %15 = arith.mulf %13, %14 : vector<16x32xf32>
    %16 = arith.truncf %15 : vector<16x32xf32> to vector<16x32xbf16>
    %c0_7 = arith.constant 0 : index
    %c0_8 = arith.constant 0 : index
    %17 = vector.load %arg14[%c0_7, %c0_8] : memref<32x4xbf16, #tpu.memory_space<vmem>>, vector<32x4xbf16>
    %cst_9 = arith.constant dense<0.000000e+00> : vector<16x4xf32>
    %18 = tpu.matmul %16, %17, %cst_9 {dimension_numbers = #tpu.dot_dimension_numbers<[1], [0], [0], [1], [0, 0, 1, 1], [], []>} : vector<16x32xbf16>, vector<32x4xbf16>, vector<16x4xf32> -> vector<16x4xf32>
    %cst_10 = arith.constant 0.353553385 : f32
    %19 = vector.broadcast %cst_10 : f32 to vector<16x4xf32>
    %20 = arith.mulf %19, %18 : vector<16x4xf32>
    %cst_11 = arith.constant 0.000000e+00 : f32
    %21 = vector.broadcast %cst_11 : f32 to vector<16x4xf32>
    %22 = arith.subf %21, %20 : vector<16x4xf32>
    %23 = math.exp %22 : vector<16x4xf32>
    %cst_12 = arith.constant 1.000000e+00 : f32
    %24 = vector.broadcast %cst_12 : f32 to vector<16x4xf32>
    %25 = arith.addf %24, %23 : vector<16x4xf32>
    %26 = tpu.reciprocal %25 {approx = true} : vector<16x4xf32> -> vector<16x4xf32>
    %27 = arith.truncf %26 : vector<16x4xf32> to vector<16x4xbf16>
    %c0_13 = arith.constant 0 : index
    %c0_14 = arith.constant 0 : index
    %28 = vector.load %arg15[%c0_13, %c0_14] : memref<4x32xbf16, #tpu.memory_space<vmem>>, vector<4x32xbf16>
    %cst_15 = arith.constant dense<0.000000e+00> : vector<16x32xf32>
    %29 = tpu.matmul %27, %28, %cst_15 {dimension_numbers = #tpu.dot_dimension_numbers<[1], [0], [0], [1], [0, 0, 1, 1], [], []>} : vector<16x4xbf16>, vector<4x32xbf16>, vector<16x32xf32> -> vector<16x32xf32>
    %30 = vector.extract_strided_slice %11 {offsets = [0, 64], sizes = [16, 32], strides = [1, 1]} : vector<16x96xf32> to vector<16x32xf32>
    %31 = vector.extract_strided_slice %12 {offsets = [0, 64], sizes = [16, 32], strides = [1, 1]} : vector<16x96xf32> to vector<16x32xf32>
    %32 = arith.mulf %29, %31 : vector<16x32xf32>
    %33 = arith.addf %30, %32 : vector<16x32xf32>
    %34 = arith.truncf %33 : vector<16x32xf32> to vector<16x32xbf16>
    %c0_16 = arith.constant 0 : index
    %c0_17 = arith.constant 0 : index
    %c0_18 = arith.constant 0 : index
    %35 = vector.load %arg4[%c0_16, %c0_17, %c0_18] : memref<2x32x32xbf16, #tpu.memory_space<vmem>>, vector<1x32x32xbf16>
    %36 = vector.shape_cast %35 : vector<1x32x32xbf16> to vector<32x32xbf16>
    %cst_19 = arith.constant dense<0.000000e+00> : vector<16x32xf32>
    %37 = tpu.matmul %34, %36, %cst_19 {dimension_numbers = #tpu.dot_dimension_numbers<[1], [0], [0], [1], [0, 0, 1, 1], [], []>} : vector<16x32xbf16>, vector<32x32xbf16>, vector<16x32xf32> -> vector<16x32xf32>
    %c0_20 = arith.constant 0 : index
    %c0_21 = arith.constant 0 : index
    %c0_22 = arith.constant 0 : index
    %38 = vector.load %arg5[%c0_20, %c0_21, %c0_22] : memref<2x1x32xf32, #tpu.memory_space<vmem>>, vector<1x1x32xf32>
    %39 = vector.shape_cast %38 : vector<1x1x32xf32> to vector<1x32xf32>
    %40 = vector.broadcast %39 : vector<1x32xf32> to vector<16x32xf32>
    %41 = arith.addf %37, %40 : vector<16x32xf32>
    %42 = arith.addf %0, %41 : vector<16x32xf32>
    %c0_23 = arith.constant 0 : index
    %c0_24 = arith.constant 0 : index
    %c0_25 = arith.constant 0 : index
    %43 = vector.load %arg6[%c0_23, %c0_24, %c0_25] : memref<2x1x32xf32, #tpu.memory_space<vmem>>, vector<1x1x32xf32>
    %44 = vector.shape_cast %43 : vector<1x1x32xf32> to vector<1x32xf32>
    %c0_26 = arith.constant 0 : index
    %c0_27 = arith.constant 0 : index
    %c0_28 = arith.constant 0 : index
    %45 = vector.load %arg7[%c0_26, %c0_27, %c0_28] : memref<2x1x32xf32, #tpu.memory_space<vmem>>, vector<1x1x32xf32>
    %46 = vector.shape_cast %45 : vector<1x1x32xf32> to vector<1x32xf32>
    %cst_29 = arith.constant dense<0.000000e+00> : vector<16xf32>
    %47 = vector.multi_reduction <add>, %42, %cst_29 [1] : vector<16x32xf32> to vector<16xf32>
    %48 = vector.shape_cast %47 : vector<16xf32> to vector<16x1xf32>
    %cst_30 = arith.constant 3.200000e+01 : f32
    %49 = vector.broadcast %cst_30 : f32 to vector<16x1xf32>
    %50 = arith.divf %48, %49 : vector<16x1xf32>
    %51 = vector.broadcast %50 : vector<16x1xf32> to vector<16x32xf32>
    %52 = arith.subf %42, %51 : vector<16x32xf32>
    %53 = arith.mulf %52, %52 : vector<16x32xf32>
    %cst_31 = arith.constant dense<0.000000e+00> : vector<16xf32>
    %54 = vector.multi_reduction <add>, %53, %cst_31 [1] : vector<16x32xf32> to vector<16xf32>
    %55 = vector.shape_cast %54 : vector<16xf32> to vector<16x1xf32>
    %cst_32 = arith.constant 3.200000e+01 : f32
    %56 = vector.broadcast %cst_32 : f32 to vector<16x1xf32>
    %57 = arith.divf %55, %56 : vector<16x1xf32>
    %cst_33 = arith.constant 9.99999974E-6 : f32
    %58 = vector.broadcast %cst_33 : f32 to vector<16x1xf32>
    %59 = arith.addf %57, %58 : vector<16x1xf32>
    %60 = math.rsqrt %59 : vector<16x1xf32>
    %61 = vector.broadcast %60 : vector<16x1xf32> to vector<16x32xf32>
    %62 = arith.mulf %52, %61 : vector<16x32xf32>
    %63 = vector.broadcast %44 : vector<1x32xf32> to vector<16x32xf32>
    %64 = arith.mulf %62, %63 : vector<16x32xf32>
    %65 = vector.broadcast %46 : vector<1x32xf32> to vector<16x32xf32>
    %66 = arith.addf %64, %65 : vector<16x32xf32>
    %67 = arith.truncf %66 : vector<16x32xf32> to vector<16x32xbf16>
    %c0_34 = arith.constant 0 : index
    %c0_35 = arith.constant 0 : index
    %c0_36 = arith.constant 0 : index
    %68 = vector.load %arg8[%c0_34, %c0_35, %c0_36] : memref<2x32x2048xbf16, #tpu.memory_space<vmem>>, vector<1x32x2048xbf16>
    %69 = vector.shape_cast %68 : vector<1x32x2048xbf16> to vector<32x2048xbf16>
    %cst_37 = arith.constant dense<0.000000e+00> : vector<16x2048xf32>
    %70 = tpu.matmul %67, %69, %cst_37 {dimension_numbers = #tpu.dot_dimension_numbers<[1], [0], [0], [1], [0, 0, 1, 1], [], []>} : vector<16x32xbf16>, vector<32x2048xbf16>, vector<16x2048xf32> -> vector<16x2048xf32>
    %c0_38 = arith.constant 0 : index
    %c0_39 = arith.constant 0 : index
    %c0_40 = arith.constant 0 : index
    %71 = vector.load %arg9[%c0_38, %c0_39, %c0_40] : memref<2x1x2048xf32, #tpu.memory_space<vmem>>, vector<1x1x2048xf32>
    %72 = vector.shape_cast %71 : vector<1x1x2048xf32> to vector<1x2048xf32>
    %73 = vector.broadcast %72 : vector<1x2048xf32> to vector<16x2048xf32>
    %74 = arith.addf %70, %73 : vector<16x2048xf32>
    %cst_41 = arith.constant 0.000000e+00 : f32
    %75 = vector.broadcast %cst_41 : f32 to vector<16x2048xf32>
    %76 = arith.maximumf %74, %75 : vector<16x2048xf32>
    %77 = arith.truncf %76 : vector<16x2048xf32> to vector<16x2048xbf16>
    %c0_42 = arith.constant 0 : index
    %c0_43 = arith.constant 0 : index
    %c0_44 = arith.constant 0 : index
    %78 = vector.load %arg10[%c0_42, %c0_43, %c0_44] : memref<2x2048x32xbf16, #tpu.memory_space<vmem>>, vector<1x2048x32xbf16>
    %79 = vector.shape_cast %78 : vector<1x2048x32xbf16> to vector<2048x32xbf16>
    %cst_45 = arith.constant dense<0.000000e+00> : vector<16x32xf32>
    %80 = tpu.matmul %77, %79, %cst_45 {dimension_numbers = #tpu.dot_dimension_numbers<[1], [0], [0], [1], [0, 0, 1, 1], [], []>} : vector<16x2048xbf16>, vector<2048x32xbf16>, vector<16x32xf32> -> vector<16x32xf32>
    %c0_46 = arith.constant 0 : index
    %c0_47 = arith.constant 0 : index
    %c0_48 = arith.constant 0 : index
    %81 = vector.load %arg11[%c0_46, %c0_47, %c0_48] : memref<2x1x32xf32, #tpu.memory_space<vmem>>, vector<1x1x32xf32>
    %82 = vector.shape_cast %81 : vector<1x1x32xf32> to vector<1x32xf32>
    %83 = vector.broadcast %82 : vector<1x32xf32> to vector<16x32xf32>
    %84 = arith.addf %80, %83 : vector<16x32xf32>
    %85 = arith.addf %66, %84 : vector<16x32xf32>
    %c0_49 = arith.constant 0 : index
    %c0_50 = arith.constant 0 : index
    %c0_51 = arith.constant 0 : index
    %86 = vector.load %arg12[%c0_49, %c0_50, %c0_51] : memref<2x1x32xf32, #tpu.memory_space<vmem>>, vector<1x1x32xf32>
    %87 = vector.shape_cast %86 : vector<1x1x32xf32> to vector<1x32xf32>
    %c0_52 = arith.constant 0 : index
    %c0_53 = arith.constant 0 : index
    %c0_54 = arith.constant 0 : index
    %88 = vector.load %arg13[%c0_52, %c0_53, %c0_54] : memref<2x1x32xf32, #tpu.memory_space<vmem>>, vector<1x1x32xf32>
    %89 = vector.shape_cast %88 : vector<1x1x32xf32> to vector<1x32xf32>
    %cst_55 = arith.constant dense<0.000000e+00> : vector<16xf32>
    %90 = vector.multi_reduction <add>, %85, %cst_55 [1] : vector<16x32xf32> to vector<16xf32>
    %91 = vector.shape_cast %90 : vector<16xf32> to vector<16x1xf32>
    %cst_56 = arith.constant 3.200000e+01 : f32
    %92 = vector.broadcast %cst_56 : f32 to vector<16x1xf32>
    %93 = arith.divf %91, %92 : vector<16x1xf32>
    %94 = vector.broadcast %93 : vector<16x1xf32> to vector<16x32xf32>
    %95 = arith.subf %85, %94 : vector<16x32xf32>
    %96 = arith.mulf %95, %95 : vector<16x32xf32>
    %cst_57 = arith.constant dense<0.000000e+00> : vector<16xf32>
    %97 = vector.multi_reduction <add>, %96, %cst_57 [1] : vector<16x32xf32> to vector<16xf32>
    %98 = vector.shape_cast %97 : vector<16xf32> to vector<16x1xf32>
    %cst_58 = arith.constant 3.200000e+01 : f32
    %99 = vector.broadcast %cst_58 : f32 to vector<16x1xf32>
    %100 = arith.divf %98, %99 : vector<16x1xf32>
    %cst_59 = arith.constant 9.99999974E-6 : f32
    %101 = vector.broadcast %cst_59 : f32 to vector<16x1xf32>
    %102 = arith.addf %100, %101 : vector<16x1xf32>
    %103 = math.rsqrt %102 : vector<16x1xf32>
    %104 = vector.broadcast %103 : vector<16x1xf32> to vector<16x32xf32>
    %105 = arith.mulf %95, %104 : vector<16x32xf32>
    %106 = vector.broadcast %87 : vector<1x32xf32> to vector<16x32xf32>
    %107 = arith.mulf %105, %106 : vector<16x32xf32>
    %108 = vector.broadcast %89 : vector<1x32xf32> to vector<16x32xf32>
    %109 = arith.addf %107, %108 : vector<16x32xf32>
    %110 = arith.truncf %109 : vector<16x32xf32> to vector<16x32xbf16>
    %c1 = arith.constant 1 : index
    %c0_60 = arith.constant 0 : index
    %c0_61 = arith.constant 0 : index
    %111 = vector.load %arg2[%c1, %c0_60, %c0_61] : memref<2x32x96xbf16, #tpu.memory_space<vmem>>, vector<1x32x96xbf16>
    %112 = vector.shape_cast %111 : vector<1x32x96xbf16> to vector<32x96xbf16>
    %cst_62 = arith.constant dense<0.000000e+00> : vector<16x96xf32>
    %113 = tpu.matmul %110, %112, %cst_62 {dimension_numbers = #tpu.dot_dimension_numbers<[1], [0], [0], [1], [0, 0, 1, 1], [], []>} : vector<16x32xbf16>, vector<32x96xbf16>, vector<16x96xf32> -> vector<16x96xf32>
    %c1_63 = arith.constant 1 : index
    %c0_64 = arith.constant 0 : index
    %c0_65 = arith.constant 0 : index
    %114 = vector.load %arg3[%c1_63, %c0_64, %c0_65] : memref<2x1x96xf32, #tpu.memory_space<vmem>>, vector<1x1x96xf32>
    %115 = vector.shape_cast %114 : vector<1x1x96xf32> to vector<1x96xf32>
    %116 = vector.broadcast %115 : vector<1x96xf32> to vector<16x96xf32>
    %117 = arith.addf %113, %116 : vector<16x96xf32>
    %118 = vector.extract_strided_slice %117 {offsets = [8, 0], sizes = [8, 96], strides = [1, 1]} : vector<16x96xf32> to vector<8x96xf32>
    %119 = vector.extract_strided_slice %117 {offsets = [0, 0], sizes = [8, 96], strides = [1, 1]} : vector<16x96xf32> to vector<8x96xf32>
    %120 = tpu.concatenate %118, %119 in 0 : vector<8x96xf32>, vector<8x96xf32> -> vector<16x96xf32>
    %121 = arith.subf %117, %120 : vector<16x96xf32>
    %122 = vector.extract_strided_slice %117 {offsets = [0, 0], sizes = [16, 32], strides = [1, 1]} : vector<16x96xf32> to vector<16x32xf32>
    %123 = vector.extract_strided_slice %121 {offsets = [0, 32], sizes = [16, 32], strides = [1, 1]} : vector<16x96xf32> to vector<16x32xf32>
    %124 = arith.mulf %122, %123 : vector<16x32xf32>
    %125 = arith.truncf %124 : vector<16x32xf32> to vector<16x32xbf16>
    %c0_66 = arith.constant 0 : index
    %c0_67 = arith.constant 0 : index
    %126 = vector.load %arg14[%c0_66, %c0_67] : memref<32x4xbf16, #tpu.memory_space<vmem>>, vector<32x4xbf16>
    %cst_68 = arith.constant dense<0.000000e+00> : vector<16x4xf32>
    %127 = tpu.matmul %125, %126, %cst_68 {dimension_numbers = #tpu.dot_dimension_numbers<[1], [0], [0], [1], [0, 0, 1, 1], [], []>} : vector<16x32xbf16>, vector<32x4xbf16>, vector<16x4xf32> -> vector<16x4xf32>
    %cst_69 = arith.constant 0.353553385 : f32
    %128 = vector.broadcast %cst_69 : f32 to vector<16x4xf32>
    %129 = arith.mulf %128, %127 : vector<16x4xf32>
    %cst_70 = arith.constant 0.000000e+00 : f32
    %130 = vector.broadcast %cst_70 : f32 to vector<16x4xf32>
    %131 = arith.subf %130, %129 : vector<16x4xf32>
    %132 = math.exp %131 : vector<16x4xf32>
    %cst_71 = arith.constant 1.000000e+00 : f32
    %133 = vector.broadcast %cst_71 : f32 to vector<16x4xf32>
    %134 = arith.addf %133, %132 : vector<16x4xf32>
    %135 = tpu.reciprocal %134 {approx = true} : vector<16x4xf32> -> vector<16x4xf32>
    %136 = arith.truncf %135 : vector<16x4xf32> to vector<16x4xbf16>
    %c0_72 = arith.constant 0 : index
    %c0_73 = arith.constant 0 : index
    %137 = vector.load %arg15[%c0_72, %c0_73] : memref<4x32xbf16, #tpu.memory_space<vmem>>, vector<4x32xbf16>
    %cst_74 = arith.constant dense<0.000000e+00> : vector<16x32xf32>
    %138 = tpu.matmul %136, %137, %cst_74 {dimension_numbers = #tpu.dot_dimension_numbers<[1], [0], [0], [1], [0, 0, 1, 1], [], []>} : vector<16x4xbf16>, vector<4x32xbf16>, vector<16x32xf32> -> vector<16x32xf32>
    %139 = vector.extract_strided_slice %120 {offsets = [0, 64], sizes = [16, 32], strides = [1, 1]} : vector<16x96xf32> to vector<16x32xf32>
    %140 = vector.extract_strided_slice %121 {offsets = [0, 64], sizes = [16, 32], strides = [1, 1]} : vector<16x96xf32> to vector<16x32xf32>
    %141 = arith.mulf %138, %140 : vector<16x32xf32>
    %142 = arith.addf %139, %141 : vector<16x32xf32>
    %143 = arith.truncf %142 : vector<16x32xf32> to vector<16x32xbf16>
    %c1_75 = arith.constant 1 : index
    %c0_76 = arith.constant 0 : index
    %c0_77 = arith.constant 0 : index
    %144 = vector.load %arg4[%c1_75, %c0_76, %c0_77] : memref<2x32x32xbf16, #tpu.memory_space<vmem>>, vector<1x32x32xbf16>
    %145 = vector.shape_cast %144 : vector<1x32x32xbf16> to vector<32x32xbf16>
    %cst_78 = arith.constant dense<0.000000e+00> : vector<16x32xf32>
    %146 = tpu.matmul %143, %145, %cst_78 {dimension_numbers = #tpu.dot_dimension_numbers<[1], [0], [0], [1], [0, 0, 1, 1], [], []>} : vector<16x32xbf16>, vector<32x32xbf16>, vector<16x32xf32> -> vector<16x32xf32>
    %c1_79 = arith.constant 1 : index
    %c0_80 = arith.constant 0 : index
    %c0_81 = arith.constant 0 : index
    %147 = vector.load %arg5[%c1_79, %c0_80, %c0_81] : memref<2x1x32xf32, #tpu.memory_space<vmem>>, vector<1x1x32xf32>
    %148 = vector.shape_cast %147 : vector<1x1x32xf32> to vector<1x32xf32>
    %149 = vector.broadcast %148 : vector<1x32xf32> to vector<16x32xf32>
    %150 = arith.addf %146, %149 : vector<16x32xf32>
    %151 = arith.addf %109, %150 : vector<16x32xf32>
    %c1_82 = arith.constant 1 : index
    %c0_83 = arith.constant 0 : index
    %c0_84 = arith.constant 0 : index
    %152 = vector.load %arg6[%c1_82, %c0_83, %c0_84] : memref<2x1x32xf32, #tpu.memory_space<vmem>>, vector<1x1x32xf32>
    %153 = vector.shape_cast %152 : vector<1x1x32xf32> to vector<1x32xf32>
    %c1_85 = arith.constant 1 : index
    %c0_86 = arith.constant 0 : index
    %c0_87 = arith.constant 0 : index
    %154 = vector.load %arg7[%c1_85, %c0_86, %c0_87] : memref<2x1x32xf32, #tpu.memory_space<vmem>>, vector<1x1x32xf32>
    %155 = vector.shape_cast %154 : vector<1x1x32xf32> to vector<1x32xf32>
    %cst_88 = arith.constant dense<0.000000e+00> : vector<16xf32>
    %156 = vector.multi_reduction <add>, %151, %cst_88 [1] : vector<16x32xf32> to vector<16xf32>
    %157 = vector.shape_cast %156 : vector<16xf32> to vector<16x1xf32>
    %cst_89 = arith.constant 3.200000e+01 : f32
    %158 = vector.broadcast %cst_89 : f32 to vector<16x1xf32>
    %159 = arith.divf %157, %158 : vector<16x1xf32>
    %160 = vector.broadcast %159 : vector<16x1xf32> to vector<16x32xf32>
    %161 = arith.subf %151, %160 : vector<16x32xf32>
    %162 = arith.mulf %161, %161 : vector<16x32xf32>
    %cst_90 = arith.constant dense<0.000000e+00> : vector<16xf32>
    %163 = vector.multi_reduction <add>, %162, %cst_90 [1] : vector<16x32xf32> to vector<16xf32>
    %164 = vector.shape_cast %163 : vector<16xf32> to vector<16x1xf32>
    %cst_91 = arith.constant 3.200000e+01 : f32
    %165 = vector.broadcast %cst_91 : f32 to vector<16x1xf32>
    %166 = arith.divf %164, %165 : vector<16x1xf32>
    %cst_92 = arith.constant 9.99999974E-6 : f32
    %167 = vector.broadcast %cst_92 : f32 to vector<16x1xf32>
    %168 = arith.addf %166, %167 : vector<16x1xf32>
    %169 = math.rsqrt %168 : vector<16x1xf32>
    %170 = vector.broadcast %169 : vector<16x1xf32> to vector<16x32xf32>
    %171 = arith.mulf %161, %170 : vector<16x32xf32>
    %172 = vector.broadcast %153 : vector<1x32xf32> to vector<16x32xf32>
    %173 = arith.mulf %171, %172 : vector<16x32xf32>
    %174 = vector.broadcast %155 : vector<1x32xf32> to vector<16x32xf32>
    %175 = arith.addf %173, %174 : vector<16x32xf32>
    %176 = arith.truncf %175 : vector<16x32xf32> to vector<16x32xbf16>
    %c1_93 = arith.constant 1 : index
    %c0_94 = arith.constant 0 : index
    %c0_95 = arith.constant 0 : index
    %177 = vector.load %arg8[%c1_93, %c0_94, %c0_95] : memref<2x32x2048xbf16, #tpu.memory_space<vmem>>, vector<1x32x2048xbf16>
    %178 = vector.shape_cast %177 : vector<1x32x2048xbf16> to vector<32x2048xbf16>
    %cst_96 = arith.constant dense<0.000000e+00> : vector<16x2048xf32>
    %179 = tpu.matmul %176, %178, %cst_96 {dimension_numbers = #tpu.dot_dimension_numbers<[1], [0], [0], [1], [0, 0, 1, 1], [], []>} : vector<16x32xbf16>, vector<32x2048xbf16>, vector<16x2048xf32> -> vector<16x2048xf32>
    %c1_97 = arith.constant 1 : index
    %c0_98 = arith.constant 0 : index
    %c0_99 = arith.constant 0 : index
    %180 = vector.load %arg9[%c1_97, %c0_98, %c0_99] : memref<2x1x2048xf32, #tpu.memory_space<vmem>>, vector<1x1x2048xf32>
    %181 = vector.shape_cast %180 : vector<1x1x2048xf32> to vector<1x2048xf32>
    %182 = vector.broadcast %181 : vector<1x2048xf32> to vector<16x2048xf32>
    %183 = arith.addf %179, %182 : vector<16x2048xf32>
    %cst_100 = arith.constant 0.000000e+00 : f32
    %184 = vector.broadcast %cst_100 : f32 to vector<16x2048xf32>
    %185 = arith.maximumf %183, %184 : vector<16x2048xf32>
    %186 = arith.truncf %185 : vector<16x2048xf32> to vector<16x2048xbf16>
    %c1_101 = arith.constant 1 : index
    %c0_102 = arith.constant 0 : index
    %c0_103 = arith.constant 0 : index
    %187 = vector.load %arg10[%c1_101, %c0_102, %c0_103] : memref<2x2048x32xbf16, #tpu.memory_space<vmem>>, vector<1x2048x32xbf16>
    %188 = vector.shape_cast %187 : vector<1x2048x32xbf16> to vector<2048x32xbf16>
    %cst_104 = arith.constant dense<0.000000e+00> : vector<16x32xf32>
    %189 = tpu.matmul %186, %188, %cst_104 {dimension_numbers = #tpu.dot_dimension_numbers<[1], [0], [0], [1], [0, 0, 1, 1], [], []>} : vector<16x2048xbf16>, vector<2048x32xbf16>, vector<16x32xf32> -> vector<16x32xf32>
    %c1_105 = arith.constant 1 : index
    %c0_106 = arith.constant 0 : index
    %c0_107 = arith.constant 0 : index
    %190 = vector.load %arg11[%c1_105, %c0_106, %c0_107] : memref<2x1x32xf32, #tpu.memory_space<vmem>>, vector<1x1x32xf32>
    %191 = vector.shape_cast %190 : vector<1x1x32xf32> to vector<1x32xf32>
    %192 = vector.broadcast %191 : vector<1x32xf32> to vector<16x32xf32>
    %193 = arith.addf %189, %192 : vector<16x32xf32>
    %194 = arith.addf %175, %193 : vector<16x32xf32>
    %c1_108 = arith.constant 1 : index
    %c0_109 = arith.constant 0 : index
    %c0_110 = arith.constant 0 : index
    %195 = vector.load %arg12[%c1_108, %c0_109, %c0_110] : memref<2x1x32xf32, #tpu.memory_space<vmem>>, vector<1x1x32xf32>
    %196 = vector.shape_cast %195 : vector<1x1x32xf32> to vector<1x32xf32>
    %c1_111 = arith.constant 1 : index
    %c0_112 = arith.constant 0 : index
    %c0_113 = arith.constant 0 : index
    %197 = vector.load %arg13[%c1_111, %c0_112, %c0_113] : memref<2x1x32xf32, #tpu.memory_space<vmem>>, vector<1x1x32xf32>
    %198 = vector.shape_cast %197 : vector<1x1x32xf32> to vector<1x32xf32>
    %cst_114 = arith.constant dense<0.000000e+00> : vector<16xf32>
    %199 = vector.multi_reduction <add>, %194, %cst_114 [1] : vector<16x32xf32> to vector<16xf32>
    %200 = vector.shape_cast %199 : vector<16xf32> to vector<16x1xf32>
    %cst_115 = arith.constant 3.200000e+01 : f32
    %201 = vector.broadcast %cst_115 : f32 to vector<16x1xf32>
    %202 = arith.divf %200, %201 : vector<16x1xf32>
    %203 = vector.broadcast %202 : vector<16x1xf32> to vector<16x32xf32>
    %204 = arith.subf %194, %203 : vector<16x32xf32>
    %205 = arith.mulf %204, %204 : vector<16x32xf32>
    %cst_116 = arith.constant dense<0.000000e+00> : vector<16xf32>
    %206 = vector.multi_reduction <add>, %205, %cst_116 [1] : vector<16x32xf32> to vector<16xf32>
    %207 = vector.shape_cast %206 : vector<16xf32> to vector<16x1xf32>
    %cst_117 = arith.constant 3.200000e+01 : f32
    %208 = vector.broadcast %cst_117 : f32 to vector<16x1xf32>
    %209 = arith.divf %207, %208 : vector<16x1xf32>
    %cst_118 = arith.constant 9.99999974E-6 : f32
    %210 = vector.broadcast %cst_118 : f32 to vector<16x1xf32>
    %211 = arith.addf %209, %210 : vector<16x1xf32>
    %212 = math.rsqrt %211 : vector<16x1xf32>
    %213 = vector.broadcast %212 : vector<16x1xf32> to vector<16x32xf32>
    %214 = arith.mulf %204, %213 : vector<16x32xf32>
    %215 = vector.broadcast %196 : vector<1x32xf32> to vector<16x32xf32>
    %216 = arith.mulf %214, %215 : vector<16x32xf32>
    %217 = vector.broadcast %198 : vector<1x32xf32> to vector<16x32xf32>
    %218 = arith.addf %216, %217 : vector<16x32xf32>
    %c0_119 = arith.constant 0 : index
    %c0_120 = arith.constant 0 : index
    %219 = vector.load %arg1[%c0_119, %c0_120] : memref<2x16xbf16, #tpu.memory_space<vmem>>, vector<2x16xbf16>
    %220 = arith.truncf %218 : vector<16x32xf32> to vector<16x32xbf16>
    %cst_121 = arith.constant dense<0.000000e+00> : vector<2x32xf32>
    %221 = tpu.matmul %219, %220, %cst_121 {dimension_numbers = #tpu.dot_dimension_numbers<[1], [0], [0], [1], [0, 0, 1, 1], [], []>} : vector<2x16xbf16>, vector<16x32xbf16>, vector<2x32xf32> -> vector<2x32xf32>
    %222 = arith.truncf %221 : vector<2x32xf32> to vector<2x32xbf16>
    %c0_122 = arith.constant 0 : index
    %c0_123 = arith.constant 0 : index
    %223 = vector.load %arg16[%c0_122, %c0_123] : memref<32x4xbf16, #tpu.memory_space<vmem>>, vector<32x4xbf16>
    %cst_124 = arith.constant dense<0.000000e+00> : vector<2x4xf32>
    %224 = tpu.matmul %222, %223, %cst_124 {dimension_numbers = #tpu.dot_dimension_numbers<[1], [0], [0], [1], [0, 0, 1, 1], [], []>} : vector<2x32xbf16>, vector<32x4xbf16>, vector<2x4xf32> -> vector<2x4xf32>
    %c0_125 = arith.constant 0 : index
    %c0_126 = arith.constant 0 : index
    %225 = vector.load %arg17[%c0_125, %c0_126] : memref<1x4xf32, #tpu.memory_space<vmem>>, vector<1x4xf32>
    %226 = vector.broadcast %225 : vector<1x4xf32> to vector<2x4xf32>
    %227 = arith.addf %224, %226 : vector<2x4xf32>
    %cst_127 = arith.constant dense<0xFF800000> : vector<2xf32>
    %228 = vector.multi_reduction <maximumf>, %227, %cst_127 [1] : vector<2x4xf32> to vector<2xf32>
    %229 = vector.shape_cast %228 : vector<2xf32> to vector<2x1xf32>
    %230 = vector.broadcast %229 : vector<2x1xf32> to vector<2x4xf32>
    %231 = arith.subf %227, %230 : vector<2x4xf32>
    %232 = math.exp %231 : vector<2x4xf32>
    %cst_128 = arith.constant dense<0.000000e+00> : vector<2xf32>
    %233 = vector.multi_reduction <add>, %232, %cst_128 [1] : vector<2x4xf32> to vector<2xf32>
    %234 = vector.shape_cast %233 : vector<2xf32> to vector<2x1xf32>
    %235 = vector.broadcast %234 : vector<2x1xf32> to vector<2x4xf32>
    %236 = arith.divf %232, %235 : vector<2x4xf32>
    %c0_129 = arith.constant 0 : index
    %c0_130 = arith.constant 0 : index
    %237 = vector.load %arg18[%c0_129, %c0_130] : memref<32x16xbf16, #tpu.memory_space<vmem>>, vector<32x16xbf16>
    %cst_131 = arith.constant dense<0.000000e+00> : vector<2x16xf32>
    %238 = tpu.matmul %222, %237, %cst_131 {dimension_numbers = #tpu.dot_dimension_numbers<[1], [0], [0], [1], [0, 0, 1, 1], [], []>} : vector<2x32xbf16>, vector<32x16xbf16>, vector<2x16xf32> -> vector<2x16xf32>
    %c0_132 = arith.constant 0 : index
    %c0_133 = arith.constant 0 : index
    %239 = vector.load %arg19[%c0_132, %c0_133] : memref<1x16xf32, #tpu.memory_space<vmem>>, vector<1x16xf32>
    %240 = vector.broadcast %239 : vector<1x16xf32> to vector<2x16xf32>
    %241 = arith.addf %238, %240 : vector<2x16xf32>
    %242 = arith.truncf %236 : vector<2x4xf32> to vector<2x4xbf16>
    %c0_134 = arith.constant 0 : index
    %c0_135 = arith.constant 0 : index
    %243 = vector.load %arg20[%c0_134, %c0_135] : memref<4x16xbf16, #tpu.memory_space<vmem>>, vector<4x16xbf16>
    %cst_136 = arith.constant dense<0.000000e+00> : vector<2x16xf32>
    %244 = tpu.matmul %242, %243, %cst_136 {dimension_numbers = #tpu.dot_dimension_numbers<[1], [0], [0], [1], [0, 0, 1, 1], [], []>} : vector<2x4xbf16>, vector<4x16xbf16>, vector<2x16xf32> -> vector<2x16xf32>
    %245 = arith.mulf %244, %241 : vector<2x16xf32>
    %246 = arith.truncf %245 : vector<2x16xf32> to vector<2x16xbf16>
    %c0_137 = arith.constant 0 : index
    %c0_138 = arith.constant 0 : index
    %247 = vector.load %arg21[%c0_137, %c0_138] : memref<16x128xbf16, #tpu.memory_space<vmem>>, vector<16x128xbf16>
    %cst_139 = arith.constant dense<0.000000e+00> : vector<2x128xf32>
    %248 = tpu.matmul %246, %247, %cst_139 {dimension_numbers = #tpu.dot_dimension_numbers<[1], [0], [0], [1], [0, 0, 1, 1], [], []>} : vector<2x16xbf16>, vector<16x128xbf16>, vector<2x128xf32> -> vector<2x128xf32>
    %c0_140 = arith.constant 0 : index
    %c0_141 = arith.constant 0 : index
    %249 = vector.load %arg22[%c0_140, %c0_141] : memref<2x128xf32, #tpu.memory_space<vmem>>, vector<2x128xf32>
    tpu.vector_store %arg22[%c0_140, %c0_141], %248 {strides = array<i32>} : memref<2x128xf32, #tpu.memory_space<vmem>>, vector<2x128xf32>,
    return
  }
}

</mosaic_0001>

<llo_original>
// kernel: tpu_custom_call.1
$region0: #{tpu_custom_call.1}
  #allocation0 [shape = 'u32[]', space=smem, size = 0x4, offset = 0x4, fixed_abs, tag = 'smem constant byte address 0x4 - core index']
  #allocation1 [shape = 'u32[144,128]{1,0:T(1,128)}', space=vmem, size = 0x12000, scoped, tag = 'internal scratch']
  %s0 = inlined_call_operand.vmem [shape: f32[16,32], index: 0, kind: input, shape index: {}]
  %s1 = inlined_call_operand.vmem [shape: bf16[2,16], index: 1, kind: input, shape index: {}]
  %s2 = inlined_call_operand.vmem [shape: bf16[2,32,96], index: 2, kind: input, shape index: {}]
  %s3 = inlined_call_operand.vmem [shape: f32[2,1,96], index: 3, kind: input, shape index: {}]
  %s4 = inlined_call_operand.vmem [shape: bf16[2,32,32], index: 4, kind: input, shape index: {}]
  %s5 = inlined_call_operand.vmem [shape: f32[2,1,32], index: 5, kind: input, shape index: {}]
  %s6 = inlined_call_operand.vmem [shape: f32[2,1,32], index: 6, kind: input, shape index: {}]
  %s7 = inlined_call_operand.vmem [shape: f32[2,1,32], index: 7, kind: input, shape index: {}]
  %s8 = inlined_call_operand.vmem [shape: bf16[2,32,2048], index: 8, kind: input, shape index: {}]
  %s9 = inlined_call_operand.vmem [shape: f32[2,1,2048], index: 9, kind: input, shape index: {}]
  %s10 = inlined_call_operand.vmem [shape: bf16[2,2048,32], index: 10, kind: input, shape index: {}]
  %s11 = inlined_call_operand.vmem [shape: f32[2,1,32], index: 11, kind: input, shape index: {}]
  %s12 = inlined_call_operand.vmem [shape: f32[2,1,32], index: 12, kind: input, shape index: {}]
  %s13 = inlined_call_operand.vmem [shape: f32[2,1,32], index: 13, kind: input, shape index: {}]
  %s14 = inlined_call_operand.vmem [shape: bf16[32,4], index: 14, kind: input, shape index: {}]
  %s15 = inlined_call_operand.vmem [shape: bf16[4,32], index: 15, kind: input, shape index: {}]
  %s16 = inlined_call_operand.vmem [shape: bf16[32,4], index: 16, kind: input, shape index: {}]
  %s17 = inlined_call_operand.vmem [shape: f32[1,4], index: 17, kind: input, shape index: {}]
  %s18 = inlined_call_operand.vmem [shape: bf16[32,16], index: 18, kind: input, shape index: {}]
  %s19 = inlined_call_operand.vmem [shape: f32[1,16], index: 19, kind: input, shape index: {}]
  %s20 = inlined_call_operand.vmem [shape: bf16[4,16], index: 20, kind: input, shape index: {}]
  %s21 = inlined_call_operand.vmem [shape: bf16[16,128], index: 21, kind: input, shape index: {}]
  %s22 = inlined_call_operand.hbm [shape: f32[2,128], index: 22, kind: output, shape index: {}]
  %s23 = sld [smem:[#allocation0]]
  $region98: #{tpu_custom_call.1} parent=0
    _
  %s25 = ssub.s32 1, %s23
  %s26 = scalar_select 0, %s25, %s23
  $region1: #{tpu_custom_call.1} parent=0
    #allocation2 [shape = 'u8[1024]{0}', space=vmem, size = 0x400, scoped, tag = 'output window, operand 0, single buffered']
    #allocation3 [shape = 's32[1]{0}', space=sflag, size = 0x4, scoped, tag = 'scoped memory for tpu_custom_call.1']
    %27 = vsyncpa [#allocation3], 0
    // Predicated region
    $region2: #{tpu_custom_call.1} parent=1 // pred_check
      _
    $region3: #{tpu_custom_call.1} parent=1 // pred_check_branch
      %29 = sbr.rel (0) target = $region5
    $region4: #{tpu_custom_call.1} parent=1 // pred_region
      _
    $region5: #{tpu_custom_call.1} parent=1 // pred_fallthru
      _
    // Predicated region
    $region6: #{tpu_custom_call.1} parent=1 // pred_check
      _
    $region7: #{tpu_custom_call.1} parent=1 // pred_check_branch
      %31 = sbr.rel (0) target = $region9
    $region8: #{tpu_custom_call.1} parent=1 // pred_region
      _
    $region9: #{tpu_custom_call.1} parent=1 // pred_fallthru
      _
    // Predicated region
    $region10: #{tpu_custom_call.1} parent=1 // pred_check
      _
    $region11: #{tpu_custom_call.1} parent=1 // pred_check_branch
      %33 = sbr.rel (0) target = $region13
    $region12: #{tpu_custom_call.1} parent=1 // pred_region
      _
    $region13: #{tpu_custom_call.1} parent=1 // pred_fallthru
      _
    // Predicated region
    $region14: #{tpu_custom_call.1} parent=1 // pred_check
      _
    $region15: #{tpu_custom_call.1} parent=1 // pred_check_branch
      %35 = sbr.rel (0) target = $region17
    $region16: #{tpu_custom_call.1} parent=1 // pred_region
      _
    $region17: #{tpu_custom_call.1} parent=1 // pred_fallthru
      _
    // Predicated region
    $region18: #{tpu_custom_call.1} parent=1 // pred_check
      _
    $region19: #{tpu_custom_call.1} parent=1 // pred_check_branch
      %37 = sbr.rel (0) target = $region21
    $region20: #{tpu_custom_call.1} parent=1 // pred_region
      _
    $region21: #{tpu_custom_call.1} parent=1 // pred_fallthru
      _
    // Predicated region
    $region22: #{tpu_custom_call.1} parent=1 // pred_check
      _
    $region23: #{tpu_custom_call.1} parent=1 // pred_check_branch
      %39 = sbr.rel (0) target = $region25
    $region24: #{tpu_custom_call.1} parent=1 // pred_region
      _
    $region25: #{tpu_custom_call.1} parent=1 // pred_fallthru
      _
    // Predicated region
    $region26: #{tpu_custom_call.1} parent=1 // pred_check
      _
    $region27: #{tpu_custom_call.1} parent=1 // pred_check_branch
      %41 = sbr.rel (0) target = $region29
    $region28: #{tpu_custom_call.1} parent=1 // pred_region
      _
    $region29: #{tpu_custom_call.1} parent=1 // pred_fallthru
      _
    // Predicated region
    $region30: #{tpu_custom_call.1} parent=1 // pred_check
      _
    $region31: #{tpu_custom_call.1} parent=1 // pred_check_branch
      %43 = sbr.rel (0) target = $region33
    $region32: #{tpu_custom_call.1} parent=1 // pred_region
      _
    $region33: #{tpu_custom_call.1} parent=1 // pred_fallthru
      _
    // Predicated region
    $region34: #{tpu_custom_call.1} parent=1 // pred_check
      _
    $region35: #{tpu_custom_call.1} parent=1 // pred_check_branch
      %45 = sbr.rel (0) target = $region37
    $region36: #{tpu_custom_call.1} parent=1 // pred_region
      _
    $region37: #{tpu_custom_call.1} parent=1 // pred_fallthru
      _
    // Predicated region
    $region38: #{tpu_custom_call.1} parent=1 // pred_check
      _
    $region39: #{tpu_custom_call.1} parent=1 // pred_check_branch
      %47 = sbr.rel (0) target = $region41
    $region40: #{tpu_custom_call.1} parent=1 // pred_region
      _
    $region41: #{tpu_custom_call.1} parent=1 // pred_fallthru
      _
    // Predicated region
    $region42: #{tpu_custom_call.1} parent=1 // pred_check
      _
    $region43: #{tpu_custom_call.1} parent=1 // pred_check_branch
      %49 = sbr.rel (0) target = $region45
    $region44: #{tpu_custom_call.1} parent=1 // pred_region
      _
    $region45: #{tpu_custom_call.1} parent=1 // pred_fallthru
      _
    // Predicated region
    $region46: #{tpu_custom_call.1} parent=1 // pred_check
      _
    $region47: #{tpu_custom_call.1} parent=1 // pred_check_branch
      %51 = sbr.rel (0) target = $region49
    $region48: #{tpu_custom_call.1} parent=1 // pred_region
      _
    $region49: #{tpu_custom_call.1} parent=1 // pred_fallthru
      _
    // Predicated region
    $region50: #{tpu_custom_call.1} parent=1 // pred_check
      _
    $region51: #{tpu_custom_call.1} parent=1 // pred_check_branch
      %53 = sbr.rel (0) target = $region53
    $region52: #{tpu_custom_call.1} parent=1 // pred_region
      _
    $region53: #{tpu_custom_call.1} parent=1 // pred_fallthru
      _
    // Predicated region
    $region54: #{tpu_custom_call.1} parent=1 // pred_check
      _
    $region55: #{tpu_custom_call.1} parent=1 // pred_check_branch
      %55 = sbr.rel (0) target = $region57
    $region56: #{tpu_custom_call.1} parent=1 // pred_region
      _
    $region57: #{tpu_custom_call.1} parent=1 // pred_fallthru
      _
    // Predicated region
    $region58: #{tpu_custom_call.1} parent=1 // pred_check
      _
    $region59: #{tpu_custom_call.1} parent=1 // pred_check_branch
      %57 = sbr.rel (0) target = $region61
    $region60: #{tpu_custom_call.1} parent=1 // pred_region
      _
    $region61: #{tpu_custom_call.1} parent=1 // pred_fallthru
      _
    // Predicated region
    $region62: #{tpu_custom_call.1} parent=1 // pred_check
      _
    $region63: #{tpu_custom_call.1} parent=1 // pred_check_branch
      %59 = sbr.rel (0) target = $region65
    $region64: #{tpu_custom_call.1} parent=1 // pred_region
      _
    $region65: #{tpu_custom_call.1} parent=1 // pred_fallthru
      _
    // Predicated region
    $region66: #{tpu_custom_call.1} parent=1 // pred_check
      _
    $region67: #{tpu_custom_call.1} parent=1 // pred_check_branch
      %61 = sbr.rel (0) target = $region69
    $region68: #{tpu_custom_call.1} parent=1 // pred_region
      _
    $region69: #{tpu_custom_call.1} parent=1 // pred_fallthru
      _
    // Predicated region
    $region70: #{tpu_custom_call.1} parent=1 // pred_check
      _
    $region71: #{tpu_custom_call.1} parent=1 // pred_check_branch
      %63 = sbr.rel (0) target = $region73
    $region72: #{tpu_custom_call.1} parent=1 // pred_region
      _
    $region73: #{tpu_custom_call.1} parent=1 // pred_fallthru
      _
    // Predicated region
    $region74: #{tpu_custom_call.1} parent=1 // pred_check
      _
    $region75: #{tpu_custom_call.1} parent=1 // pred_check_branch
      %65 = sbr.rel (0) target = $region77
    $region76: #{tpu_custom_call.1} parent=1 // pred_region
      _
    $region77: #{tpu_custom_call.1} parent=1 // pred_fallthru
      _
    // Predicated region
    $region78: #{tpu_custom_call.1} parent=1 // pred_check
      _
    $region79: #{tpu_custom_call.1} parent=1 // pred_check_branch
      %67 = sbr.rel (0) target = $region81
    $region80: #{tpu_custom_call.1} parent=1 // pred_region
      _
    $region81: #{tpu_custom_call.1} parent=1 // pred_fallthru
      _
    // Predicated region
    $region82: #{tpu_custom_call.1} parent=1 // pred_check
      _
    $region83: #{tpu_custom_call.1} parent=1 // pred_check_branch
      %69 = sbr.rel (0) target = $region85
    $region84: #{tpu_custom_call.1} parent=1 // pred_region
      _
    $region85: #{tpu_custom_call.1} parent=1 // pred_fallthru
      _
    // Predicated region
    $region86: #{tpu_custom_call.1} parent=1 // pred_check
      _
    $region87: #{tpu_custom_call.1} parent=1 // pred_check_branch
      %71 = sbr.rel (0) target = $region89
    $region88: #{tpu_custom_call.1} parent=1 // pred_region
      _
    $region89: #{tpu_custom_call.1} parent=1 // pred_fallthru
      _
    %v73 = vld [vmem:[%s0] sm:$0xff]
    %v74 = vld [vmem:[%s0 + $0x8] sm:$0xff]
    %v75 = vpack.c.bf16 %v74, %v73
    %v76 = vld [vmem:[%s2] sm:$0xf]
    %v77 = vld [vmem:[%s2 + $0x4] sm:$0xf]
    %v78 = vld [vmem:[%s2 + $0x8] sm:$0xf]
    %v79 = vld [vmem:[%s2 + $0xc] sm:$0xf]
    %v80 = vld [vmem:[%s3] sm:$0x1]
    %v82 = vlaneseq
    %v83 = vshrl.u32 %v82, 7
    %v84 = vsub.s32 0, %v83
    %v85 = vrot.slane %v80, %v84
    %v91 = vunpack.c.l.b16 %v76
    %v92 = vunpack.c.l.b16 %v77
    %v93 = vunpack.c.l.b16 %v78
    %v94 = vunpack.c.l.b16 %v79
    %v95 = vpack.c.b16 %v92, %v91
    %v96 = vpack.c.b16 %v94, %v93
    %vm99 = vcmask 261120
    %v101 = vsel %vm99, %v75, 0
    %103 = vmatprep.subr.bf16.mxu0 0
    %104 = vmatpush1.bf16.msra.mxu0 %v95
    %105 = vmatprep.subr.bf16.mxu0 0
    %106 = vmatpush1.bf16.msra.mxu0 %v96
    %107 = vmatprep.subr.bf16.mxu0 0
    %108 = vmatpush1.bf16.msra.mxu0 0
    %109 = vmatprep.subr.bf16.mxu0 0
    %110 = vmatpush1.bf16.msra.mxu0 0
    %111 = vmatprep.subr.bf16.mxu0 0
    %112 = vmatpush1.bf16.msra.mxu0 0
    %113 = vmatprep.subr.bf16.mxu0 0
    %114 = vmatpush1.bf16.msra.mxu0 0
    %115 = vmatprep.subr.bf16.mxu0 0
    %116 = vmatpush1.bf16.msra.mxu0 0
    %117 = vmatprep.subr.bf16.mxu0 0
    %118 = vmatpush1.bf16.msra.mxu0 0
    %119 = vmatprep.subr.bf16.mxu0 0
    %120 = vmatpush1.bf16.msra.mxu0 0
    %121 = vmatprep.subr.bf16.mxu0 0
    %122 = vmatpush1.bf16.msra.mxu0 0
    %123 = vmatprep.subr.bf16.mxu0 0
    %124 = vmatpush1.bf16.msra.mxu0 0
    %125 = vmatprep.subr.bf16.mxu0 0
    %126 = vmatpush1.bf16.msra.mxu0 0
    %127 = vmatprep.subr.bf16.mxu0 0
    %128 = vmatpush1.bf16.msra.mxu0 0
    %129 = vmatprep.subr.bf16.mxu0 0
    %130 = vmatpush1.bf16.msra.mxu0 0
    %131 = vmatprep.subr.bf16.mxu0 0
    %132 = vmatpush1.bf16.msra.mxu0 0
    %133 = vmatprep.subr.bf16.mxu0 0
    %134 = vmatpush1.bf16.msra.mxu0 0
    %135 = vmatprep.mubr.bf16.mxu0 0
    %136 = vmatmul.mubr.bf16.gmra.mrb[0].mxu0 %v101
    %v137 = vpop.f32.mrb[0].mxu0
    %v138 = vadd.f32 %v85, %v137
    %v139 = vpop.f32.mrb[0].mxu0
    %v140 = vpop.f32.mrb[0].mxu0
    %v141 = vadd.f32 %v85, %v140
    %v142 = vpop.f32.mrb[0].mxu0
    %143 = vdwg.mxu0
    %v144 = vsub.f32 %v138, %v141
    %v145 = vsub.f32 %v141, %v138
    %148 = vrot.lane.b32.xlu0 %v144, 96
    %v149 = vpop.permute.xlu0 %148
    %150 = vrot.lane.b32.xlu0 %v145, 96
    %v151 = vpop.permute.xlu0 %150
    %v154 = vmul.f32 %v138, %v149
    %v155 = vmul.f32 %v141, %v151
    %v156 = vpack.c.bf16 %v155, %v154
    %v157 = vld [vmem:[%s14] sm:$0xf]
    %v158 = vld [vmem:[%s14 + $0x4] sm:$0xf]
    %v159 = vld [vmem:[%s14 + $0x8] sm:$0xf]
    %v160 = vld [vmem:[%s14 + $0xc] sm:$0xf]
    %v165 = vunpack.c.l.b16 %v157
    %v166 = vunpack.c.l.b16 %v158
    %v167 = vunpack.c.l.b16 %v159
    %v168 = vunpack.c.l.b16 %v160
    %v169 = vpack.c.b16 %v166, %v165
    %v170 = vpack.c.b16 %v168, %v167
    %v174 = vsel %vm99, %v156, 0
    %176 = vmatprep.subr.bf16.mxu0 0
    %177 = vmatpush1.bf16.msra.mxu0 %v169
    %178 = vmatprep.subr.bf16.mxu0 0
    %179 = vmatpush1.bf16.msra.mxu0 %v170
    %180 = vmatprep.subr.bf16.mxu0 0
    %181 = vmatpush1.bf16.msra.mxu0 0
    %182 = vmatprep.subr.bf16.mxu0 0
    %183 = vmatpush1.bf16.msra.mxu0 0
    %184 = vmatprep.subr.bf16.mxu0 0
    %185 = vmatpush1.bf16.msra.mxu0 0
    %186 = vmatprep.subr.bf16.mxu0 0
    %187 = vmatpush1.bf16.msra.mxu0 0
    %188 = vmatprep.subr.bf16.mxu0 0
    %189 = vmatpush1.bf16.msra.mxu0 0
    %190 = vmatprep.subr.bf16.mxu0 0
    %191 = vmatpush1.bf16.msra.mxu0 0
    %192 = vmatprep.subr.bf16.mxu0 0
    %193 = vmatpush1.bf16.msra.mxu0 0
    %194 = vmatprep.subr.bf16.mxu0 0
    %195 = vmatpush1.bf16.msra.mxu0 0
    %196 = vmatprep.subr.bf16.mxu0 0
    %197 = vmatpush1.bf16.msra.mxu0 0
    %198 = vmatprep.subr.bf16.mxu0 0
    %199 = vmatpush1.bf16.msra.mxu0 0
    %200 = vmatprep.subr.bf16.mxu0 0
    %201 = vmatpush1.bf16.msra.mxu0 0
    %202 = vmatprep.subr.bf16.mxu0 0
    %203 = vmatpush1.bf16.msra.mxu0 0
    %204 = vmatprep.subr.bf16.mxu0 0
    %205 = vmatpush1.bf16.msra.mxu0 0
    %206 = vmatprep.subr.bf16.mxu0 0
    %207 = vmatpush1.bf16.msra.mxu0 0
    %208 = vmatprep.mubr.bf16.mxu0 0
    %209 = vmatmul.mubr.bf16.gmra.mrb[0].mxu0 %v174
    %v210 = vpop.f32.mrb[0].mxu0
    %v211 = vadd.f32 0.0, %v210
    %v212 = vpop.f32.mrb[0].mxu0
    %v213 = vpop.f32.mrb[0].mxu0
    %v214 = vadd.f32 0.0, %v213
    %v215 = vpop.f32.mrb[0].mxu0
    %216 = vdwg.mxu0
    %v217 = vmul.f32 %v211, 0.35355338
    %v218 = vmul.f32 %v214, 0.35355338
    %v219 = vsub.f32 0.0, %v217
    %v220 = vsub.f32 0.0, %v218
    %v221 = vmul.f32 %v219, 1.442695
    %v222 = vpow.pop %v221
    %v223 = vmul.f32 %v220, 1.442695
    %v224 = vpow.pop %v223
    %v225 = vadd.f32 %v222, 1.0
    %v226 = vadd.f32 %v224, 1.0
    %v227 = vrcp.pop %v225
    %v228 = vrcp.pop %v226
    %v229 = vpack.c.bf16 %v228, %v227
    %v230 = vld [vmem:[%s15] sm:$0x3]
    %vm231 = vcmask 31744
    %v233 = vsel %vm231, %v229, 0
    %vm235 = vcmask 1041408
    %v237 = vsel %vm235, %v230, 0
    %239 = vmatprep.subr.bf16.mxu0 0
    %240 = vmatpush1.bf16.msra.mxu0 %v237
    %241 = vmatprep.subr.bf16.mxu0 0
    %242 = vmatpush1.bf16.msra.mxu0 0
    %243 = vmatprep.subr.bf16.mxu0 0
    %244 = vmatpush1.bf16.msra.mxu0 0
    %245 = vmatprep.subr.bf16.mxu0 0
    %246 = vmatpush1.bf16.msra.mxu0 0
    %247 = vmatprep.subr.bf16.mxu0 0
    %248 = vmatpush1.bf16.msra.mxu0 0
    %249 = vmatprep.subr.bf16.mxu0 0
    %250 = vmatpush1.bf16.msra.mxu0 0
    %251 = vmatprep.subr.bf16.mxu0 0
    %252 = vmatpush1.bf16.msra.mxu0 0
    %253 = vmatprep.subr.bf16.mxu0 0
    %254 = vmatpush1.bf16.msra.mxu0 0
    %255 = vmatprep.subr.bf16.mxu0 0
    %256 = vmatpush1.bf16.msra.mxu0 0
    %257 = vmatprep.subr.bf16.mxu0 0
    %258 = vmatpush1.bf16.msra.mxu0 0
    %259 = vmatprep.subr.bf16.mxu0 0
    %260 = vmatpush1.bf16.msra.mxu0 0
    %261 = vmatprep.subr.bf16.mxu0 0
    %262 = vmatpush1.bf16.msra.mxu0 0
    %263 = vmatprep.subr.bf16.mxu0 0
    %264 = vmatpush1.bf16.msra.mxu0 0
    %265 = vmatprep.subr.bf16.mxu0 0
    %266 = vmatpush1.bf16.msra.mxu0 0
    %267 = vmatprep.subr.bf16.mxu0 0
    %268 = vmatpush1.bf16.msra.mxu0 0
    %269 = vmatprep.subr.bf16.mxu0 0
    %270 = vmatpush1.bf16.msra.mxu0 0
    %271 = vmatprep.mubr.bf16.mxu0 0
    %272 = vmatmul.mubr.bf16.gmra.mrb[0].mxu0 %v233
    %v273 = vpop.f32.mrb[0].mxu0
    %v274 = vadd.f32 0.0, %v273
    %v275 = vpop.f32.mrb[0].mxu0
    %v276 = vpop.f32.mrb[0].mxu0
    %v277 = vadd.f32 0.0, %v276
    %v278 = vpop.f32.mrb[0].mxu0
    %279 = vdwg.mxu0
    %280 = vrot.lane.b32.xlu0 %v144, 64
    %v281 = vpop.permute.xlu0 %280
    %282 = vrot.lane.b32.xlu0 %v145, 64
    %v283 = vpop.permute.xlu0 %282
    %v286 = vmul.f32 %v274, %v281
    %v287 = vmul.f32 %v277, %v283
    %290 = vrot.lane.b32.xlu0 %v286, 64
    %v291 = vpop.permute.xlu0 %290
    %292 = vrot.lane.b32.xlu0 %v287, 64
    %v293 = vpop.permute.xlu0 %292
    %v296 = vadd.f32 %v141, %v291
    %v297 = vadd.f32 %v138, %v293
    %v298 = vpack.c.bf16 %v297, %v296
    %v299 = vld [vmem:[%s4] sm:$0xf]
    %v300 = vld [vmem:[%s4 + $0x4] sm:$0xf]
    %v301 = vld [vmem:[%s4 + $0x8] sm:$0xf]
    %v302 = vld [vmem:[%s4 + $0xc] sm:$0xf]
    %v303 = vld [vmem:[%s5] sm:$0x1]
    %v305 = vlaneseq
    %v306 = vshrl.u32 %v305, 7
    %v307 = vsub.s32 0, %v306
    %v308 = vrot.slane %v303, %v307
    %311 = vrot.lane.b32.xlu0 %v298, 64
    %v312 = vpop.permute.xlu0 %311
    %v317 = vunpack.c.l.b16 %v299
    %v318 = vunpack.c.l.b16 %v300
    %v319 = vunpack.c.l.b16 %v301
    %v320 = vunpack.c.l.b16 %v302
    %v321 = vpack.c.b16 %v318, %v317
    %v322 = vpack.c.b16 %v320, %v319
    %v326 = vsel %vm99, %v312, 0
    %328 = vmatprep.subr.bf16.mxu0 0
    %329 = vmatpush1.bf16.msra.mxu0 %v321
    %330 = vmatprep.subr.bf16.mxu0 0
    %331 = vmatpush1.bf16.msra.mxu0 %v322
    %332 = vmatprep.subr.bf16.mxu0 0
    %333 = vmatpush1.bf16.msra.mxu0 0
    %334 = vmatprep.subr.bf16.mxu0 0
    %335 = vmatpush1.bf16.msra.mxu0 0
    %336 = vmatprep.subr.bf16.mxu0 0
    %337 = vmatpush1.bf16.msra.mxu0 0
    %338 = vmatprep.subr.bf16.mxu0 0
    %339 = vmatpush1.bf16.msra.mxu0 0
    %340 = vmatprep.subr.bf16.mxu0 0
    %341 = vmatpush1.bf16.msra.mxu0 0
    %342 = vmatprep.subr.bf16.mxu0 0
    %343 = vmatpush1.bf16.msra.mxu0 0
    %344 = vmatprep.subr.bf16.mxu0 0
    %345 = vmatpush1.bf16.msra.mxu0 0
    %346 = vmatprep.subr.bf16.mxu0 0
    %347 = vmatpush1.bf16.msra.mxu0 0
    %348 = vmatprep.subr.bf16.mxu0 0
    %349 = vmatpush1.bf16.msra.mxu0 0
    %350 = vmatprep.subr.bf16.mxu0 0
    %351 = vmatpush1.bf16.msra.mxu0 0
    %352 = vmatprep.subr.bf16.mxu0 0
    %353 = vmatpush1.bf16.msra.mxu0 0
    %354 = vmatprep.subr.bf16.mxu0 0
    %355 = vmatpush1.bf16.msra.mxu0 0
    %356 = vmatprep.subr.bf16.mxu0 0
    %357 = vmatpush1.bf16.msra.mxu0 0
    %358 = vmatprep.subr.bf16.mxu0 0
    %359 = vmatpush1.bf16.msra.mxu0 0
    %360 = vmatprep.mubr.bf16.mxu0 0
    %361 = vmatmul.mubr.bf16.gmra.mrb[0].mxu0 %v326
    %v362 = vpop.f32.mrb[0].mxu0
    %v363 = vadd.f32 %v308, %v362
    %v364 = vpop.f32.mrb[0].mxu0
    %v365 = vpop.f32.mrb[0].mxu0
    %v366 = vadd.f32 %v308, %v365
    %v367 = vpop.f32.mrb[0].mxu0
    %368 = vdwg.mxu0
    %v369 = vadd.f32 %v73, %v363
    %v370 = vadd.f32 %v74, %v366
    %v371 = vld [vmem:[%s6] sm:$0x1]
    %v372 = vld [vmem:[%s7] sm:$0x1]
    %v373 = vsel %vm99, %v369, 0.0
    %374 = vadd.xlane.f32.xlu0 %v373
    %v375 = vpop.xlane.xlu0 %374
    %v376 = vsel %vm99, %v370, 0.0
    %377 = vadd.xlane.f32.xlu0 %v376
    %v378 = vpop.xlane.xlu0 %377
    %v379 = vrcp.pop 32.0
    %v380 = vmul.f32 %v375, %v379
    %v381 = vmul.f32 %v378, %v379
    %v382 = vsub.f32 %v369, %v380
    %v383 = vsub.f32 %v370, %v381
    %v384 = vmul.f32 %v382, %v382
    %v385 = vmul.f32 %v383, %v383
    %v386 = vsel %vm99, %v384, 0.0
    %387 = vadd.xlane.f32.xlu0 %v386
    %v388 = vpop.xlane.xlu0 %387
    %v389 = vsel %vm99, %v385, 0.0
    %390 = vadd.xlane.f32.xlu0 %v389
    %v391 = vpop.xlane.xlu0 %390
    %v392 = vmul.f32 %v388, %v379
    %v393 = vmul.f32 %v391, %v379
    %v394 = vadd.f32 %v392, 1e-05
    %v395 = vadd.f32 %v393, 1e-05
    %v396 = vrsqrt.pop %v394
    %v397 = vrsqrt.pop %v395
    %v398 = vmul.f32 %v382, %v396
    %v399 = vmul.f32 %v383, %v397
    %v401 = vlaneseq
    %v402 = vshrl.u32 %v401, 7
    %v403 = vsub.s32 0, %v402
    %v404 = vrot.slane %v371, %v403
    %v406 = vmul.f32 %v398, %v404
    %v407 = vmul.f32 %v399, %v404
    %v409 = vlaneseq
    %v410 = vshrl.u32 %v409, 7
    %v411 = vsub.s32 0, %v410
    %v412 = vrot.slane %v372, %v411
    %v414 = vadd.f32 %v406, %v412
    %v415 = vadd.f32 %v407, %v412
    %v416 = vpack.c.bf16 %v415, %v414
    %v417 = vld [vmem:[%s8] sm:$0xff]
    %v418 = vld [vmem:[%s8 + $0x8] sm:$0xff]
    %v419 = vld [vmem:[%s8 + $0x10] sm:$0xff]
    %v420 = vld [vmem:[%s8 + $0x18] sm:$0xff]
    %v421 = vld [vmem:[%s8 + $0x20] sm:$0xff]
    %v422 = vld [vmem:[%s8 + $0x28] sm:$0xff]
    %v423 = vld [vmem:[%s8 + $0x30] sm:$0xff]
    %v424 = vld [vmem:[%s8 + $0x38] sm:$0xff]
    %v425 = vld [vmem:[%s8 + $0x40] sm:$0xff]
    %v426 = vld [vmem:[%s8 + $0x48] sm:$0xff]
    %v427 = vld [vmem:[%s8 + $0x50] sm:$0xff]
    %v428 = vld [vmem:[%s8 + $0x58] sm:$0xff]
    %v429 = vld [vmem:[%s8 + $0x60] sm:$0xff]
    %v430 = vld [vmem:[%s8 + $0x68] sm:$0xff]
    %v431 = vld [vmem:[%s8 + $0x70] sm:$0xff]
    %v432 = vld [vmem:[%s8 + $0x78] sm:$0xff]
    %v433 = vld [vmem:[%s8 + $0x80] sm:$0xff]
    %v434 = vld [vmem:[%s8 + $0x88] sm:$0xff]
    %v435 = vld [vmem:[%s8 + $0x90] sm:$0xff]
    %v436 = vld [vmem:[%s8 + $0x98] sm:$0xff]
    %v437 = vld [vmem:[%s8 + $0xa0] sm:$0xff]
    %v438 = vld [vmem:[%s8 + $0xa8] sm:$0xff]
    %v439 = vld [vmem:[%s8 + $0xb0] sm:$0xff]
    %v440 = vld [vmem:[%s8 + $0xb8] sm:$0xff]
    %v441 = vld [vmem:[%s8 + $0xc0] sm:$0xff]
    %v442 = vld [vmem:[%s8 + $0xc8] sm:$0xff]
    %v443 = vld [vmem:[%s8 + $0xd0] sm:$0xff]
    %v444 = vld [vmem:[%s8 + $0xd8] sm:$0xff]
    %v445 = vld [vmem:[%s8 + $0xe0] sm:$0xff]
    %v446 = vld [vmem:[%s8 + $0xe8] sm:$0xff]
    %v447 = vld [vmem:[%s8 + $0xf0] sm:$0xff]
    %v448 = vld [vmem:[%s8 + $0xf8] sm:$0xff]
    %v449 = vld [vmem:[%s9] sm:$0xff]
    %v450 = vld [vmem:[%s9 + $0x8] sm:$0xff]
    %v453 = vlaneseq
    %v454 = vshrl.u32 %v453, 7
    %v455 = vsub.s32 0, %v454
    %v456 = vrot.slane %v449, %v455
    %v457 = vlaneseq
    %v458 = vshrl.u32 %v457, 7
    %v459 = vsub.s32 1, %v458
    %v460 = vrot.slane %v449, %v459
    %v461 = vlaneseq
    %v462 = vshrl.u32 %v461, 7
    %v463 = vsub.s32 2, %v462
    %v464 = vrot.slane %v449, %v463
    %v465 = vlaneseq
    %v466 = vshrl.u32 %v465, 7
    %v467 = vsub.s32 3, %v466
    %v468 = vrot.slane %v449, %v467
    %v469 = vlaneseq
    %v470 = vshrl.u32 %v469, 7
    %v471 = vsub.s32 4, %v470
    %v472 = vrot.slane %v449, %v471
    %v473 = vlaneseq
    %v474 = vshrl.u32 %v473, 7
    %v475 = vsub.s32 5, %v474
    %v476 = vrot.slane %v449, %v475
    %v477 = vlaneseq
    %v478 = vshrl.u32 %v477, 7
    %v479 = vsub.s32 6, %v478
    %v480 = vrot.slane %v449, %v479
    %v481 = vlaneseq
    %v482 = vshrl.u32 %v481, 7
    %v483 = vsub.s32 7, %v482
    %v484 = vrot.slane %v449, %v483
    %v485 = vlaneseq
    %v486 = vshrl.u32 %v485, 7
    %v487 = vsub.s32 0, %v486
    %v488 = vrot.slane %v450, %v487
    %v489 = vlaneseq
    %v490 = vshrl.u32 %v489, 7
    %v491 = vsub.s32 1, %v490
    %v492 = vrot.slane %v450, %v491
    %v493 = vlaneseq
    %v494 = vshrl.u32 %v493, 7
    %v495 = vsub.s32 2, %v494
    %v496 = vrot.slane %v450, %v495
    %v497 = vlaneseq
    %v498 = vshrl.u32 %v497, 7
    %v499 = vsub.s32 3, %v498
    %v500 = vrot.slane %v450, %v499
    %v501 = vlaneseq
    %v502 = vshrl.u32 %v501, 7
    %v503 = vsub.s32 4, %v502
    %v504 = vrot.slane %v450, %v503
    %v505 = vlaneseq
    %v506 = vshrl.u32 %v505, 7
    %v507 = vsub.s32 5, %v506
    %v508 = vrot.slane %v450, %v507
    %v509 = vlaneseq
    %v510 = vshrl.u32 %v509, 7
    %v511 = vsub.s32 6, %v510
    %v512 = vrot.slane %v450, %v511
    %v513 = vlaneseq
    %v514 = vshrl.u32 %v513, 7
    %v515 = vsub.s32 7, %v514
    %v516 = vrot.slane %v450, %v515
    %v565 = vunpack.c.l.b16 %v417
    %v566 = vunpack.c.h.b16 %v417
    %v567 = vunpack.c.l.b16 %v418
    %v568 = vunpack.c.h.b16 %v418
    %v569 = vunpack.c.l.b16 %v419
    %v570 = vunpack.c.h.b16 %v419
    %v571 = vunpack.c.l.b16 %v420
    %v572 = vunpack.c.h.b16 %v420
    %v573 = vunpack.c.l.b16 %v421
    %v574 = vunpack.c.h.b16 %v421
    %v575 = vunpack.c.l.b16 %v422
    %v576 = vunpack.c.h.b16 %v422
    %v577 = vunpack.c.l.b16 %v423
    %v578 = vunpack.c.h.b16 %v423
    %v579 = vunpack.c.l.b16 %v424
    %v580 = vunpack.c.h.b16 %v424
    %v581 = vunpack.c.l.b16 %v425
    %v582 = vunpack.c.h.b16 %v425
    %v583 = vunpack.c.l.b16 %v426
    %v584 = vunpack.c.h.b16 %v426
    %v585 = vunpack.c.l.b16 %v427
    %v586 = vunpack.c.h.b16 %v427
    %v587 = vunpack.c.l.b16 %v428
    %v588 = vunpack.c.h.b16 %v428
    %v589 = vunpack.c.l.b16 %v429
    %v590 = vunpack.c.h.b16 %v429
    %v591 = vunpack.c.l.b16 %v430
    %v592 = vunpack.c.h.b16 %v430
    %v593 = vunpack.c.l.b16 %v431
    %v594 = vunpack.c.h.b16 %v431
    %v595 = vunpack.c.l.b16 %v432
    %v596 = vunpack.c.h.b16 %v432
    %v597 = vunpack.c.l.b16 %v433
    %v598 = vunpack.c.h.b16 %v433
    %v599 = vunpack.c.l.b16 %v434
    %v600 = vunpack.c.h.b16 %v434
    %v601 = vunpack.c.l.b16 %v435
    %v602 = vunpack.c.h.b16 %v435
    %v603 = vunpack.c.l.b16 %v436
    %v604 = vunpack.c.h.b16 %v436
    %v605 = vunpack.c.l.b16 %v437
    %v606 = vunpack.c.h.b16 %v437
    %v607 = vunpack.c.l.b16 %v438
    %v608 = vunpack.c.h.b16 %v438
    %v609 = vunpack.c.l.b16 %v439
    %v610 = vunpack.c.h.b16 %v439
    %v611 = vunpack.c.l.b16 %v440
    %v612 = vunpack.c.h.b16 %v440
    %v613 = vunpack.c.l.b16 %v441
    %v614 = vunpack.c.h.b16 %v441
    %v615 = vunpack.c.l.b16 %v442
    %v616 = vunpack.c.h.b16 %v442
    %v617 = vunpack.c.l.b16 %v443
    %v618 = vunpack.c.h.b16 %v443
    %v619 = vunpack.c.l.b16 %v444
    %v620 = vunpack.c.h.b16 %v444
    %v621 = vunpack.c.l.b16 %v445
    %v622 = vunpack.c.h.b16 %v445
    %v623 = vunpack.c.l.b16 %v446
    %v624 = vunpack.c.h.b16 %v446
    %v625 = vunpack.c.l.b16 %v447
    %v626 = vunpack.c.h.b16 %v447
    %v627 = vunpack.c.l.b16 %v448
    %v628 = vunpack.c.h.b16 %v448
    %v629 = vpack.c.b16 %v581, %v565
    %v630 = vpack.c.b16 %v582, %v566
    %v631 = vpack.c.b16 %v583, %v567
    %v632 = vpack.c.b16 %v584, %v568
    %v633 = vpack.c.b16 %v585, %v569
    %v634 = vpack.c.b16 %v586, %v570
    %v635 = vpack.c.b16 %v587, %v571
    %v636 = vpack.c.b16 %v588, %v572
    %v637 = vpack.c.b16 %v589, %v573
    %v638 = vpack.c.b16 %v590, %v574
    %v639 = vpack.c.b16 %v591, %v575
    %v640 = vpack.c.b16 %v592, %v576
    %v641 = vpack.c.b16 %v593, %v577
    %v642 = vpack.c.b16 %v594, %v578
    %v643 = vpack.c.b16 %v595, %v579
    %v644 = vpack.c.b16 %v596, %v580
    %v645 = vpack.c.b16 %v613, %v597
    %v646 = vpack.c.b16 %v614, %v598
    %v647 = vpack.c.b16 %v615, %v599
    %v648 = vpack.c.b16 %v616, %v600
    %v649 = vpack.c.b16 %v617, %v601
    %v650 = vpack.c.b16 %v618, %v602
    %v651 = vpack.c.b16 %v619, %v603
    %v652 = vpack.c.b16 %v620, %v604
    %v653 = vpack.c.b16 %v621, %v605
    %v654 = vpack.c.b16 %v622, %v606
    %v655 = vpack.c.b16 %v623, %v607
    %v656 = vpack.c.b16 %v624, %v608
    %v657 = vpack.c.b16 %v625, %v609
    %v658 = vpack.c.b16 %v626, %v610
    %v659 = vpack.c.b16 %v627, %v611
    %v660 = vpack.c.b16 %v628, %v612
    %v694 = vsel %vm99, %v416, 0
    %696 = vmatprep.subr.bf16.mxu0 %v630
    %697 = vmatpush1.bf16.msra.mxu0 %v629
    %698 = vmatprep.subr.bf16.mxu0 %v646
    %699 = vmatpush1.bf16.msra.mxu0 %v645
    %700 = vmatprep.subr.bf16.mxu0 0
    %701 = vmatpush1.bf16.msra.mxu0 0
    %702 = vmatprep.subr.bf16.mxu0 0
    %703 = vmatpush1.bf16.msra.mxu0 0
    %704 = vmatprep.subr.bf16.mxu0 0
    %705 = vmatpush1.bf16.msra.mxu0 0
    %706 = vmatprep.subr.bf16.mxu0 0
    %707 = vmatpush1.bf16.msra.mxu0 0
    %708 = vmatprep.subr.bf16.mxu0 0
    %709 = vmatpush1.bf16.msra.mxu0 0
    %710 = vmatprep.subr.bf16.mxu0 0
    %711 = vmatpush1.bf16.msra.mxu0 0
    %712 = vmatprep.subr.bf16.mxu0 0
    %713 = vmatpush1.bf16.msra.mxu0 0
    %714 = vmatprep.subr.bf16.mxu0 0
    %715 = vmatpush1.bf16.msra.mxu0 0
    %716 = vmatprep.subr.bf16.mxu0 0
    %717 = vmatpush1.bf16.msra.mxu0 0
    %718 = vmatprep.subr.bf16.mxu0 0
    %719 = vmatpush1.bf16.msra.mxu0 0
    %720 = vmatprep.subr.bf16.mxu0 0
    %721 = vmatpush1.bf16.msra.mxu0 0
    %722 = vmatprep.subr.bf16.mxu0 0
    %723 = vmatpush1.bf16.msra.mxu0 0
    %724 = vmatprep.subr.bf16.mxu0 0
    %725 = vmatpush1.bf16.msra.mxu0 0
    %726 = vmatprep.subr.bf16.mxu0 0
    %727 = vmatpush1.bf16.msra.mxu0 0
    %728 = vmatprep.mubr.bf16.mxu0 0
    %729 = vmatmul.mubr.bf16.gmra.mrb[0].mxu0 %v694
    %v730 = vpop.f32.mrb[0].mxu0
    %v731 = vadd.f32 %v456, %v730
    %v732 = vpop.f32.mrb[0].mxu0
    %v733 = vadd.f32 %v460, %v732
    %v734 = vpop.f32.mrb[0].mxu0
    %v735 = vadd.f32 %v456, %v734
    %v736 = vpop.f32.mrb[0].mxu0
    %v737 = vadd.f32 %v460, %v736
    %738 = vdwg.mxu0
    %739 = vmatprep.subr.bf16.mxu0 %v632
    %740 = vmatpush1.bf16.msra.mxu0 %v631
    %741 = vmatprep.subr.bf16.mxu0 %v648
    %742 = vmatpush1.bf16.msra.mxu0 %v647
    %743 = vmatprep.subr.bf16.mxu0 0
    %744 = vmatpush1.bf16.msra.mxu0 0
    %745 = vmatprep.subr.bf16.mxu0 0
    %746 = vmatpush1.bf16.msra.mxu0 0
    %747 = vmatprep.subr.bf16.mxu0 0
    %748 = vmatpush1.bf16.msra.mxu0 0
    %749 = vmatprep.subr.bf16.mxu0 0
    %750 = vmatpush1.bf16.msra.mxu0 0
    %751 = vmatprep.subr.bf16.mxu0 0
    %752 = vmatpush1.bf16.msra.mxu0 0
    %753 = vmatprep.subr.bf16.mxu0 0
    %754 = vmatpush1.bf16.msra.mxu0 0
    %755 = vmatprep.subr.bf16.mxu0 0
    %756 = vmatpush1.bf16.msra.mxu0 0
    %757 = vmatprep.subr.bf16.mxu0 0
    %758 = vmatpush1.bf16.msra.mxu0 0
    %759 = vmatprep.subr.bf16.mxu0 0
    %760 = vmatpush1.bf16.msra.mxu0 0
    %761 = vmatprep.subr.bf16.mxu0 0
    %762 = vmatpush1.bf16.msra.mxu0 0
    %763 = vmatprep.subr.bf16.mxu0 0
    %764 = vmatpush1.bf16.msra.mxu0 0
    %765 = vmatprep.subr.bf16.mxu0 0
    %766 = vmatpush1.bf16.msra.mxu0 0
    %767 = vmatprep.subr.bf16.mxu0 0
    %768 = vmatpush1.bf16.msra.mxu0 0
    %769 = vmatprep.subr.bf16.mxu0 0
    %770 = vmatpush1.bf16.msra.mxu0 0
    %771 = vmatprep.mubr.bf16.mxu0 0
    %772 = vmatmul.mubr.bf16.gmra.mrb[0].mxu0 %v694
    %v773 = vpop.f32.mrb[0].mxu0
    %v774 = vadd.f32 %v464, %v773
    %v775 = vpop.f32.mrb[0].mxu0
    %v776 = vadd.f32 %v468, %v775
    %v777 = vpop.f32.mrb[0].mxu0
    %v778 = vadd.f32 %v464, %v777
    %v779 = vpop.f32.mrb[0].mxu0
    %v780 = vadd.f32 %v468, %v779
    %781 = vdwg.mxu0
    %782 = vmatprep.subr.bf16.mxu0 %v634
    %783 = vmatpush1.bf16.msra.mxu0 %v633
    %784 = vmatprep.subr.bf16.mxu0 %v650
    %785 = vmatpush1.bf16.msra.mxu0 %v649
    %786 = vmatprep.subr.bf16.mxu0 0
    %787 = vmatpush1.bf16.msra.mxu0 0
    %788 = vmatprep.subr.bf16.mxu0 0
    %789 = vmatpush1.bf16.msra.mxu0 0
    %790 = vmatprep.subr.bf16.mxu0 0
    %791 = vmatpush1.bf16.msra.mxu0 0
    %792 = vmatprep.subr.bf16.mxu0 0
    %793 = vmatpush1.bf16.msra.mxu0 0
    %794 = vmatprep.subr.bf16.mxu0 0
    %795 = vmatpush1.bf16.msra.mxu0 0
    %796 = vmatprep.subr.bf16.mxu0 0
    %797 = vmatpush1.bf16.msra.mxu0 0
    %798 = vmatprep.subr.bf16.mxu0 0
    %799 = vmatpush1.bf16.msra.mxu0 0
    %800 = vmatprep.subr.bf16.mxu0 0
    %801 = vmatpush1.bf16.msra.mxu0 0
    %802 = vmatprep.subr.bf16.mxu0 0
    %803 = vmatpush1.bf16.msra.mxu0 0
    %804 = vmatprep.subr.bf16.mxu0 0
    %805 = vmatpush1.bf16.msra.mxu0 0
    %806 = vmatprep.subr.bf16.mxu0 0
    %807 = vmatpush1.bf16.msra.mxu0 0
    %808 = vmatprep.subr.bf16.mxu0 0
    %809 = vmatpush1.bf16.msra.mxu0 0
    %810 = vmatprep.subr.bf16.mxu0 0
    %811 = vmatpush1.bf16.msra.mxu0 0
    %812 = vmatprep.subr.bf16.mxu0 0
    %813 = vmatpush1.bf16.msra.mxu0 0
    %814 = vmatprep.mubr.bf16.mxu0 0
    %815 = vmatmul.mubr.bf16.gmra.mrb[0].mxu0 %v694
    %v816 = vpop.f32.mrb[0].mxu0
    %v817 = vadd.f32 %v472, %v816
    %v818 = vpop.f32.mrb[0].mxu0
    %v819 = vadd.f32 %v476, %v818
    %v820 = vpop.f32.mrb[0].mxu0
    %v821 = vadd.f32 %v472, %v820
    %v822 = vpop.f32.mrb[0].mxu0
    %v823 = vadd.f32 %v476, %v822
    %824 = vdwg.mxu0
    %825 = vmatprep.subr.bf16.mxu0 %v636
    %826 = vmatpush1.bf16.msra.mxu0 %v635
    %827 = vmatprep.subr.bf16.mxu0 %v652
    %828 = vmatpush1.bf16.msra.mxu0 %v651
    %829 = vmatprep.subr.bf16.mxu0 0
    %830 = vmatpush1.bf16.msra.mxu0 0
    %831 = vmatprep.subr.bf16.mxu0 0
    %832 = vmatpush1.bf16.msra.mxu0 0
    %833 = vmatprep.subr.bf16.mxu0 0
    %834 = vmatpush1.bf16.msra.mxu0 0
    %835 = vmatprep.subr.bf16.mxu0 0
    %836 = vmatpush1.bf16.msra.mxu0 0
    %837 = vmatprep.subr.bf16.mxu0 0
    %838 = vmatpush1.bf16.msra.mxu0 0
    %839 = vmatprep.subr.bf16.mxu0 0
    %840 = vmatpush1.bf16.msra.mxu0 0
    %841 = vmatprep.subr.bf16.mxu0 0
    %842 = vmatpush1.bf16.msra.mxu0 0
    %843 = vmatprep.subr.bf16.mxu0 0
    %844 = vmatpush1.bf16.msra.mxu0 0
    %845 = vmatprep.subr.bf16.mxu0 0
    %846 = vmatpush1.bf16.msra.mxu0 0
    %847 = vmatprep.subr.bf16.mxu0 0
    %848 = vmatpush1.bf16.msra.mxu0 0
    %849 = vmatprep.subr.bf16.mxu0 0
    %850 = vmatpush1.bf16.msra.mxu0 0
    %851 = vmatprep.subr.bf16.mxu0 0
    %852 = vmatpush1.bf16.msra.mxu0 0
    %853 = vmatprep.subr.bf16.mxu0 0
    %854 = vmatpush1.bf16.msra.mxu0 0
    %855 = vmatprep.subr.bf16.mxu0 0
    %856 = vmatpush1.bf16.msra.mxu0 0
    %857 = vmatprep.mubr.bf16.mxu0 0
    %858 = vmatmul.mubr.bf16.gmra.mrb[0].mxu0 %v694
    %v859 = vpop.f32.mrb[0].mxu0
    %v860 = vadd.f32 %v480, %v859
    %v861 = vpop.f32.mrb[0].mxu0
    %v862 = vadd.f32 %v484, %v861
    %v863 = vpop.f32.mrb[0].mxu0
    %v864 = vadd.f32 %v480, %v863
    %v865 = vpop.f32.mrb[0].mxu0
    %v866 = vadd.f32 %v484, %v865
    %867 = vdwg.mxu0
    %868 = vmatprep.subr.bf16.mxu0 %v638
    %869 = vmatpush1.bf16.msra.mxu0 %v637
    %870 = vmatprep.subr.bf16.mxu0 %v654
    %871 = vmatpush1.bf16.msra.mxu0 %v653
    %872 = vmatprep.subr.bf16.mxu0 0
    %873 = vmatpush1.bf16.msra.mxu0 0
    %874 = vmatprep.subr.bf16.mxu0 0
    %875 = vmatpush1.bf16.msra.mxu0 0
    %876 = vmatprep.subr.bf16.mxu0 0
    %877 = vmatpush1.bf16.msra.mxu0 0
    %878 = vmatprep.subr.bf16.mxu0 0
    %879 = vmatpush1.bf16.msra.mxu0 0
    %880 = vmatprep.subr.bf16.mxu0 0
    %881 = vmatpush1.bf16.msra.mxu0 0
    %882 = vmatprep.subr.bf16.mxu0 0
    %883 = vmatpush1.bf16.msra.mxu0 0
    %884 = vmatprep.subr.bf16.mxu0 0
    %885 = vmatpush1.bf16.msra.mxu0 0
    %886 = vmatprep.subr.bf16.mxu0 0
    %887 = vmatpush1.bf16.msra.mxu0 0
    %888 = vmatprep.subr.bf16.mxu0 0
    %889 = vmatpush1.bf16.msra.mxu0 0
    %890 = vmatprep.subr.bf16.mxu0 0
    %891 = vmatpush1.bf16.msra.mxu0 0
    %892 = vmatprep.subr.bf16.mxu0 0
    %893 = vmatpush1.bf16.msra.mxu0 0
    %894 = vmatprep.subr.bf16.mxu0 0
    %895 = vmatpush1.bf16.msra.mxu0 0
    %896 = vmatprep.subr.bf16.mxu0 0
    %897 = vmatpush1.bf16.msra.mxu0 0
    %898 = vmatprep.subr.bf16.mxu0 0
    %899 = vmatpush1.bf16.msra.mxu0 0
    %900 = vmatprep.mubr.bf16.mxu0 0
    %901 = vmatmul.mubr.bf16.gmra.mrb[0].mxu0 %v694
    %v902 = vpop.f32.mrb[0].mxu0
    %v903 = vadd.f32 %v488, %v902
    %v904 = vpop.f32.mrb[0].mxu0
    %v905 = vadd.f32 %v492, %v904
    %v906 = vpop.f32.mrb[0].mxu0
    %v907 = vadd.f32 %v488, %v906
    %v908 = vpop.f32.mrb[0].mxu0
    %v909 = vadd.f32 %v492, %v908
    %910 = vdwg.mxu0
    %911 = vmatprep.subr.bf16.mxu0 %v640
    %912 = vmatpush1.bf16.msra.mxu0 %v639
    %913 = vmatprep.subr.bf16.mxu0 %v656
    %914 = vmatpush1.bf16.msra.mxu0 %v655
    %915 = vmatprep.subr.bf16.mxu0 0
    %916 = vmatpush1.bf16.msra.mxu0 0
    %917 = vmatprep.subr.bf16.mxu0 0
    %918 = vmatpush1.bf16.msra.mxu0 0
    %919 = vmatprep.subr.bf16.mxu0 0
    %920 = vmatpush1.bf16.msra.mxu0 0
    %921 = vmatprep.subr.bf16.mxu0 0
    %922 = vmatpush1.bf16.msra.mxu0 0
    %923 = vmatprep.subr.bf16.mxu0 0
    %924 = vmatpush1.bf16.msra.mxu0 0
    %925 = vmatprep.subr.bf16.mxu0 0
    %926 = vmatpush1.bf16.msra.mxu0 0
    %927 = vmatprep.subr.bf16.mxu0 0
    %928 = vmatpush1.bf16.msra.mxu0 0
    %929 = vmatprep.subr.bf16.mxu0 0
    %930 = vmatpush1.bf16.msra.mxu0 0
    %931 = vmatprep.subr.bf16.mxu0 0
    %932 = vmatpush1.bf16.msra.mxu0 0
    %933 = vmatprep.subr.bf16.mxu0 0
    %934 = vmatpush1.bf16.msra.mxu0 0
    %935 = vmatprep.subr.bf16.mxu0 0
    %936 = vmatpush1.bf16.msra.mxu0 0
    %937 = vmatprep.subr.bf16.mxu0 0
    %938 = vmatpush1.bf16.msra.mxu0 0
    %939 = vmatprep.subr.bf16.mxu0 0
    %940 = vmatpush1.bf16.msra.mxu0 0
    %941 = vmatprep.subr.bf16.mxu0 0
    %942 = vmatpush1.bf16.msra.mxu0 0
    %943 = vmatprep.mubr.bf16.mxu0 0
    %944 = vmatmul.mubr.bf16.gmra.mrb[0].mxu0 %v694
    %v945 = vpop.f32.mrb[0].mxu0
    %v946 = vadd.f32 %v496, %v945
    %v947 = vpop.f32.mrb[0].mxu0
    %v948 = vadd.f32 %v500, %v947
    %v949 = vpop.f32.mrb[0].mxu0
    %v950 = vadd.f32 %v496, %v949
    %v951 = vpop.f32.mrb[0].mxu0
    %v952 = vadd.f32 %v500, %v951
    %953 = vdwg.mxu0
    %954 = vmatprep.subr.bf16.mxu0 %v642
    %955 = vmatpush1.bf16.msra.mxu0 %v641
    %956 = vmatprep.subr.bf16.mxu0 %v658
    %957 = vmatpush1.bf16.msra.mxu0 %v657
    %958 = vmatprep.subr.bf16.mxu0 0
    %959 = vmatpush1.bf16.msra.mxu0 0
    %960 = vmatprep.subr.bf16.mxu0 0
    %961 = vmatpush1.bf16.msra.mxu0 0
    %962 = vmatprep.subr.bf16.mxu0 0
    %963 = vmatpush1.bf16.msra.mxu0 0
    %964 = vmatprep.subr.bf16.mxu0 0
    %965 = vmatpush1.bf16.msra.mxu0 0
    %966 = vmatprep.subr.bf16.mxu0 0
    %967 = vmatpush1.bf16.msra.mxu0 0
    %968 = vmatprep.subr.bf16.mxu0 0
    %969 = vmatpush1.bf16.msra.mxu0 0
    %970 = vmatprep.subr.bf16.mxu0 0
    %971 = vmatpush1.bf16.msra.mxu0 0
    %972 = vmatprep.subr.bf16.mxu0 0
    %973 = vmatpush1.bf16.msra.mxu0 0
    %974 = vmatprep.subr.bf16.mxu0 0
    %975 = vmatpush1.bf16.msra.mxu0 0
    %976 = vmatprep.subr.bf16.mxu0 0
    %977 = vmatpush1.bf16.msra.mxu0 0
    %978 = vmatprep.subr.bf16.mxu0 0
    %979 = vmatpush1.bf16.msra.mxu0 0
    %980 = vmatprep.subr.bf16.mxu0 0
    %981 = vmatpush1.bf16.msra.mxu0 0
    %982 = vmatprep.subr.bf16.mxu0 0
    %983 = vmatpush1.bf16.msra.mxu0 0
    %984 = vmatprep.subr.bf16.mxu0 0
    %985 = vmatpush1.bf16.msra.mxu0 0
    %986 = vmatprep.mubr.bf16.mxu0 0
    %987 = vmatmul.mubr.bf16.gmra.mrb[0].mxu0 %v694
    %v988 = vpop.f32.mrb[0].mxu0
    %v989 = vadd.f32 %v504, %v988
    %v990 = vpop.f32.mrb[0].mxu0
    %v991 = vadd.f32 %v508, %v990
    %v992 = vpop.f32.mrb[0].mxu0
    %v993 = vadd.f32 %v504, %v992
    %v994 = vpop.f32.mrb[0].mxu0
    %v995 = vadd.f32 %v508, %v994
    %996 = vdwg.mxu0
    %997 = vmatprep.subr.bf16.mxu0 %v644
    %998 = vmatpush1.bf16.msra.mxu0 %v643
    %999 = vmatprep.subr.bf16.mxu0 %v660
    %1000 = vmatpush1.bf16.msra.mxu0 %v659
    %1001 = vmatprep.subr.bf16.mxu0 0
    %1002 = vmatpush1.bf16.msra.mxu0 0
    %1003 = vmatprep.subr.bf16.mxu0 0
    %1004 = vmatpush1.bf16.msra.mxu0 0
    %1005 = vmatprep.subr.bf16.mxu0 0
    %1006 = vmatpush1.bf16.msra.mxu0 0
    %1007 = vmatprep.subr.bf16.mxu0 0
    %1008 = vmatpush1.bf16.msra.mxu0 0
    %1009 = vmatprep.subr.bf16.mxu0 0
    %1010 = vmatpush1.bf16.msra.mxu0 0
    %1011 = vmatprep.subr.bf16.mxu0 0
    %1012 = vmatpush1.bf16.msra.mxu0 0
    %1013 = vmatprep.subr.bf16.mxu0 0
    %1014 = vmatpush1.bf16.msra.mxu0 0
    %1015 = vmatprep.subr.bf16.mxu0 0
    %1016 = vmatpush1.bf16.msra.mxu0 0
    %1017 = vmatprep.subr.bf16.mxu0 0
    %1018 = vmatpush1.bf16.msra.mxu0 0
    %1019 = vmatprep.subr.bf16.mxu0 0
    %1020 = vmatpush1.bf16.msra.mxu0 0
    %1021 = vmatprep.subr.bf16.mxu0 0
    %1022 = vmatpush1.bf16.msra.mxu0 0
    %1023 = vmatprep.subr.bf16.mxu0 0
    %1024 = vmatpush1.bf16.msra.mxu0 0
    %1025 = vmatprep.subr.bf16.mxu0 0
    %1026 = vmatpush1.bf16.msra.mxu0 0
    %1027 = vmatprep.subr.bf16.mxu0 0
    %1028 = vmatpush1.bf16.msra.mxu0 0
    %1029 = vmatprep.mubr.bf16.mxu0 0
    %1030 = vmatmul.mubr.bf16.gmra.mrb[0].mxu0 %v694
    %v1031 = vpop.f32.mrb[0].mxu0
    %v1032 = vadd.f32 %v512, %v1031
    %v1033 = vpop.f32.mrb[0].mxu0
    %v1034 = vadd.f32 %v516, %v1033
    %v1035 = vpop.f32.mrb[0].mxu0
    %v1036 = vadd.f32 %v512, %v1035
    %v1037 = vpop.f32.mrb[0].mxu0
    %v1038 = vadd.f32 %v516, %v1037
    %1039 = vdwg.mxu0
    %v1040 = vmax.f32 %v731, 0.0
    %v1041 = vmax.f32 %v733, 0.0
    %v1042 = vmax.f32 %v774, 0.0
    %v1043 = vmax.f32 %v776, 0.0
    %v1044 = vmax.f32 %v817, 0.0
    %v1045 = vmax.f32 %v819, 0.0
    %v1046 = vmax.f32 %v860, 0.0
    %v1047 = vmax.f32 %v862, 0.0
    %v1048 = vmax.f32 %v903, 0.0
    %v1049 = vmax.f32 %v905, 0.0
    %v1050 = vmax.f32 %v946, 0.0
    %v1051 = vmax.f32 %v948, 0.0
    %v1052 = vmax.f32 %v989, 0.0
    %v1053 = vmax.f32 %v991, 0.0
    %v1054 = vmax.f32 %v1032, 0.0
    %v1055 = vmax.f32 %v1034, 0.0
    %v1056 = vmax.f32 %v735, 0.0
    %v1057 = vmax.f32 %v737, 0.0
    %v1058 = vmax.f32 %v778, 0.0
    %v1059 = vmax.f32 %v780, 0.0
    %v1060 = vmax.f32 %v821, 0.0
    %v1061 = vmax.f32 %v823, 0.0
    %v1062 = vmax.f32 %v864, 0.0
    %v1063 = vmax.f32 %v866, 0.0
    %v1064 = vmax.f32 %v907, 0.0
    %v1065 = vmax.f32 %v909, 0.0
    %v1066 = vmax.f32 %v950, 0.0
    %v1067 = vmax.f32 %v952, 0.0
    %v1068 = vmax.f32 %v993, 0.0
    %v1069 = vmax.f32 %v995, 0.0
    %v1070 = vmax.f32 %v1036, 0.0
    %v1071 = vmax.f32 %v1038, 0.0
    %v1072 = vpack.c.bf16 %v1056, %v1040
    %v1073 = vpack.c.bf16 %v1057, %v1041
    %v1074 = vpack.c.bf16 %v1058, %v1042
    %v1075 = vpack.c.bf16 %v1059, %v1043
    %v1076 = vpack.c.bf16 %v1060, %v1044
    %v1077 = vpack.c.bf16 %v1061, %v1045
    %v1078 = vpack.c.bf16 %v1062, %v1046
    %v1079 = vpack.c.bf16 %v1063, %v1047
    %v1080 = vpack.c.bf16 %v1064, %v1048
    %v1081 = vpack.c.bf16 %v1065, %v1049
    %v1082 = vpack.c.bf16 %v1066, %v1050
    %v1083 = vpack.c.bf16 %v1067, %v1051
    %v1084 = vpack.c.bf16 %v1068, %v1052
    %v1085 = vpack.c.bf16 %v1069, %v1053
    %v1086 = vpack.c.bf16 %v1070, %v1054
    %v1087 = vpack.c.bf16 %v1071, %v1055
    %v1088 = vld [vmem:[%s10] sm:$0xf]
    %v1089 = vld [vmem:[%s10 + $0x4] sm:$0xf]
    %v1090 = vld [vmem:[%s10 + $0x8] sm:$0xf]
    %v1091 = vld [vmem:[%s10 + $0xc] sm:$0xf]
    %v1092 = vld [vmem:[%s10 + $0x10] sm:$0xf]
    %v1093 = vld [vmem:[%s10 + $0x14] sm:$0xf]
    %v1094 = vld [vmem:[%s10 + $0x18] sm:$0xf]
    %v1095 = vld [vmem:[%s10 + $0x1c] sm:$0xf]
    %v1096 = vld [vmem:[%s10 + $0x20] sm:$0xf]
    %v1097 = vld [vmem:[%s10 + $0x24] sm:$0xf]
    %v1098 = vld [vmem:[%s10 + $0x28] sm:$0xf]
    %v1099 = vld [vmem:[%s10 + $0x2c] sm:$0xf]
    %v1100 = vld [vmem:[%s10 + $0x30] sm:$0xf]
    %v1101 = vld [vmem:[%s10 + $0x34] sm:$0xf]
    %v1102 = vld [vmem:[%s10 + $0x38] sm:$0xf]
    %v1103 = vld [vmem:[%s10 + $0x3c] sm:$0xf]
    %v1104 = vld [vmem:[%s10 + $0x40] sm:$0xf]
    %v1105 = vld [vmem:[%s10 + $0x44] sm:$0xf]
    %v1106 = vld [vmem:[%s10 + $0x48] sm:$0xf]
    %v1107 = vld [vmem:[%s10 + $0x4c] sm:$0xf]
    %v1108 = vld [vmem:[%s10 + $0x50] sm:$0xf]
    %v1109 = vld [vmem:[%s10 + $0x54] sm:$0xf]
    %v1110 = vld [vmem:[%s10 + $0x58] sm:$0xf]
    %v1111 = vld [vmem:[%s10 + $0x5c] sm:$0xf]
    %v1112 = vld [vmem:[%s10 + $0x60] sm:$0xf]
    %v1113 = vld [vmem:[%s10 + $0x64] sm:$0xf]
    %v1114 = vld [vmem:[%s10 + $0x68] sm:$0xf]
    %v1115 = vld [vmem:[%s10 + $0x6c] sm:$0xf]
    %v1116 = vld [vmem:[%s10 + $0x70] sm:$0xf]
    %v1117 = vld [vmem:[%s10 + $0x74] sm:$0xf]
    %v1118 = vld [vmem:[%s10 + $0x78] sm:$0xf]
    %v1119 = vld [vmem:[%s10 + $0x7c] sm:$0xf]
    %v1120 = vld [vmem:[%s10 + $0x80] sm:$0xf]
    %v1121 = vld [vmem:[%s10 + $0x84] sm:$0xf]
    %v1122 = vld [vmem:[%s10 + $0x88] sm:$0xf]
    %v1123 = vld [vmem:[%s10 + $0x8c] sm:$0xf]
    %v1124 = vld [vmem:[%s10 + $0x90] sm:$0xf]
    %v1125 = vld [vmem:[%s10 + $0x94] sm:$0xf]
    %v1126 = vld [vmem:[%s10 + $0x98] sm:$0xf]
    %v1127 = vld [vmem:[%s10 + $0x9c] sm:$0xf]
    %v1128 = vld [vmem:[%s10 + $0xa0] sm:$0xf]
    %v1129 = vld [vmem:[%s10 + $0xa4] sm:$0xf]
    %v1130 = vld [vmem:[%s10 + $0xa8] sm:$0xf]
    %v1131 = vld [vmem:[%s10 + $0xac] sm:$0xf]
    %v1132 = vld [vmem:[%s10 + $0xb0] sm:$0xf]
    %v1133 = vld [vmem:[%s10 + $0xb4] sm:$0xf]
    %v1134 = vld [vmem:[%s10 + $0xb8] sm:$0xf]
    %v1135 = vld [vmem:[%s10 + $0xbc] sm:$0xf]
    %v1136 = vld [vmem:[%s10 + $0xc0] sm:$0xf]
    %v1137 = vld [vmem:[%s10 + $0xc4] sm:$0xf]
    %v1138 = vld [vmem:[%s10 + $0xc8] sm:$0xf]
    %v1139 = vld [vmem:[%s10 + $0xcc] sm:$0xf]
    %v1140 = vld [vmem:[%s10 + $0xd0] sm:$0xf]
    %v1141 = vld [vmem:[%s10 + $0xd4] sm:$0xf]
    %v1142 = vld [vmem:[%s10 + $0xd8] sm:$0xf]
    %v1143 = vld [vmem:[%s10 + $0xdc] sm:$0xf]
    %v1144 = vld [vmem:[%s10 + $0xe0] sm:$0xf]
    %v1145 = vld [vmem:[%s10 + $0xe4] sm:$0xf]
    %v1146 = vld [vmem:[%s10 + $0xe8] sm:$0xf]
    %v1147 = vld [vmem:[%s10 + $0xec] sm:$0xf]
    %v1148 = vld [vmem:[%s10 + $0xf0] sm:$0xf]
    %v1149 = vld [vmem:[%s10 + $0xf4] sm:$0xf]
    %v1150 = vld [vmem:[%s10 + $0xf8] sm:$0xf]
    %v1151 = vld [vmem:[%s10 + $0xfc] sm:$0xf]
    %v1152 = vld [vmem:[%s10 + $0x100] sm:$0xf]
    %v1153 = vld [vmem:[%s10 + $0x104] sm:$0xf]
    %v1154 = vld [vmem:[%s10 + $0x108] sm:$0xf]
    %v1155 = vld [vmem:[%s10 + $0x10c] sm:$0xf]
    %v1156 = vld [vmem:[%s10 + $0x110] sm:$0xf]
    %v1157 = vld [vmem:[%s10 + $0x114] sm:$0xf]
    %v1158 = vld [vmem:[%s10 + $0x118] sm:$0xf]
    %v1159 = vld [vmem:[%s10 + $0x11c] sm:$0xf]
    %v1160 = vld [vmem:[%s10 + $0x120] sm:$0xf]
    %v1161 = vld [vmem:[%s10 + $0x124] sm:$0xf]
    %v1162 = vld [vmem:[%s10 + $0x128] sm:$0xf]
    %v1163 = vld [vmem:[%s10 + $0x12c] sm:$0xf]
    %v1164 = vld [vmem:[%s10 + $0x130] sm:$0xf]
    %v1165 = vld [vmem:[%s10 + $0x134] sm:$0xf]
    %v1166 = vld [vmem:[%s10 + $0x138] sm:$0xf]
    %v1167 = vld [vmem:[%s10 + $0x13c] sm:$0xf]
    %v1168 = vld [vmem:[%s10 + $0x140] sm:$0xf]
    %v1169 = vld [vmem:[%s10 + $0x144] sm:$0xf]
    %v1170 = vld [vmem:[%s10 + $0x148] sm:$0xf]
    %v1171 = vld [vmem:[%s10 + $0x14c] sm:$0xf]
    %v1172 = vld [vmem:[%s10 + $0x150] sm:$0xf]
    %v1173 = vld [vmem:[%s10 + $0x154] sm:$0xf]
    %v1174 = vld [vmem:[%s10 + $0x158] sm:$0xf]
    %v1175 = vld [vmem:[%s10 + $0x15c] sm:$0xf]
    %v1176 = vld [vmem:[%s10 + $0x160] sm:$0xf]
    %v1177 = vld [vmem:[%s10 + $0x164] sm:$0xf]
    %v1178 = vld [vmem:[%s10 + $0x168] sm:$0xf]
    %v1179 = vld [vmem:[%s10 + $0x16c] sm:$0xf]
    %v1180 = vld [vmem:[%s10 + $0x170] sm:$0xf]
    %v1181 = vld [vmem:[%s10 + $0x174] sm:$0xf]
    %v1182 = vld [vmem:[%s10 + $0x178] sm:$0xf]
    %v1183 = vld [vmem:[%s10 + $0x17c] sm:$0xf]
    %v1184 = vld [vmem:[%s10 + $0x180] sm:$0xf]
    %v1185 = vld [vmem:[%s10 + $0x184] sm:$0xf]
    %v1186 = vld [vmem:[%s10 + $0x188] sm:$0xf]
    %v1187 = vld [vmem:[%s10 + $0x18c] sm:$0xf]
    %v1188 = vld [vmem:[%s10 + $0x190] sm:$0xf]
    %v1189 = vld [vmem:[%s10 + $0x194] sm:$0xf]
    %v1190 = vld [vmem:[%s10 + $0x198] sm:$0xf]
    %v1191 = vld [vmem:[%s10 + $0x19c] sm:$0xf]
    %v1192 = vld [vmem:[%s10 + $0x1a0] sm:$0xf]
    %v1193 = vld [vmem:[%s10 + $0x1a4] sm:$0xf]
    %v1194 = vld [vmem:[%s10 + $0x1a8] sm:$0xf]
    %v1195 = vld [vmem:[%s10 + $0x1ac] sm:$0xf]
    %v1196 = vld [vmem:[%s10 + $0x1b0] sm:$0xf]
    %v1197 = vld [vmem:[%s10 + $0x1b4] sm:$0xf]
    %v1198 = vld [vmem:[%s10 + $0x1b8] sm:$0xf]
    %v1199 = vld [vmem:[%s10 + $0x1bc] sm:$0xf]
    %v1200 = vld [vmem:[%s10 + $0x1c0] sm:$0xf]
    %v1201 = vld [vmem:[%s10 + $0x1c4] sm:$0xf]
    %v1202 = vld [vmem:[%s10 + $0x1c8] sm:$0xf]
    %v1203 = vld [vmem:[%s10 + $0x1cc] sm:$0xf]
    %v1204 = vld [vmem:[%s10 + $0x1d0] sm:$0xf]
    %v1205 = vld [vmem:[%s10 + $0x1d4] sm:$0xf]
    %v1206 = vld [vmem:[%s10 + $0x1d8] sm:$0xf]
    %v1207 = vld [vmem:[%s10 + $0x1dc] sm:$0xf]
    %v1208 = vld [vmem:[%s10 + $0x1e0] sm:$0xf]
    %v1209 = vld [vmem:[%s10 + $0x1e4] sm:$0xf]
    %v1210 = vld [vmem:[%s10 + $0x1e8] sm:$0xf]
    %v1211 = vld [vmem:[%s10 + $0x1ec] sm:$0xf]
    %v1212 = vld [vmem:[%s10 + $0x1f0] sm:$0xf]
    %v1213 = vld [vmem:[%s10 + $0x1f4] sm:$0xf]
    %v1214 = vld [vmem:[%s10 + $0x1f8] sm:$0xf]
    %v1215 = vld [vmem:[%s10 + $0x1fc] sm:$0xf]
    %v1216 = vld [vmem:[%s10 + $0x200] sm:$0xf]
    %v1217 = vld [vmem:[%s10 + $0x204] sm:$0xf]
    %v1218 = vld [vmem:[%s10 + $0x208] sm:$0xf]
    %v1219 = vld [vmem:[%s10 + $0x20c] sm:$0xf]
    %v1220 = vld [vmem:[%s10 + $0x210] sm:$0xf]
    %v1221 = vld [vmem:[%s10 + $0x214] sm:$0xf]
    %v1222 = vld [vmem:[%s10 + $0x218] sm:$0xf]
    %v1223 = vld [vmem:[%s10 + $0x21c] sm:$0xf]
    %v1224 = vld [vmem:[%s10 + $0x220] sm:$0xf]
    %v1225 = vld [vmem:[%s10 + $0x224] sm:$0xf]
    %v1226 = vld [vmem:[%s10 + $0x228] sm:$0xf]
    %v1227 = vld [vmem:[%s10 + $0x22c] sm:$0xf]
    %v1228 = vld [vmem:[%s10 + $0x230] sm:$0xf]
    %v1229 = vld [vmem:[%s10 + $0x234] sm:$0xf]
    %v1230 = vld [vmem:[%s10 + $0x238] sm:$0xf]
    %v1231 = vld [vmem:[%s10 + $0x23c] sm:$0xf]
    %v1232 = vld [vmem:[%s10 + $0x240] sm:$0xf]
    %v1233 = vld [vmem:[%s10 + $0x244] sm:$0xf]
    %v1234 = vld [vmem:[%s10 + $0x248] sm:$0xf]
    %v1235 = vld [vmem:[%s10 + $0x24c] sm:$0xf]
    %v1236 = vld [vmem:[%s10 + $0x250] sm:$0xf]
    %v1237 = vld [vmem:[%s10 + $0x254] sm:$0xf]
    %v1238 = vld [vmem:[%s10 + $0x258] sm:$0xf]
    %v1239 = vld [vmem:[%s10 + $0x25c] sm:$0xf]
    %v1240 = vld [vmem:[%s10 + $0x260] sm:$0xf]
    %v1241 = vld [vmem:[%s10 + $0x264] sm:$0xf]
    %v1242 = vld [vmem:[%s10 + $0x268] sm:$0xf]
    %v1243 = vld [vmem:[%s10 + $0x26c] sm:$0xf]
    %v1244 = vld [vmem:[%s10 + $0x270] sm:$0xf]
    %v1245 = vld [vmem:[%s10 + $0x274] sm:$0xf]
    %v1246 = vld [vmem:[%s10 + $0x278] sm:$0xf]
    %v1247 = vld [vmem:[%s10 + $0x27c] sm:$0xf]
    %v1248 = vld [vmem:[%s10 + $0x280] sm:$0xf]
    %v1249 = vld [vmem:[%s10 + $0x284] sm:$0xf]
    %v1250 = vld [vmem:[%s10 + $0x288] sm:$0xf]
    %v1251 = vld [vmem:[%s10 + $0x28c] sm:$0xf]
    %v1252 = vld [vmem:[%s10 + $0x290] sm:$0xf]
    %v1253 = vld [vmem:[%s10 + $0x294] sm:$0xf]
    %v1254 = vld [vmem:[%s10 + $0x298] sm:$0xf]
    %v1255 = vld [vmem:[%s10 + $0x29c] sm:$0xf]
    %v1256 = vld [vmem:[%s10 + $0x2a0] sm:$0xf]
    %v1257 = vld [vmem:[%s10 + $0x2a4] sm:$0xf]
    %v1258 = vld [vmem:[%s10 + $0x2a8] sm:$0xf]
    %v1259 = vld [vmem:[%s10 + $0x2ac] sm:$0xf]
    %v1260 = vld [vmem:[%s10 + $0x2b0] sm:$0xf]
    %v1261 = vld [vmem:[%s10 + $0x2b4] sm:$0xf]
    %v1262 = vld [vmem:[%s10 + $0x2b8] sm:$0xf]
    %v1263 = vld [vmem:[%s10 + $0x2bc] sm:$0xf]
    %v1264 = vld [vmem:[%s10 + $0x2c0] sm:$0xf]
    %v1265 = vld [vmem:[%s10 + $0x2c4] sm:$0xf]
    %v1266 = vld [vmem:[%s10 + $0x2c8] sm:$0xf]
    %v1267 = vld [vmem:[%s10 + $0x2cc] sm:$0xf]
    %v1268 = vld [vmem:[%s10 + $0x2d0] sm:$0xf]
    %v1269 = vld [vmem:[%s10 + $0x2d4] sm:$0xf]
    %v1270 = vld [vmem:[%s10 + $0x2d8] sm:$0xf]
    %v1271 = vld [vmem:[%s10 + $0x2dc] sm:$0xf]
    %v1272 = vld [vmem:[%s10 + $0x2e0] sm:$0xf]
    %v1273 = vld [vmem:[%s10 + $0x2e4] sm:$0xf]
    %v1274 = vld [vmem:[%s10 + $0x2e8] sm:$0xf]
    %v1275 = vld [vmem:[%s10 + $0x2ec] sm:$0xf]
    %v1276 = vld [vmem:[%s10 + $0x2f0] sm:$0xf]
    %v1277 = vld [vmem:[%s10 + $0x2f4] sm:$0xf]
    %v1278 = vld [vmem:[%s10 + $0x2f8] sm:$0xf]
    %v1279 = vld [vmem:[%s10 + $0x2fc] sm:$0xf]
    %v1280 = vld [vmem:[%s10 + $0x300] sm:$0xf]
    %v1281 = vld [vmem:[%s10 + $0x304] sm:$0xf]
    %v1282 = vld [vmem:[%s10 + $0x308] sm:$0xf]
    %v1283 = vld [vmem:[%s10 + $0x30c] sm:$0xf]
    %v1284 = vld [vmem:[%s10 + $0x310] sm:$0xf]
    %v1285 = vld [vmem:[%s10 + $0x314] sm:$0xf]
    %v1286 = vld [vmem:[%s10 + $0x318] sm:$0xf]
    %v1287 = vld [vmem:[%s10 + $0x31c] sm:$0xf]
    %v1288 = vld [vmem:[%s10 + $0x320] sm:$0xf]
    %v1289 = vld [vmem:[%s10 + $0x324] sm:$0xf]
    %v1290 = vld [vmem:[%s10 + $0x328] sm:$0xf]
    %v1291 = vld [vmem:[%s10 + $0x32c] sm:$0xf]
    %v1292 = vld [vmem:[%s10 + $0x330] sm:$0xf]
    %v1293 = vld [vmem:[%s10 + $0x334] sm:$0xf]
    %v1294 = vld [vmem:[%s10 + $0x338] sm:$0xf]
    %v1295 = vld [vmem:[%s10 + $0x33c] sm:$0xf]
    %v1296 = vld [vmem:[%s10 + $0x340] sm:$0xf]
    %v1297 = vld [vmem:[%s10 + $0x344] sm:$0xf]
    %v1298 = vld [vmem:[%s10 + $0x348] sm:$0xf]
    %v1299 = vld [vmem:[%s10 + $0x34c] sm:$0xf]
    %v1300 = vld [vmem:[%s10 + $0x350] sm:$0xf]
    %v1301 = vld [vmem:[%s10 + $0x354] sm:$0xf]
    %v1302 = vld [vmem:[%s10 + $0x358] sm:$0xf]
    %v1303 = vld [vmem:[%s10 + $0x35c] sm:$0xf]
    %v1304 = vld [vmem:[%s10 + $0x360] sm:$0xf]
    %v1305 = vld [vmem:[%s10 + $0x364] sm:$0xf]
    %v1306 = vld [vmem:[%s10 + $0x368] sm:$0xf]
    %v1307 = vld [vmem:[%s10 + $0x36c] sm:$0xf]
    %v1308 = vld [vmem:[%s10 + $0x370] sm:$0xf]
    %v1309 = vld [vmem:[%s10 + $0x374] sm:$0xf]
    %v1310 = vld [vmem:[%s10 + $0x378] sm:$0xf]
    %v1311 = vld [vmem:[%s10 + $0x37c] sm:$0xf]
    %v1312 = vld [vmem:[%s10 + $0x380] sm:$0xf]
    %v1313 = vld [vmem:[%s10 + $0x384] sm:$0xf]
    %v1314 = vld [vmem:[%s10 + $0x388] sm:$0xf]
    %v1315 = vld [vmem:[%s10 + $0x38c] sm:$0xf]
    %v1316 = vld [vmem:[%s10 + $0x390] sm:$0xf]
    %v1317 = vld [vmem:[%s10 + $0x394] sm:$0xf]
    %v1318 = vld [vmem:[%s10 + $0x398] sm:$0xf]
    %v1319 = vld [vmem:[%s10 + $0x39c] sm:$0xf]
    %v1320 = vld [vmem:[%s10 + $0x3a0] sm:$0xf]
    %v1321 = vld [vmem:[%s10 + $0x3a4] sm:$0xf]
    %v1322 = vld [vmem:[%s10 + $0x3a8] sm:$0xf]
    %v1323 = vld [vmem:[%s10 + $0x3ac] sm:$0xf]
    %v1324 = vld [vmem:[%s10 + $0x3b0] sm:$0xf]
    %v1325 = vld [vmem:[%s10 + $0x3b4] sm:$0xf]
    %v1326 = vld [vmem:[%s10 + $0x3b8] sm:$0xf]
    %v1327 = vld [vmem:[%s10 + $0x3bc] sm:$0xf]
    %v1328 = vld [vmem:[%s10 + $0x3c0] sm:$0xf]
    %v1329 = vld [vmem:[%s10 + $0x3c4] sm:$0xf]
    %v1330 = vld [vmem:[%s10 + $0x3c8] sm:$0xf]
    %v1331 = vld [vmem:[%s10 + $0x3cc] sm:$0xf]
    %v1332 = vld [vmem:[%s10 + $0x3d0] sm:$0xf]
    %v1333 = vld [vmem:[%s10 + $0x3d4] sm:$0xf]
    %v1334 = vld [vmem:[%s10 + $0x3d8] sm:$0xf]
    %v1335 = vld [vmem:[%s10 + $0x3dc] sm:$0xf]
    %v1336 = vld [vmem:[%s10 + $0x3e0] sm:$0xf]
    %v1337 = vld [vmem:[%s10 + $0x3e4] sm:$0xf]
    %v1338 = vld [vmem:[%s10 + $0x3e8] sm:$0xf]
    %v1339 = vld [vmem:[%s10 + $0x3ec] sm:$0xf]
    %v1340 = vld [vmem:[%s10 + $0x3f0] sm:$0xf]
    %v1341 = vld [vmem:[%s10 + $0x3f4] sm:$0xf]
    %v1342 = vld [vmem:[%s10 + $0x3f8] sm:$0xf]
    %v1343 = vld [vmem:[%s10 + $0x3fc] sm:$0xf]
    %v1344 = vld [vmem:[%s11] sm:$0x1]
    %v1346 = vlaneseq
    %v1347 = vshrl.u32 %v1346, 7
    %v1348 = vsub.s32 0, %v1347
    %v1349 = vrot.slane %v1344, %v1348
    %v1607 = vunpack.c.l.b16 %v1088
    %v1608 = vunpack.c.l.b16 %v1089
    %v1609 = vunpack.c.l.b16 %v1090
    %v1610 = vunpack.c.l.b16 %v1091
    %v1611 = vunpack.c.l.b16 %v1092
    %v1612 = vunpack.c.l.b16 %v1093
    %v1613 = vunpack.c.l.b16 %v1094
    %v1614 = vunpack.c.l.b16 %v1095
    %v1615 = vunpack.c.l.b16 %v1096
    %v1616 = vunpack.c.l.b16 %v1097
    %v1617 = vunpack.c.l.b16 %v1098
    %v1618 = vunpack.c.l.b16 %v1099
    %v1619 = vunpack.c.l.b16 %v1100
    %v1620 = vunpack.c.l.b16 %v1101
    %v1621 = vunpack.c.l.b16 %v1102
    %v1622 = vunpack.c.l.b16 %v1103
    %v1623 = vunpack.c.l.b16 %v1104
    %v1624 = vunpack.c.l.b16 %v1105
    %v1625 = vunpack.c.l.b16 %v1106
    %v1626 = vunpack.c.l.b16 %v1107
    %v1627 = vunpack.c.l.b16 %v1108
    %v1628 = vunpack.c.l.b16 %v1109
    %v1629 = vunpack.c.l.b16 %v1110
    %v1630 = vunpack.c.l.b16 %v1111
    %v1631 = vunpack.c.l.b16 %v1112
    %v1632 = vunpack.c.l.b16 %v1113
    %v1633 = vunpack.c.l.b16 %v1114
    %v1634 = vunpack.c.l.b16 %v1115
    %v1635 = vunpack.c.l.b16 %v1116
    %v1636 = vunpack.c.l.b16 %v1117
    %v1637 = vunpack.c.l.b16 %v1118
    %v1638 = vunpack.c.l.b16 %v1119
    %v1639 = vunpack.c.l.b16 %v1120
    %v1640 = vunpack.c.l.b16 %v1121
    %v1641 = vunpack.c.l.b16 %v1122
    %v1642 = vunpack.c.l.b16 %v1123
    %v1643 = vunpack.c.l.b16 %v1124
    %v1644 = vunpack.c.l.b16 %v1125
    %v1645 = vunpack.c.l.b16 %v1126
    %v1646 = vunpack.c.l.b16 %v1127
    %v1647 = vunpack.c.l.b16 %v1128
    %v1648 = vunpack.c.l.b16 %v1129
    %v1649 = vunpack.c.l.b16 %v1130
    %v1650 = vunpack.c.l.b16 %v1131
    %v1651 = vunpack.c.l.b16 %v1132
    %v1652 = vunpack.c.l.b16 %v1133
    %v1653 = vunpack.c.l.b16 %v1134
    %v1654 = vunpack.c.l.b16 %v1135
    %v1655 = vunpack.c.l.b16 %v1136
    %v1656 = vunpack.c.l.b16 %v1137
    %v1657 = vunpack.c.l.b16 %v1138
    %v1658 = vunpack.c.l.b16 %v1139
    %v1659 = vunpack.c.l.b16 %v1140
    %v1660 = vunpack.c.l.b16 %v1141
    %v1661 = vunpack.c.l.b16 %v1142
    %v1662 = vunpack.c.l.b16 %v1143
    %v1663 = vunpack.c.l.b16 %v1144
    %v1664 = vunpack.c.l.b16 %v1145
    %v1665 = vunpack.c.l.b16 %v1146
    %v1666 = vunpack.c.l.b16 %v1147
    %v1667 = vunpack.c.l.b16 %v1148
    %v1668 = vunpack.c.l.b16 %v1149
    %v1669 = vunpack.c.l.b16 %v1150
    %v1670 = vunpack.c.l.b16 %v1151
    %v1671 = vunpack.c.l.b16 %v1152
    %v1672 = vunpack.c.l.b16 %v1153
    %v1673 = vunpack.c.l.b16 %v1154
    %v1674 = vunpack.c.l.b16 %v1155
    %v1675 = vunpack.c.l.b16 %v1156
    %v1676 = vunpack.c.l.b16 %v1157
    %v1677 = vunpack.c.l.b16 %v1158
    %v1678 = vunpack.c.l.b16 %v1159
    %v1679 = vunpack.c.l.b16 %v1160
    %v1680 = vunpack.c.l.b16 %v1161
    %v1681 = vunpack.c.l.b16 %v1162
    %v1682 = vunpack.c.l.b16 %v1163
    %v1683 = vunpack.c.l.b16 %v1164
    %v1684 = vunpack.c.l.b16 %v1165
    %v1685 = vunpack.c.l.b16 %v1166
    %v1686 = vunpack.c.l.b16 %v1167
    %v1687 = vunpack.c.l.b16 %v1168
    %v1688 = vunpack.c.l.b16 %v1169
    %v1689 = vunpack.c.l.b16 %v1170
    %v1690 = vunpack.c.l.b16 %v1171
    %v1691 = vunpack.c.l.b16 %v1172
    %v1692 = vunpack.c.l.b16 %v1173
    %v1693 = vunpack.c.l.b16 %v1174
    %v1694 = vunpack.c.l.b16 %v1175
    %v1695 = vunpack.c.l.b16 %v1176
    %v1696 = vunpack.c.l.b16 %v1177
    %v1697 = vunpack.c.l.b16 %v1178
    %v1698 = vunpack.c.l.b16 %v1179
    %v1699 = vunpack.c.l.b16 %v1180
    %v1700 = vunpack.c.l.b16 %v1181
    %v1701 = vunpack.c.l.b16 %v1182
    %v1702 = vunpack.c.l.b16 %v1183
    %v1703 = vunpack.c.l.b16 %v1184
    %v1704 = vunpack.c.l.b16 %v1185
    %v1705 = vunpack.c.l.b16 %v1186
    %v1706 = vunpack.c.l.b16 %v1187
    %v1707 = vunpack.c.l.b16 %v1188
    %v1708 = vunpack.c.l.b16 %v1189
    %v1709 = vunpack.c.l.b16 %v1190
    %v1710 = vunpack.c.l.b16 %v1191
    %v1711 = vunpack.c.l.b16 %v1192
    %v1712 = vunpack.c.l.b16 %v1193
    %v1713 = vunpack.c.l.b16 %v1194
    %v1714 = vunpack.c.l.b16 %v1195
    %v1715 = vunpack.c.l.b16 %v1196
    %v1716 = vunpack.c.l.b16 %v1197
    %v1717 = vunpack.c.l.b16 %v1198
    %v1718 = vunpack.c.l.b16 %v1199
    %v1719 = vunpack.c.l.b16 %v1200
    %v1720 = vunpack.c.l.b16 %v1201
    %v1721 = vunpack.c.l.b16 %v1202
    %v1722 = vunpack.c.l.b16 %v1203
    %v1723 = vunpack.c.l.b16 %v1204
    %v1724 = vunpack.c.l.b16 %v1205
    %v1725 = vunpack.c.l.b16 %v1206
    %v1726 = vunpack.c.l.b16 %v1207
    %v1727 = vunpack.c.l.b16 %v1208
    %v1728 = vunpack.c.l.b16 %v1209
    %v1729 = vunpack.c.l.b16 %v1210
    %v1730 = vunpack.c.l.b16 %v1211
    %v1731 = vunpack.c.l.b16 %v1212
    %v1732 = vunpack.c.l.b16 %v1213
    %v1733 = vunpack.c.l.b16 %v1214
    %v1734 = vunpack.c.l.b16 %v1215
    %v1735 = vunpack.c.l.b16 %v1216
    %v1736 = vunpack.c.l.b16 %v1217
    %v1737 = vunpack.c.l.b16 %v1218
    %v1738 = vunpack.c.l.b16 %v1219
    %v1739 = vunpack.c.l.b16 %v1220
    %v1740 = vunpack.c.l.b16 %v1221
    %v1741 = vunpack.c.l.b16 %v1222
    %v1742 = vunpack.c.l.b16 %v1223
    %v1743 = vunpack.c.l.b16 %v1224
    %v1744 = vunpack.c.l.b16 %v1225
    %v1745 = vunpack.c.l.b16 %v1226
    %v1746 = vunpack.c.l.b16 %v1227
    %v1747 = vunpack.c.l.b16 %v1228
    %v1748 = vunpack.c.l.b16 %v1229
    %v1749 = vunpack.c.l.b16 %v1230
    %v1750 = vunpack.c.l.b16 %v1231
    %v1751 = vunpack.c.l.b16 %v1232
    %v1752 = vunpack.c.l.b16 %v1233
    %v1753 = vunpack.c.l.b16 %v1234
    %v1754 = vunpack.c.l.b16 %v1235
    %v1755 = vunpack.c.l.b16 %v1236
    %v1756 = vunpack.c.l.b16 %v1237
    %v1757 = vunpack.c.l.b16 %v1238
    %v1758 = vunpack.c.l.b16 %v1239
    %v1759 = vunpack.c.l.b16 %v1240
    %v1760 = vunpack.c.l.b16 %v1241
    %v1761 = vunpack.c.l.b16 %v1242
    %v1762 = vunpack.c.l.b16 %v1243
    %v1763 = vunpack.c.l.b16 %v1244
    %v1764 = vunpack.c.l.b16 %v1245
    %v1765 = vunpack.c.l.b16 %v1246
    %v1766 = vunpack.c.l.b16 %v1247
    %v1767 = vunpack.c.l.b16 %v1248
    %v1768 = vunpack.c.l.b16 %v1249
    %v1769 = vunpack.c.l.b16 %v1250
    %v1770 = vunpack.c.l.b16 %v1251
    %v1771 = vunpack.c.l.b16 %v1252
    %v1772 = vunpack.c.l.b16 %v1253
    %v1773 = vunpack.c.l.b16 %v1254
    %v1774 = vunpack.c.l.b16 %v1255
    %v1775 = vunpack.c.l.b16 %v1256
    %v1776 = vunpack.c.l.b16 %v1257
    %v1777 = vunpack.c.l.b16 %v1258
    %v1778 = vunpack.c.l.b16 %v1259
    %v1779 = vunpack.c.l.b16 %v1260
    %v1780 = vunpack.c.l.b16 %v1261
    %v1781 = vunpack.c.l.b16 %v1262
    %v1782 = vunpack.c.l.b16 %v1263
    %v1783 = vunpack.c.l.b16 %v1264
    %v1784 = vunpack.c.l.b16 %v1265
    %v1785 = vunpack.c.l.b16 %v1266
    %v1786 = vunpack.c.l.b16 %v1267
    %v1787 = vunpack.c.l.b16 %v1268
    %v1788 = vunpack.c.l.b16 %v1269
    %v1789 = vunpack.c.l.b16 %v1270
    %v1790 = vunpack.c.l.b16 %v1271
    %v1791 = vunpack.c.l.b16 %v1272
    %v1792 = vunpack.c.l.b16 %v1273
    %v1793 = vunpack.c.l.b16 %v1274
    %v1794 = vunpack.c.l.b16 %v1275
    %v1795 = vunpack.c.l.b16 %v1276
    %v1796 = vunpack.c.l.b16 %v1277
    %v1797 = vunpack.c.l.b16 %v1278
    %v1798 = vunpack.c.l.b16 %v1279
    %v1799 = vunpack.c.l.b16 %v1280
    %v1800 = vunpack.c.l.b16 %v1281
    %v1801 = vunpack.c.l.b16 %v1282
    %v1802 = vunpack.c.l.b16 %v1283
    %v1803 = vunpack.c.l.b16 %v1284
    %v1804 = vunpack.c.l.b16 %v1285
    %v1805 = vunpack.c.l.b16 %v1286
    %v1806 = vunpack.c.l.b16 %v1287
    %v1807 = vunpack.c.l.b16 %v1288
    %v1808 = vunpack.c.l.b16 %v1289
    %v1809 = vunpack.c.l.b16 %v1290
    %v1810 = vunpack.c.l.b16 %v1291
    %v1811 = vunpack.c.l.b16 %v1292
    %v1812 = vunpack.c.l.b16 %v1293
    %v1813 = vunpack.c.l.b16 %v1294
    %v1814 = vunpack.c.l.b16 %v1295
    %v1815 = vunpack.c.l.b16 %v1296
    %v1816 = vunpack.c.l.b16 %v1297
    %v1817 = vunpack.c.l.b16 %v1298
    %v1818 = vunpack.c.l.b16 %v1299
    %v1819 = vunpack.c.l.b16 %v1300
    %v1820 = vunpack.c.l.b16 %v1301
    %v1821 = vunpack.c.l.b16 %v1302
    %v1822 = vunpack.c.l.b16 %v1303
    %v1823 = vunpack.c.l.b16 %v1304
    %v1824 = vunpack.c.l.b16 %v1305
    %v1825 = vunpack.c.l.b16 %v1306
    %v1826 = vunpack.c.l.b16 %v1307
    %v1827 = vunpack.c.l.b16 %v1308
    %v1828 = vunpack.c.l.b16 %v1309
    %v1829 = vunpack.c.l.b16 %v1310
    %v1830 = vunpack.c.l.b16 %v1311
    %v1831 = vunpack.c.l.b16 %v1312
    %v1832 = vunpack.c.l.b16 %v1313
    %v1833 = vunpack.c.l.b16 %v1314
    %v1834 = vunpack.c.l.b16 %v1315
    %v1835 = vunpack.c.l.b16 %v1316
    %v1836 = vunpack.c.l.b16 %v1317
    %v1837 = vunpack.c.l.b16 %v1318
    %v1838 = vunpack.c.l.b16 %v1319
    %v1839 = vunpack.c.l.b16 %v1320
    %v1840 = vunpack.c.l.b16 %v1321
    %v1841 = vunpack.c.l.b16 %v1322
    %v1842 = vunpack.c.l.b16 %v1323
    %v1843 = vunpack.c.l.b16 %v1324
    %v1844 = vunpack.c.l.b16 %v1325
    %v1845 = vunpack.c.l.b16 %v1326
    %v1846 = vunpack.c.l.b16 %v1327
    %v1847 = vunpack.c.l.b16 %v1328
    %v1848 = vunpack.c.l.b16 %v1329
    %v1849 = vunpack.c.l.b16 %v1330
    %v1850 = vunpack.c.l.b16 %v1331
    %v1851 = vunpack.c.l.b16 %v1332
    %v1852 = vunpack.c.l.b16 %v1333
    %v1853 = vunpack.c.l.b16 %v1334
    %v1854 = vunpack.c.l.b16 %v1335
    %v1855 = vunpack.c.l.b16 %v1336
    %v1856 = vunpack.c.l.b16 %v1337
    %v1857 = vunpack.c.l.b16 %v1338
    %v1858 = vunpack.c.l.b16 %v1339
    %v1859 = vunpack.c.l.b16 %v1340
    %v1860 = vunpack.c.l.b16 %v1341
    %v1861 = vunpack.c.l.b16 %v1342
    %v1862 = vunpack.c.l.b16 %v1343
    %v1863 = vpack.c.b16 %v1608, %v1607
    %v1864 = vpack.c.b16 %v1610, %v1609
    %v1865 = vpack.c.b16 %v1612, %v1611
    %v1866 = vpack.c.b16 %v1614, %v1613
    %v1867 = vpack.c.b16 %v1616, %v1615
    %v1868 = vpack.c.b16 %v1618, %v1617
    %v1869 = vpack.c.b16 %v1620, %v1619
    %v1870 = vpack.c.b16 %v1622, %v1621
    %v1871 = vpack.c.b16 %v1624, %v1623
    %v1872 = vpack.c.b16 %v1626, %v1625
    %v1873 = vpack.c.b16 %v1628, %v1627
    %v1874 = vpack.c.b16 %v1630, %v1629
    %v1875 = vpack.c.b16 %v1632, %v1631
    %v1876 = vpack.c.b16 %v1634, %v1633
    %v1877 = vpack.c.b16 %v1636, %v1635
    %v1878 = vpack.c.b16 %v1638, %v1637
    %v1879 = vpack.c.b16 %v1640, %v1639
    %v1880 = vpack.c.b16 %v1642, %v1641
    %v1881 = vpack.c.b16 %v1644, %v1643
    %v1882 = vpack.c.b16 %v1646, %v1645
    %v1883 = vpack.c.b16 %v1648, %v1647
    %v1884 = vpack.c.b16 %v1650, %v1649
    %v1885 = vpack.c.b16 %v1652, %v1651
    %v1886 = vpack.c.b16 %v1654, %v1653
    %v1887 = vpack.c.b16 %v1656, %v1655
    %v1888 = vpack.c.b16 %v1658, %v1657
    %v1889 = vpack.c.b16 %v1660, %v1659
    %v1890 = vpack.c.b16 %v1662, %v1661
    %v1891 = vpack.c.b16 %v1664, %v1663
    %v1892 = vpack.c.b16 %v1666, %v1665
    %v1893 = vpack.c.b16 %v1668, %v1667
    %v1894 = vpack.c.b16 %v1670, %v1669
    %v1895 = vpack.c.b16 %v1672, %v1671
    %v1896 = vpack.c.b16 %v1674, %v1673
    %v1897 = vpack.c.b16 %v1676, %v1675
    %v1898 = vpack.c.b16 %v1678, %v1677
    %v1899 = vpack.c.b16 %v1680, %v1679
    %v1900 = vpack.c.b16 %v1682, %v1681
    %v1901 = vpack.c.b16 %v1684, %v1683
    %v1902 = vpack.c.b16 %v1686, %v1685
    %v1903 = vpack.c.b16 %v1688, %v1687
    %v1904 = vpack.c.b16 %v1690, %v1689
    %v1905 = vpack.c.b16 %v1692, %v1691
    %v1906 = vpack.c.b16 %v1694, %v1693
    %v1907 = vpack.c.b16 %v1696, %v1695
    %v1908 = vpack.c.b16 %v1698, %v1697
    %v1909 = vpack.c.b16 %v1700, %v1699
    %v1910 = vpack.c.b16 %v1702, %v1701
    %v1911 = vpack.c.b16 %v1704, %v1703
    %v1912 = vpack.c.b16 %v1706, %v1705
    %v1913 = vpack.c.b16 %v1708, %v1707
    %v1914 = vpack.c.b16 %v1710, %v1709
    %v1915 = vpack.c.b16 %v1712, %v1711
    %v1916 = vpack.c.b16 %v1714, %v1713
    %v1917 = vpack.c.b16 %v1716, %v1715
    %v1918 = vpack.c.b16 %v1718, %v1717
    %v1919 = vpack.c.b16 %v1720, %v1719
    %v1920 = vpack.c.b16 %v1722, %v1721
    %v1921 = vpack.c.b16 %v1724, %v1723
    %v1922 = vpack.c.b16 %v1726, %v1725
    %v1923 = vpack.c.b16 %v1728, %v1727
    %v1924 = vpack.c.b16 %v1730, %v1729
    %v1925 = vpack.c.b16 %v1732, %v1731
    %v1926 = vpack.c.b16 %v1734, %v1733
    %v1927 = vpack.c.b16 %v1736, %v1735
    %v1928 = vpack.c.b16 %v1738, %v1737
    %v1929 = vpack.c.b16 %v1740, %v1739
    %v1930 = vpack.c.b16 %v1742, %v1741
    %v1931 = vpack.c.b16 %v1744, %v1743
    %v1932 = vpack.c.b16 %v1746, %v1745
    %v1933 = vpack.c.b16 %v1748, %v1747
    %v1934 = vpack.c.b16 %v1750, %v1749
    %v1935 = vpack.c.b16 %v1752, %v1751
    %v1936 = vpack.c.b16 %v1754, %v1753
    %v1937 = vpack.c.b16 %v1756, %v1755
    %v1938 = vpack.c.b16 %v1758, %v1757
    %v1939 = vpack.c.b16 %v1760, %v1759
    %v1940 = vpack.c.b16 %v1762, %v1761
    %v1941 = vpack.c.b16 %v1764, %v1763
    %v1942 = vpack.c.b16 %v1766, %v1765
    %v1943 = vpack.c.b16 %v1768, %v1767
    %v1944 = vpack.c.b16 %v1770, %v1769
    %v1945 = vpack.c.b16 %v1772, %v1771
    %v1946 = vpack.c.b16 %v1774, %v1773
    %v1947 = vpack.c.b16 %v1776, %v1775
    %v1948 = vpack.c.b16 %v1778, %v1777
    %v1949 = vpack.c.b16 %v1780, %v1779
    %v1950 = vpack.c.b16 %v1782, %v1781
    %v1951 = vpack.c.b16 %v1784, %v1783
    %v1952 = vpack.c.b16 %v1786, %v1785
    %v1953 = vpack.c.b16 %v1788, %v1787
    %v1954 = vpack.c.b16 %v1790, %v1789
    %v1955 = vpack.c.b16 %v1792, %v1791
    %v1956 = vpack.c.b16 %v1794, %v1793
    %v1957 = vpack.c.b16 %v1796, %v1795
    %v1958 = vpack.c.b16 %v1798, %v1797
    %v1959 = vpack.c.b16 %v1800, %v1799
    %v1960 = vpack.c.b16 %v1802, %v1801
    %v1961 = vpack.c.b16 %v1804, %v1803
    %v1962 = vpack.c.b16 %v1806, %v1805
    %v1963 = vpack.c.b16 %v1808, %v1807
    %v1964 = vpack.c.b16 %v1810, %v1809
    %v1965 = vpack.c.b16 %v1812, %v1811
    %v1966 = vpack.c.b16 %v1814, %v1813
    %v1967 = vpack.c.b16 %v1816, %v1815
    %v1968 = vpack.c.b16 %v1818, %v1817
    %v1969 = vpack.c.b16 %v1820, %v1819
    %v1970 = vpack.c.b16 %v1822, %v1821
    %v1971 = vpack.c.b16 %v1824, %v1823
    %v1972 = vpack.c.b16 %v1826, %v1825
    %v1973 = vpack.c.b16 %v1828, %v1827
    %v1974 = vpack.c.b16 %v1830, %v1829
    %v1975 = vpack.c.b16 %v1832, %v1831
    %v1976 = vpack.c.b16 %v1834, %v1833
    %v1977 = vpack.c.b16 %v1836, %v1835
    %v1978 = vpack.c.b16 %v1838, %v1837
    %v1979 = vpack.c.b16 %v1840, %v1839
    %v1980 = vpack.c.b16 %v1842, %v1841
    %v1981 = vpack.c.b16 %v1844, %v1843
    %v1982 = vpack.c.b16 %v1846, %v1845
    %v1983 = vpack.c.b16 %v1848, %v1847
    %v1984 = vpack.c.b16 %v1850, %v1849
    %v1985 = vpack.c.b16 %v1852, %v1851
    %v1986 = vpack.c.b16 %v1854, %v1853
    %v1987 = vpack.c.b16 %v1856, %v1855
    %v1988 = vpack.c.b16 %v1858, %v1857
    %v1989 = vpack.c.b16 %v1860, %v1859
    %v1990 = vpack.c.b16 %v1862, %v1861
    %2119 = vmatprep.subr.bf16.mxu0 0
    %2120 = vmatpush1.bf16.msra.mxu0 %v1863
    %2121 = vmatprep.subr.bf16.mxu0 0
    %2122 = vmatpush1.bf16.msra.mxu0 %v1864
    %2123 = vmatprep.subr.bf16.mxu0 0
    %2124 = vmatpush1.bf16.msra.mxu0 %v1865
    %2125 = vmatprep.subr.bf16.mxu0 0
    %2126 = vmatpush1.bf16.msra.mxu0 %v1866
    %2127 = vmatprep.subr.bf16.mxu0 0
    %2128 = vmatpush1.bf16.msra.mxu0 %v1867
    %2129 = vmatprep.subr.bf16.mxu0 0
    %2130 = vmatpush1.bf16.msra.mxu0 %v1868
    %2131 = vmatprep.subr.bf16.mxu0 0
    %2132 = vmatpush1.bf16.msra.mxu0 %v1869
    %2133 = vmatprep.subr.bf16.mxu0 0
    %2134 = vmatpush1.bf16.msra.mxu0 %v1870
    %2135 = vmatprep.subr.bf16.mxu0 0
    %2136 = vmatpush1.bf16.msra.mxu0 %v1871
    %2137 = vmatprep.subr.bf16.mxu0 0
    %2138 = vmatpush1.bf16.msra.mxu0 %v1872
    %2139 = vmatprep.subr.bf16.mxu0 0
    %2140 = vmatpush1.bf16.msra.mxu0 %v1873
    %2141 = vmatprep.subr.bf16.mxu0 0
    %2142 = vmatpush1.bf16.msra.mxu0 %v1874
    %2143 = vmatprep.subr.bf16.mxu0 0
    %2144 = vmatpush1.bf16.msra.mxu0 %v1875
    %2145 = vmatprep.subr.bf16.mxu0 0
    %2146 = vmatpush1.bf16.msra.mxu0 %v1876
    %2147 = vmatprep.subr.bf16.mxu0 0
    %2148 = vmatpush1.bf16.msra.mxu0 %v1877
    %2149 = vmatprep.subr.bf16.mxu0 0
    %2150 = vmatpush1.bf16.msra.mxu0 %v1878
    %2151 = vmatprep.mubr.bf16.mxu0 %v1073
    %2152 = vmatmul.mubr.bf16.gmra.mrb[0].mxu0 %v1072
    %v2153 = vpop.f32.mrb[0].mxu0
    %v2154 = vadd.f32 %v1349, %v2153
    %v2155 = vpop.f32.mrb[0].mxu0
    %v2156 = vpop.f32.mrb[0].mxu0
    %v2157 = vadd.f32 %v1349, %v2156
    %v2158 = vpop.f32.mrb[0].mxu0
    %2159 = vdwg.mxu0
    %2160 = vmatprep.subr.bf16.mxu0 0
    %2161 = vmatpush1.bf16.msra.mxu0 %v1879
    %2162 = vmatprep.subr.bf16.mxu0 0
    %2163 = vmatpush1.bf16.msra.mxu0 %v1880
    %2164 = vmatprep.subr.bf16.mxu0 0
    %2165 = vmatpush1.bf16.msra.mxu0 %v1881
    %2166 = vmatprep.subr.bf16.mxu0 0
    %2167 = vmatpush1.bf16.msra.mxu0 %v1882
    %2168 = vmatprep.subr.bf16.mxu0 0
    %2169 = vmatpush1.bf16.msra.mxu0 %v1883
    %2170 = vmatprep.subr.bf16.mxu0 0
    %2171 = vmatpush1.bf16.msra.mxu0 %v1884
    %2172 = vmatprep.subr.bf16.mxu0 0
    %2173 = vmatpush1.bf16.msra.mxu0 %v1885
    %2174 = vmatprep.subr.bf16.mxu0 0
    %2175 = vmatpush1.bf16.msra.mxu0 %v1886
    %2176 = vmatprep.subr.bf16.mxu0 0
    %2177 = vmatpush1.bf16.msra.mxu0 %v1887
    %2178 = vmatprep.subr.bf16.mxu0 0
    %2179 = vmatpush1.bf16.msra.mxu0 %v1888
    %2180 = vmatprep.subr.bf16.mxu0 0
    %2181 = vmatpush1.bf16.msra.mxu0 %v1889
    %2182 = vmatprep.subr.bf16.mxu0 0
    %2183 = vmatpush1.bf16.msra.mxu0 %v1890
    %2184 = vmatprep.subr.bf16.mxu0 0
    %2185 = vmatpush1.bf16.msra.mxu0 %v1891
    %2186 = vmatprep.subr.bf16.mxu0 0
    %2187 = vmatpush1.bf16.msra.mxu0 %v1892
    %2188 = vmatprep.subr.bf16.mxu0 0
    %2189 = vmatpush1.bf16.msra.mxu0 %v1893
    %2190 = vmatprep.subr.bf16.mxu0 0
    %2191 = vmatpush1.bf16.msra.mxu0 %v1894
    %2192 = vmatprep.mubr.bf16.mxu0 %v1075
    %2193 = vmatmul.mubr.bf16.gmra.mrb[0].mxu0 %v1074
    %v2194 = vpop.f32.mrb[0].mxu0
    %v2195 = vadd.f32 %v2154, %v2194
    %v2196 = vpop.f32.mrb[0].mxu0
    %v2197 = vpop.f32.mrb[0].mxu0
    %v2198 = vadd.f32 %v2157, %v2197
    %v2199 = vpop.f32.mrb[0].mxu0
    %2200 = vdwg.mxu0
    %2201 = vmatprep.subr.bf16.mxu0 0
    %2202 = vmatpush1.bf16.msra.mxu0 %v1895
    %2203 = vmatprep.subr.bf16.mxu0 0
    %2204 = vmatpush1.bf16.msra.mxu0 %v1896
    %2205 = vmatprep.subr.bf16.mxu0 0
    %2206 = vmatpush1.bf16.msra.mxu0 %v1897
    %2207 = vmatprep.subr.bf16.mxu0 0
    %2208 = vmatpush1.bf16.msra.mxu0 %v1898
    %2209 = vmatprep.subr.bf16.mxu0 0
    %2210 = vmatpush1.bf16.msra.mxu0 %v1899
    %2211 = vmatprep.subr.bf16.mxu0 0
    %2212 = vmatpush1.bf16.msra.mxu0 %v1900
    %2213 = vmatprep.subr.bf16.mxu0 0
    %2214 = vmatpush1.bf16.msra.mxu0 %v1901
    %2215 = vmatprep.subr.bf16.mxu0 0
    %2216 = vmatpush1.bf16.msra.mxu0 %v1902
    %2217 = vmatprep.subr.bf16.mxu0 0
    %2218 = vmatpush1.bf16.msra.mxu0 %v1903
    %2219 = vmatprep.subr.bf16.mxu0 0
    %2220 = vmatpush1.bf16.msra.mxu0 %v1904
    %2221 = vmatprep.subr.bf16.mxu0 0
    %2222 = vmatpush1.bf16.msra.mxu0 %v1905
    %2223 = vmatprep.subr.bf16.mxu0 0
    %2224 = vmatpush1.bf16.msra.mxu0 %v1906
    %2225 = vmatprep.subr.bf16.mxu0 0
    %2226 = vmatpush1.bf16.msra.mxu0 %v1907
    %2227 = vmatprep.subr.bf16.mxu0 0
    %2228 = vmatpush1.bf16.msra.mxu0 %v1908
    %2229 = vmatprep.subr.bf16.mxu0 0
    %2230 = vmatpush1.bf16.msra.mxu0 %v1909
    %2231 = vmatprep.subr.bf16.mxu0 0
    %2232 = vmatpush1.bf16.msra.mxu0 %v1910
    %2233 = vmatprep.mubr.bf16.mxu0 %v1077
    %2234 = vmatmul.mubr.bf16.gmra.mrb[0].mxu0 %v1076
    %v2235 = vpop.f32.mrb[0].mxu0
    %v2236 = vadd.f32 %v2195, %v2235
    %v2237 = vpop.f32.mrb[0].mxu0
    %v2238 = vpop.f32.mrb[0].mxu0
    %v2239 = vadd.f32 %v2198, %v2238
    %v2240 = vpop.f32.mrb[0].mxu0
    %2241 = vdwg.mxu0
    %2242 = vmatprep.subr.bf16.mxu0 0
    %2243 = vmatpush1.bf16.msra.mxu0 %v1911
    %2244 = vmatprep.subr.bf16.mxu0 0
    %2245 = vmatpush1.bf16.msra.mxu0 %v1912
    %2246 = vmatprep.subr.bf16.mxu0 0
    %2247 = vmatpush1.bf16.msra.mxu0 %v1913
    %2248 = vmatprep.subr.bf16.mxu0 0
    %2249 = vmatpush1.bf16.msra.mxu0 %v1914
    %2250 = vmatprep.subr.bf16.mxu0 0
    %2251 = vmatpush1.bf16.msra.mxu0 %v1915
    %2252 = vmatprep.subr.bf16.mxu0 0
    %2253 = vmatpush1.bf16.msra.mxu0 %v1916
    %2254 = vmatprep.subr.bf16.mxu0 0
    %2255 = vmatpush1.bf16.msra.mxu0 %v1917
    %2256 = vmatprep.subr.bf16.mxu0 0
    %2257 = vmatpush1.bf16.msra.mxu0 %v1918
    %2258 = vmatprep.subr.bf16.mxu0 0
    %2259 = vmatpush1.bf16.msra.mxu0 %v1919
    %2260 = vmatprep.subr.bf16.mxu0 0
    %2261 = vmatpush1.bf16.msra.mxu0 %v1920
    %2262 = vmatprep.subr.bf16.mxu0 0
    %2263 = vmatpush1.bf16.msra.mxu0 %v1921
    %2264 = vmatprep.subr.bf16.mxu0 0
    %2265 = vmatpush1.bf16.msra.mxu0 %v1922
    %2266 = vmatprep.subr.bf16.mxu0 0
    %2267 = vmatpush1.bf16.msra.mxu0 %v1923
    %2268 = vmatprep.subr.bf16.mxu0 0
    %2269 = vmatpush1.bf16.msra.mxu0 %v1924
    %2270 = vmatprep.subr.bf16.mxu0 0
    %2271 = vmatpush1.bf16.msra.mxu0 %v1925
    %2272 = vmatprep.subr.bf16.mxu0 0
    %2273 = vmatpush1.bf16.msra.mxu0 %v1926
    %2274 = vmatprep.mubr.bf16.mxu0 %v1079
    %2275 = vmatmul.mubr.bf16.gmra.mrb[0].mxu0 %v1078
    %v2276 = vpop.f32.mrb[0].mxu0
    %v2277 = vadd.f32 %v2236, %v2276
    %v2278 = vpop.f32.mrb[0].mxu0
    %v2279 = vpop.f32.mrb[0].mxu0
    %v2280 = vadd.f32 %v2239, %v2279
    %v2281 = vpop.f32.mrb[0].mxu0
    %2282 = vdwg.mxu0
    %2283 = vmatprep.subr.bf16.mxu0 0
    %2284 = vmatpush1.bf16.msra.mxu0 %v1927
    %2285 = vmatprep.subr.bf16.mxu0 0
    %2286 = vmatpush1.bf16.msra.mxu0 %v1928
    %2287 = vmatprep.subr.bf16.mxu0 0
    %2288 = vmatpush1.bf16.msra.mxu0 %v1929
    %2289 = vmatprep.subr.bf16.mxu0 0
    %2290 = vmatpush1.bf16.msra.mxu0 %v1930
    %2291 = vmatprep.subr.bf16.mxu0 0
    %2292 = vmatpush1.bf16.msra.mxu0 %v1931
    %2293 = vmatprep.subr.bf16.mxu0 0
    %2294 = vmatpush1.bf16.msra.mxu0 %v1932
    %2295 = vmatprep.subr.bf16.mxu0 0
    %2296 = vmatpush1.bf16.msra.mxu0 %v1933
    %2297 = vmatprep.subr.bf16.mxu0 0
    %2298 = vmatpush1.bf16.msra.mxu0 %v1934
    %2299 = vmatprep.subr.bf16.mxu0 0
    %2300 = vmatpush1.bf16.msra.mxu0 %v1935
    %2301 = vmatprep.subr.bf16.mxu0 0
    %2302 = vmatpush1.bf16.msra.mxu0 %v1936
    %2303 = vmatprep.subr.bf16.mxu0 0
    %2304 = vmatpush1.bf16.msra.mxu0 %v1937
    %2305 = vmatprep.subr.bf16.mxu0 0
    %2306 = vmatpush1.bf16.msra.mxu0 %v1938
    %2307 = vmatprep.subr.bf16.mxu0 0
    %2308 = vmatpush1.bf16.msra.mxu0 %v1939
    %2309 = vmatprep.subr.bf16.mxu0 0
    %2310 = vmatpush1.bf16.msra.mxu0 %v1940
    %2311 = vmatprep.subr.bf16.mxu0 0
    %2312 = vmatpush1.bf16.msra.mxu0 %v1941
    %2313 = vmatprep.subr.bf16.mxu0 0
    %2314 = vmatpush1.bf16.msra.mxu0 %v1942
    %2315 = vmatprep.mubr.bf16.mxu0 %v1081
    %2316 = vmatmul.mubr.bf16.gmra.mrb[0].mxu0 %v1080
    %v2317 = vpop.f32.mrb[0].mxu0
    %v2318 = vadd.f32 %v2277, %v2317
    %v2319 = vpop.f32.mrb[0].mxu0
    %v2320 = vpop.f32.mrb[0].mxu0
    %v2321 = vadd.f32 %v2280, %v2320
    %v2322 = vpop.f32.mrb[0].mxu0
    %2323 = vdwg.mxu0
    %2324 = vmatprep.subr.bf16.mxu0 0
    %2325 = vmatpush1.bf16.msra.mxu0 %v1943
    %2326 = vmatprep.subr.bf16.mxu0 0
    %2327 = vmatpush1.bf16.msra.mxu0 %v1944
    %2328 = vmatprep.subr.bf16.mxu0 0
    %2329 = vmatpush1.bf16.msra.mxu0 %v1945
    %2330 = vmatprep.subr.bf16.mxu0 0
    %2331 = vmatpush1.bf16.msra.mxu0 %v1946
    %2332 = vmatprep.subr.bf16.mxu0 0
    %2333 = vmatpush1.bf16.msra.mxu0 %v1947
    %2334 = vmatprep.subr.bf16.mxu0 0
    %2335 = vmatpush1.bf16.msra.mxu0 %v1948
    %2336 = vmatprep.subr.bf16.mxu0 0
    %2337 = vmatpush1.bf16.msra.mxu0 %v1949
    %2338 = vmatprep.subr.bf16.mxu0 0
    %2339 = vmatpush1.bf16.msra.mxu0 %v1950
    %2340 = vmatprep.subr.bf16.mxu0 0
    %2341 = vmatpush1.bf16.msra.mxu0 %v1951
    %2342 = vmatprep.subr.bf16.mxu0 0
    %2343 = vmatpush1.bf16.msra.mxu0 %v1952
    %2344 = vmatprep.subr.bf16.mxu0 0
    %2345 = vmatpush1.bf16.msra.mxu0 %v1953
    %2346 = vmatprep.subr.bf16.mxu0 0
    %2347 = vmatpush1.bf16.msra.mxu0 %v1954
    %2348 = vmatprep.subr.bf16.mxu0 0
    %2349 = vmatpush1.bf16.msra.mxu0 %v1955
    %2350 = vmatprep.subr.bf16.mxu0 0
    %2351 = vmatpush1.bf16.msra.mxu0 %v1956
    %2352 = vmatprep.subr.bf16.mxu0 0
    %2353 = vmatpush1.bf16.msra.mxu0 %v1957
    %2354 = vmatprep.subr.bf16.mxu0 0
    %2355 = vmatpush1.bf16.msra.mxu0 %v1958
    %2356 = vmatprep.mubr.bf16.mxu0 %v1083
    %2357 = vmatmul.mubr.bf16.gmra.mrb[0].mxu0 %v1082
    %v2358 = vpop.f32.mrb[0].mxu0
    %v2359 = vadd.f32 %v2318, %v2358
    %v2360 = vpop.f32.mrb[0].mxu0
    %v2361 = vpop.f32.mrb[0].mxu0
    %v2362 = vadd.f32 %v2321, %v2361
    %v2363 = vpop.f32.mrb[0].mxu0
    %2364 = vdwg.mxu0
    %2365 = vmatprep.subr.bf16.mxu0 0
    %2366 = vmatpush1.bf16.msra.mxu0 %v1959
    %2367 = vmatprep.subr.bf16.mxu0 0
    %2368 = vmatpush1.bf16.msra.mxu0 %v1960
    %2369 = vmatprep.subr.bf16.mxu0 0
    %2370 = vmatpush1.bf16.msra.mxu0 %v1961
    %2371 = vmatprep.subr.bf16.mxu0 0
    %2372 = vmatpush1.bf16.msra.mxu0 %v1962
    %2373 = vmatprep.subr.bf16.mxu0 0
    %2374 = vmatpush1.bf16.msra.mxu0 %v1963
    %2375 = vmatprep.subr.bf16.mxu0 0
    %2376 = vmatpush1.bf16.msra.mxu0 %v1964
    %2377 = vmatprep.subr.bf16.mxu0 0
    %2378 = vmatpush1.bf16.msra.mxu0 %v1965
    %2379 = vmatprep.subr.bf16.mxu0 0
    %2380 = vmatpush1.bf16.msra.mxu0 %v1966
    %2381 = vmatprep.subr.bf16.mxu0 0
    %2382 = vmatpush1.bf16.msra.mxu0 %v1967
    %2383 = vmatprep.subr.bf16.mxu0 0
    %2384 = vmatpush1.bf16.msra.mxu0 %v1968
    %2385 = vmatprep.subr.bf16.mxu0 0
    %2386 = vmatpush1.bf16.msra.mxu0 %v1969
    %2387 = vmatprep.subr.bf16.mxu0 0
    %2388 = vmatpush1.bf16.msra.mxu0 %v1970
    %2389 = vmatprep.subr.bf16.mxu0 0
    %2390 = vmatpush1.bf16.msra.mxu0 %v1971
    %2391 = vmatprep.subr.bf16.mxu0 0
    %2392 = vmatpush1.bf16.msra.mxu0 %v1972
    %2393 = vmatprep.subr.bf16.mxu0 0
    %2394 = vmatpush1.bf16.msra.mxu0 %v1973
    %2395 = vmatprep.subr.bf16.mxu0 0
    %2396 = vmatpush1.bf16.msra.mxu0 %v1974
    %2397 = vmatprep.mubr.bf16.mxu0 %v1085
    %2398 = vmatmul.mubr.bf16.gmra.mrb[0].mxu0 %v1084
    %v2399 = vpop.f32.mrb[0].mxu0
    %v2400 = vadd.f32 %v2359, %v2399
    %v2401 = vpop.f32.mrb[0].mxu0
    %v2402 = vpop.f32.mrb[0].mxu0
    %v2403 = vadd.f32 %v2362, %v2402
    %v2404 = vpop.f32.mrb[0].mxu0
    %2405 = vdwg.mxu0
    %2406 = vmatprep.subr.bf16.mxu0 0
    %2407 = vmatpush1.bf16.msra.mxu0 %v1975
    %2408 = vmatprep.subr.bf16.mxu0 0
    %2409 = vmatpush1.bf16.msra.mxu0 %v1976
    %2410 = vmatprep.subr.bf16.mxu0 0
    %2411 = vmatpush1.bf16.msra.mxu0 %v1977
    %2412 = vmatprep.subr.bf16.mxu0 0
    %2413 = vmatpush1.bf16.msra.mxu0 %v1978
    %2414 = vmatprep.subr.bf16.mxu0 0
    %2415 = vmatpush1.bf16.msra.mxu0 %v1979
    %2416 = vmatprep.subr.bf16.mxu0 0
    %2417 = vmatpush1.bf16.msra.mxu0 %v1980
    %2418 = vmatprep.subr.bf16.mxu0 0
    %2419 = vmatpush1.bf16.msra.mxu0 %v1981
    %2420 = vmatprep.subr.bf16.mxu0 0
    %2421 = vmatpush1.bf16.msra.mxu0 %v1982
    %2422 = vmatprep.subr.bf16.mxu0 0
    %2423 = vmatpush1.bf16.msra.mxu0 %v1983
    %2424 = vmatprep.subr.bf16.mxu0 0
    %2425 = vmatpush1.bf16.msra.mxu0 %v1984
    %2426 = vmatprep.subr.bf16.mxu0 0
    %2427 = vmatpush1.bf16.msra.mxu0 %v1985
    %2428 = vmatprep.subr.bf16.mxu0 0
    %2429 = vmatpush1.bf16.msra.mxu0 %v1986
    %2430 = vmatprep.subr.bf16.mxu0 0
    %2431 = vmatpush1.bf16.msra.mxu0 %v1987
    %2432 = vmatprep.subr.bf16.mxu0 0
    %2433 = vmatpush1.bf16.msra.mxu0 %v1988
    %2434 = vmatprep.subr.bf16.mxu0 0
    %2435 = vmatpush1.bf16.msra.mxu0 %v1989
    %2436 = vmatprep.subr.bf16.mxu0 0
    %2437 = vmatpush1.bf16.msra.mxu0 %v1990
    %2438 = vmatprep.mubr.bf16.mxu0 %v1087
    %2439 = vmatmul.mubr.bf16.gmra.mrb[0].mxu0 %v1086
    %v2440 = vpop.f32.mrb[0].mxu0
    %v2441 = vadd.f32 %v2400, %v2440
    %v2442 = vpop.f32.mrb[0].mxu0
    %v2443 = vpop.f32.mrb[0].mxu0
    %v2444 = vadd.f32 %v2403, %v2443
    %v2445 = vpop.f32.mrb[0].mxu0
    %2446 = vdwg.mxu0
    %v2447 = vadd.f32 %v414, %v2441
    %v2448 = vadd.f32 %v415, %v2444
    %v2449 = vld [vmem:[%s12] sm:$0x1]
    %v2450 = vld [vmem:[%s13] sm:$0x1]
    %v2451 = vsel %vm99, %v2447, 0.0
    %2452 = vadd.xlane.f32.xlu0 %v2451
    %v2453 = vpop.xlane.xlu0 %2452
    %v2454 = vsel %vm99, %v2448, 0.0
    %2455 = vadd.xlane.f32.xlu0 %v2454
    %v2456 = vpop.xlane.xlu0 %2455
    %v2457 = vmul.f32 %v2453, %v379
    %v2458 = vmul.f32 %v2456, %v379
    %v2459 = vsub.f32 %v2447, %v2457
    %v2460 = vsub.f32 %v2448, %v2458
    %v2461 = vmul.f32 %v2459, %v2459
    %v2462 = vmul.f32 %v2460, %v2460
    %v2463 = vsel %vm99, %v2461, 0.0
    %2464 = vadd.xlane.f32.xlu0 %v2463
    %v2465 = vpop.xlane.xlu0 %2464
    %v2466 = vsel %vm99, %v2462, 0.0
    %2467 = vadd.xlane.f32.xlu0 %v2466
    %v2468 = vpop.xlane.xlu0 %2467
    %v2469 = vmul.f32 %v2465, %v379
    %v2470 = vmul.f32 %v2468, %v379
    %v2471 = vadd.f32 %v2469, 1e-05
    %v2472 = vadd.f32 %v2470, 1e-05
    %v2473 = vrsqrt.pop %v2471
    %v2474 = vrsqrt.pop %v2472
    %v2475 = vmul.f32 %v2459, %v2473
    %v2476 = vmul.f32 %v2460, %v2474
    %v2478 = vlaneseq
    %v2479 = vshrl.u32 %v2478, 7
    %v2480 = vsub.s32 0, %v2479
    %v2481 = vrot.slane %v2449, %v2480
    %v2483 = vmul.f32 %v2475, %v2481
    %v2484 = vmul.f32 %v2476, %v2481
    %v2486 = vlaneseq
    %v2487 = vshrl.u32 %v2486, 7
    %v2488 = vsub.s32 0, %v2487
    %v2489 = vrot.slane %v2450, %v2488
    %v2491 = vadd.f32 %v2483, %v2489
    %v2492 = vadd.f32 %v2484, %v2489
    %v2493 = vpack.c.bf16 %v2492, %v2491
    %s2494 = scalar_lea.vmem %s2, 16
    %v2495 = vld [vmem:[%s2494] sm:$0xf]
    %v2496 = vld [vmem:[%s2494 + $0x4] sm:$0xf]
    %v2497 = vld [vmem:[%s2494 + $0x8] sm:$0xf]
    %v2498 = vld [vmem:[%s2494 + $0xc] sm:$0xf]
    %s2499 = scalar_lea.vmem %s3, 1
    %v2500 = vld [vmem:[%s2499] sm:$0x1]
    %v2502 = vlaneseq
    %v2503 = vshrl.u32 %v2502, 7
    %v2504 = vsub.s32 0, %v2503
    %v2505 = vrot.slane %v2500, %v2504
    %v2511 = vunpack.c.l.b16 %v2495
    %v2512 = vunpack.c.l.b16 %v2496
    %v2513 = vunpack.c.l.b16 %v2497
    %v2514 = vunpack.c.l.b16 %v2498
    %v2515 = vpack.c.b16 %v2512, %v2511
    %v2516 = vpack.c.b16 %v2514, %v2513
    %v2520 = vsel %vm99, %v2493, 0
    %2522 = vmatprep.subr.bf16.mxu0 0
    %2523 = vmatpush1.bf16.msra.mxu0 %v2515
    %2524 = vmatprep.subr.bf16.mxu0 0
    %2525 = vmatpush1.bf16.msra.mxu0 %v2516
    %2526 = vmatprep.subr.bf16.mxu0 0
    %2527 = vmatpush1.bf16.msra.mxu0 0
    %2528 = vmatprep.subr.bf16.mxu0 0
    %2529 = vmatpush1.bf16.msra.mxu0 0
    %2530 = vmatprep.subr.bf16.mxu0 0
    %2531 = vmatpush1.bf16.msra.mxu0 0
    %2532 = vmatprep.subr.bf16.mxu0 0
    %2533 = vmatpush1.bf16.msra.mxu0 0
    %2534 = vmatprep.subr.bf16.mxu0 0
    %2535 = vmatpush1.bf16.msra.mxu0 0
    %2536 = vmatprep.subr.bf16.mxu0 0
    %2537 = vmatpush1.bf16.msra.mxu0 0
    %2538 = vmatprep.subr.bf16.mxu0 0
    %2539 = vmatpush1.bf16.msra.mxu0 0
    %2540 = vmatprep.subr.bf16.mxu0 0
    %2541 = vmatpush1.bf16.msra.mxu0 0
    %2542 = vmatprep.subr.bf16.mxu0 0
    %2543 = vmatpush1.bf16.msra.mxu0 0
    %2544 = vmatprep.subr.bf16.mxu0 0
    %2545 = vmatpush1.bf16.msra.mxu0 0
    %2546 = vmatprep.subr.bf16.mxu0 0
    %2547 = vmatpush1.bf16.msra.mxu0 0
    %2548 = vmatprep.subr.bf16.mxu0 0
    %2549 = vmatpush1.bf16.msra.mxu0 0
    %2550 = vmatprep.subr.bf16.mxu0 0
    %2551 = vmatpush1.bf16.msra.mxu0 0
    %2552 = vmatprep.subr.bf16.mxu0 0
    %2553 = vmatpush1.bf16.msra.mxu0 0
    %2554 = vmatprep.mubr.bf16.mxu0 0
    %2555 = vmatmul.mubr.bf16.gmra.mrb[0].mxu0 %v2520
    %v2556 = vpop.f32.mrb[0].mxu0
    %v2557 = vadd.f32 %v2505, %v2556
    %v2558 = vpop.f32.mrb[0].mxu0
    %v2559 = vpop.f32.mrb[0].mxu0
    %v2560 = vadd.f32 %v2505, %v2559
    %v2561 = vpop.f32.mrb[0].mxu0
    %2562 = vdwg.mxu0
    %v2563 = vsub.f32 %v2557, %v2560
    %v2564 = vsub.f32 %v2560, %v2557
    %2567 = vrot.lane.b32.xlu0 %v2563, 96
    %v2568 = vpop.permute.xlu0 %2567
    %2569 = vrot.lane.b32.xlu0 %v2564, 96
    %v2570 = vpop.permute.xlu0 %2569
    %v2573 = vmul.f32 %v2557, %v2568
    %v2574 = vmul.f32 %v2560, %v2570
    %v2575 = vpack.c.bf16 %v2574, %v2573
    %v2577 = vsel %vm99, %v2575, 0
    %2579 = vmatprep.subr.bf16.mxu0 0
    %2580 = vmatpush1.bf16.msra.mxu0 %v169
    %2581 = vmatprep.subr.bf16.mxu0 0
    %2582 = vmatpush1.bf16.msra.mxu0 %v170
    %2583 = vmatprep.subr.bf16.mxu0 0
    %2584 = vmatpush1.bf16.msra.mxu0 0
    %2585 = vmatprep.subr.bf16.mxu0 0
    %2586 = vmatpush1.bf16.msra.mxu0 0
    %2587 = vmatprep.subr.bf16.mxu0 0
    %2588 = vmatpush1.bf16.msra.mxu0 0
    %2589 = vmatprep.subr.bf16.mxu0 0
    %2590 = vmatpush1.bf16.msra.mxu0 0
    %2591 = vmatprep.subr.bf16.mxu0 0
    %2592 = vmatpush1.bf16.msra.mxu0 0
    %2593 = vmatprep.subr.bf16.mxu0 0
    %2594 = vmatpush1.bf16.msra.mxu0 0
    %2595 = vmatprep.subr.bf16.mxu0 0
    %2596 = vmatpush1.bf16.msra.mxu0 0
    %2597 = vmatprep.subr.bf16.mxu0 0
    %2598 = vmatpush1.bf16.msra.mxu0 0
    %2599 = vmatprep.subr.bf16.mxu0 0
    %2600 = vmatpush1.bf16.msra.mxu0 0
    %2601 = vmatprep.subr.bf16.mxu0 0
    %2602 = vmatpush1.bf16.msra.mxu0 0
    %2603 = vmatprep.subr.bf16.mxu0 0
    %2604 = vmatpush1.bf16.msra.mxu0 0
    %2605 = vmatprep.subr.bf16.mxu0 0
    %2606 = vmatpush1.bf16.msra.mxu0 0
    %2607 = vmatprep.subr.bf16.mxu0 0
    %2608 = vmatpush1.bf16.msra.mxu0 0
    %2609 = vmatprep.subr.bf16.mxu0 0
    %2610 = vmatpush1.bf16.msra.mxu0 0
    %2611 = vmatprep.mubr.bf16.mxu0 0
    %2612 = vmatmul.mubr.bf16.gmra.mrb[0].mxu0 %v2577
    %v2613 = vpop.f32.mrb[0].mxu0
    %v2614 = vadd.f32 0.0, %v2613
    %v2615 = vpop.f32.mrb[0].mxu0
    %v2616 = vpop.f32.mrb[0].mxu0
    %v2617 = vadd.f32 0.0, %v2616
    %v2618 = vpop.f32.mrb[0].mxu0
    %2619 = vdwg.mxu0
    %v2620 = vmul.f32 %v2614, 0.35355338
    %v2621 = vmul.f32 %v2617, 0.35355338
    %v2622 = vsub.f32 0.0, %v2620
    %v2623 = vsub.f32 0.0, %v2621
    %v2624 = vmul.f32 %v2622, 1.442695
    %v2625 = vpow.pop %v2624
    %v2626 = vmul.f32 %v2623, 1.442695
    %v2627 = vpow.pop %v2626
    %v2628 = vadd.f32 %v2625, 1.0
    %v2629 = vadd.f32 %v2627, 1.0
    %v2630 = vrcp.pop %v2628
    %v2631 = vrcp.pop %v2629
    %v2632 = vpack.c.bf16 %v2631, %v2630
    %v2634 = vsel %vm231, %v2632, 0
    %2636 = vmatprep.subr.bf16.mxu0 0
    %2637 = vmatpush1.bf16.msra.mxu0 %v237
    %2638 = vmatprep.subr.bf16.mxu0 0
    %2639 = vmatpush1.bf16.msra.mxu0 0
    %2640 = vmatprep.subr.bf16.mxu0 0
    %2641 = vmatpush1.bf16.msra.mxu0 0
    %2642 = vmatprep.subr.bf16.mxu0 0
    %2643 = vmatpush1.bf16.msra.mxu0 0
    %2644 = vmatprep.subr.bf16.mxu0 0
    %2645 = vmatpush1.bf16.msra.mxu0 0
    %2646 = vmatprep.subr.bf16.mxu0 0
    %2647 = vmatpush1.bf16.msra.mxu0 0
    %2648 = vmatprep.subr.bf16.mxu0 0
    %2649 = vmatpush1.bf16.msra.mxu0 0
    %2650 = vmatprep.subr.bf16.mxu0 0
    %2651 = vmatpush1.bf16.msra.mxu0 0
    %2652 = vmatprep.subr.bf16.mxu0 0
    %2653 = vmatpush1.bf16.msra.mxu0 0
    %2654 = vmatprep.subr.bf16.mxu0 0
    %2655 = vmatpush1.bf16.msra.mxu0 0
    %2656 = vmatprep.subr.bf16.mxu0 0
    %2657 = vmatpush1.bf16.msra.mxu0 0
    %2658 = vmatprep.subr.bf16.mxu0 0
    %2659 = vmatpush1.bf16.msra.mxu0 0
    %2660 = vmatprep.subr.bf16.mxu0 0
    %2661 = vmatpush1.bf16.msra.mxu0 0
    %2662 = vmatprep.subr.bf16.mxu0 0
    %2663 = vmatpush1.bf16.msra.mxu0 0
    %2664 = vmatprep.subr.bf16.mxu0 0
    %2665 = vmatpush1.bf16.msra.mxu0 0
    %2666 = vmatprep.subr.bf16.mxu0 0
    %2667 = vmatpush1.bf16.msra.mxu0 0
    %2668 = vmatprep.mubr.bf16.mxu0 0
    %2669 = vmatmul.mubr.bf16.gmra.mrb[0].mxu0 %v2634
    %v2670 = vpop.f32.mrb[0].mxu0
    %v2671 = vadd.f32 0.0, %v2670
    %v2672 = vpop.f32.mrb[0].mxu0
    %v2673 = vpop.f32.mrb[0].mxu0
    %v2674 = vadd.f32 0.0, %v2673
    %v2675 = vpop.f32.mrb[0].mxu0
    %2676 = vdwg.mxu0
    %2677 = vrot.lane.b32.xlu0 %v2563, 64
    %v2678 = vpop.permute.xlu0 %2677
    %2679 = vrot.lane.b32.xlu0 %v2564, 64
    %v2680 = vpop.permute.xlu0 %2679
    %v2683 = vmul.f32 %v2671, %v2678
    %v2684 = vmul.f32 %v2674, %v2680
    %2687 = vrot.lane.b32.xlu0 %v2683, 64
    %v2688 = vpop.permute.xlu0 %2687
    %2689 = vrot.lane.b32.xlu0 %v2684, 64
    %v2690 = vpop.permute.xlu0 %2689
    %v2693 = vadd.f32 %v2560, %v2688
    %v2694 = vadd.f32 %v2557, %v2690
    %v2695 = vpack.c.bf16 %v2694, %v2693
    %s2696 = scalar_lea.vmem %s4, 16
    %v2697 = vld [vmem:[%s2696] sm:$0xf]
    %v2698 = vld [vmem:[%s2696 + $0x4] sm:$0xf]
    %v2699 = vld [vmem:[%s2696 + $0x8] sm:$0xf]
    %v2700 = vld [vmem:[%s2696 + $0xc] sm:$0xf]
    %s2701 = scalar_lea.vmem %s5, 1
    %v2702 = vld [vmem:[%s2701] sm:$0x1]
    %v2704 = vlaneseq
    %v2705 = vshrl.u32 %v2704, 7
    %v2706 = vsub.s32 0, %v2705
    %v2707 = vrot.slane %v2702, %v2706
    %2710 = vrot.lane.b32.xlu0 %v2695, 64
    %v2711 = vpop.permute.xlu0 %2710
    %v2716 = vunpack.c.l.b16 %v2697
    %v2717 = vunpack.c.l.b16 %v2698
    %v2718 = vunpack.c.l.b16 %v2699
    %v2719 = vunpack.c.l.b16 %v2700
    %v2720 = vpack.c.b16 %v2717, %v2716
    %v2721 = vpack.c.b16 %v2719, %v2718
    %v2725 = vsel %vm99, %v2711, 0
    %2727 = vmatprep.subr.bf16.mxu0 0
    %2728 = vmatpush1.bf16.msra.mxu0 %v2720
    %2729 = vmatprep.subr.bf16.mxu0 0
    %2730 = vmatpush1.bf16.msra.mxu0 %v2721
    %2731 = vmatprep.subr.bf16.mxu0 0
    %2732 = vmatpush1.bf16.msra.mxu0 0
    %2733 = vmatprep.subr.bf16.mxu0 0
    %2734 = vmatpush1.bf16.msra.mxu0 0
    %2735 = vmatprep.subr.bf16.mxu0 0
    %2736 = vmatpush1.bf16.msra.mxu0 0
    %2737 = vmatprep.subr.bf16.mxu0 0
    %2738 = vmatpush1.bf16.msra.mxu0 0
    %2739 = vmatprep.subr.bf16.mxu0 0
    %2740 = vmatpush1.bf16.msra.mxu0 0
    %2741 = vmatprep.subr.bf16.mxu0 0
    %2742 = vmatpush1.bf16.msra.mxu0 0
    %2743 = vmatprep.subr.bf16.mxu0 0
    %2744 = vmatpush1.bf16.msra.mxu0 0
    %2745 = vmatprep.subr.bf16.mxu0 0
    %2746 = vmatpush1.bf16.msra.mxu0 0
    %2747 = vmatprep.subr.bf16.mxu0 0
    %2748 = vmatpush1.bf16.msra.mxu0 0
    %2749 = vmatprep.subr.bf16.mxu0 0
    %2750 = vmatpush1.bf16.msra.mxu0 0
    %2751 = vmatprep.subr.bf16.mxu0 0
    %2752 = vmatpush1.bf16.msra.mxu0 0
    %2753 = vmatprep.subr.bf16.mxu0 0
    %2754 = vmatpush1.bf16.msra.mxu0 0
    %2755 = vmatprep.subr.bf16.mxu0 0
    %2756 = vmatpush1.bf16.msra.mxu0 0
    %2757 = vmatprep.subr.bf16.mxu0 0
    %2758 = vmatpush1.bf16.msra.mxu0 0
    %2759 = vmatprep.mubr.bf16.mxu0 0
    %2760 = vmatmul.mubr.bf16.gmra.mrb[0].mxu0 %v2725
    %v2761 = vpop.f32.mrb[0].mxu0
    %v2762 = vadd.f32 %v2707, %v2761
    %v2763 = vpop.f32.mrb[0].mxu0
    %v2764 = vpop.f32.mrb[0].mxu0
    %v2765 = vadd.f32 %v2707, %v2764
    %v2766 = vpop.f32.mrb[0].mxu0
    %2767 = vdwg.mxu0
    %v2768 = vadd.f32 %v2491, %v2762
    %v2769 = vadd.f32 %v2492, %v2765
    %s2770 = scalar_lea.vmem %s6, 1
    %v2771 = vld [vmem:[%s2770] sm:$0x1]
    %s2772 = scalar_lea.vmem %s7, 1
    %v2773 = vld [vmem:[%s2772] sm:$0x1]
    %v2774 = vsel %vm99, %v2768, 0.0
    %2775 = vadd.xlane.f32.xlu0 %v2774
    %v2776 = vpop.xlane.xlu0 %2775
    %v2777 = vsel %vm99, %v2769, 0.0
    %2778 = vadd.xlane.f32.xlu0 %v2777
    %v2779 = vpop.xlane.xlu0 %2778
    %v2780 = vmul.f32 %v2776, %v379
    %v2781 = vmul.f32 %v2779, %v379
    %v2782 = vsub.f32 %v2768, %v2780
    %v2783 = vsub.f32 %v2769, %v2781
    %v2784 = vmul.f32 %v2782, %v2782
    %v2785 = vmul.f32 %v2783, %v2783
    %v2786 = vsel %vm99, %v2784, 0.0
    %2787 = vadd.xlane.f32.xlu0 %v2786
    %v2788 = vpop.xlane.xlu0 %2787
    %v2789 = vsel %vm99, %v2785, 0.0
    %2790 = vadd.xlane.f32.xlu0 %v2789
    %v2791 = vpop.xlane.xlu0 %2790
    %v2792 = vmul.f32 %v2788, %v379
    %v2793 = vmul.f32 %v2791, %v379
    %v2794 = vadd.f32 %v2792, 1e-05
    %v2795 = vadd.f32 %v2793, 1e-05
    %v2796 = vrsqrt.pop %v2794
    %v2797 = vrsqrt.pop %v2795
    %v2798 = vmul.f32 %v2782, %v2796
    %v2799 = vmul.f32 %v2783, %v2797
    %v2801 = vlaneseq
    %v2802 = vshrl.u32 %v2801, 7
    %v2803 = vsub.s32 0, %v2802
    %v2804 = vrot.slane %v2771, %v2803
    %v2806 = vmul.f32 %v2798, %v2804
    %v2807 = vmul.f32 %v2799, %v2804
    %v2809 = vlaneseq
    %v2810 = vshrl.u32 %v2809, 7
    %v2811 = vsub.s32 0, %v2810
    %v2812 = vrot.slane %v2773, %v2811
    %v2814 = vadd.f32 %v2806, %v2812
    %v2815 = vadd.f32 %v2807, %v2812
    %v2816 = vpack.c.bf16 %v2815, %v2814
    %s2817 = scalar_lea.vmem %s8, 256
    %v2818 = vld [vmem:[%s2817] sm:$0xff]
    %v2819 = vld [vmem:[%s2817 + $0x8] sm:$0xff]
    %v2820 = vld [vmem:[%s2817 + $0x10] sm:$0xff]
    %v2821 = vld [vmem:[%s2817 + $0x18] sm:$0xff]
    %v2822 = vld [vmem:[%s2817 + $0x20] sm:$0xff]
    %v2823 = vld [vmem:[%s2817 + $0x28] sm:$0xff]
    %v2824 = vld [vmem:[%s2817 + $0x30] sm:$0xff]
    %v2825 = vld [vmem:[%s2817 + $0x38] sm:$0xff]
    %v2826 = vld [vmem:[%s2817 + $0x40] sm:$0xff]
    %v2827 = vld [vmem:[%s2817 + $0x48] sm:$0xff]
    %v2828 = vld [vmem:[%s2817 + $0x50] sm:$0xff]
    %v2829 = vld [vmem:[%s2817 + $0x58] sm:$0xff]
    %v2830 = vld [vmem:[%s2817 + $0x60] sm:$0xff]
    %v2831 = vld [vmem:[%s2817 + $0x68] sm:$0xff]
    %v2832 = vld [vmem:[%s2817 + $0x70] sm:$0xff]
    %v2833 = vld [vmem:[%s2817 + $0x78] sm:$0xff]
    %v2834 = vld [vmem:[%s2817 + $0x80] sm:$0xff]
    %v2835 = vld [vmem:[%s2817 + $0x88] sm:$0xff]
    %v2836 = vld [vmem:[%s2817 + $0x90] sm:$0xff]
    %v2837 = vld [vmem:[%s2817 + $0x98] sm:$0xff]
    %v2838 = vld [vmem:[%s2817 + $0xa0] sm:$0xff]
    %v2839 = vld [vmem:[%s2817 + $0xa8] sm:$0xff]
    %v2840 = vld [vmem:[%s2817 + $0xb0] sm:$0xff]
    %v2841 = vld [vmem:[%s2817 + $0xb8] sm:$0xff]
    %v2842 = vld [vmem:[%s2817 + $0xc0] sm:$0xff]
    %v2843 = vld [vmem:[%s2817 + $0xc8] sm:$0xff]
    %v2844 = vld [vmem:[%s2817 + $0xd0] sm:$0xff]
    %v2845 = vld [vmem:[%s2817 + $0xd8] sm:$0xff]
    %v2846 = vld [vmem:[%s2817 + $0xe0] sm:$0xff]
    %v2847 = vld [vmem:[%s2817 + $0xe8] sm:$0xff]
    %v2848 = vld [vmem:[%s2817 + $0xf0] sm:$0xff]
    %v2849 = vld [vmem:[%s2817 + $0xf8] sm:$0xff]
    %s2850 = scalar_lea.vmem %s9, 16
    %v2851 = vld [vmem:[%s2850] sm:$0xff]
    %v2852 = vld [vmem:[%s2850 + $0x8] sm:$0xff]
    %v2855 = vlaneseq
    %v2856 = vshrl.u32 %v2855, 7
    %v2857 = vsub.s32 0, %v2856
    %v2858 = vrot.slane %v2851, %v2857
    %v2859 = vlaneseq
    %v2860 = vshrl.u32 %v2859, 7
    %v2861 = vsub.s32 1, %v2860
    %v2862 = vrot.slane %v2851, %v2861
    %v2863 = vlaneseq
    %v2864 = vshrl.u32 %v2863, 7
    %v2865 = vsub.s32 2, %v2864
    %v2866 = vrot.slane %v2851, %v2865
    %v2867 = vlaneseq
    %v2868 = vshrl.u32 %v2867, 7
    %v2869 = vsub.s32 3, %v2868
    %v2870 = vrot.slane %v2851, %v2869
    %v2871 = vlaneseq
    %v2872 = vshrl.u32 %v2871, 7
    %v2873 = vsub.s32 4, %v2872
    %v2874 = vrot.slane %v2851, %v2873
    %v2875 = vlaneseq
    %v2876 = vshrl.u32 %v2875, 7
    %v2877 = vsub.s32 5, %v2876
    %v2878 = vrot.slane %v2851, %v2877
    %v2879 = vlaneseq
    %v2880 = vshrl.u32 %v2879, 7
    %v2881 = vsub.s32 6, %v2880
    %v2882 = vrot.slane %v2851, %v2881
    %v2883 = vlaneseq
    %v2884 = vshrl.u32 %v2883, 7
    %v2885 = vsub.s32 7, %v2884
    %v2886 = vrot.slane %v2851, %v2885
    %v2887 = vlaneseq
    %v2888 = vshrl.u32 %v2887, 7
    %v2889 = vsub.s32 0, %v2888
    %v2890 = vrot.slane %v2852, %v2889
    %v2891 = vlaneseq
    %v2892 = vshrl.u32 %v2891, 7
    %v2893 = vsub.s32 1, %v2892
    %v2894 = vrot.slane %v2852, %v2893
    %v2895 = vlaneseq
    %v2896 = vshrl.u32 %v2895, 7
    %v2897 = vsub.s32 2, %v2896
    %v2898 = vrot.slane %v2852, %v2897
    %v2899 = vlaneseq
    %v2900 = vshrl.u32 %v2899, 7
    %v2901 = vsub.s32 3, %v2900
    %v2902 = vrot.slane %v2852, %v2901
    %v2903 = vlaneseq
    %v2904 = vshrl.u32 %v2903, 7
    %v2905 = vsub.s32 4, %v2904
    %v2906 = vrot.slane %v2852, %v2905
    %v2907 = vlaneseq
    %v2908 = vshrl.u32 %v2907, 7
    %v2909 = vsub.s32 5, %v2908
    %v2910 = vrot.slane %v2852, %v2909
    %v2911 = vlaneseq
    %v2912 = vshrl.u32 %v2911, 7
    %v2913 = vsub.s32 6, %v2912
    %v2914 = vrot.slane %v2852, %v2913
    %v2915 = vlaneseq
    %v2916 = vshrl.u32 %v2915, 7
    %v2917 = vsub.s32 7, %v2916
    %v2918 = vrot.slane %v2852, %v2917
    %v2967 = vunpack.c.l.b16 %v2818
    %v2968 = vunpack.c.h.b16 %v2818
    %v2969 = vunpack.c.l.b16 %v2819
    %v2970 = vunpack.c.h.b16 %v2819
    %v2971 = vunpack.c.l.b16 %v2820
    %v2972 = vunpack.c.h.b16 %v2820
    %v2973 = vunpack.c.l.b16 %v2821
    %v2974 = vunpack.c.h.b16 %v2821
    %v2975 = vunpack.c.l.b16 %v2822
    %v2976 = vunpack.c.h.b16 %v2822
    %v2977 = vunpack.c.l.b16 %v2823
    %v2978 = vunpack.c.h.b16 %v2823
    %v2979 = vunpack.c.l.b16 %v2824
    %v2980 = vunpack.c.h.b16 %v2824
    %v2981 = vunpack.c.l.b16 %v2825
    %v2982 = vunpack.c.h.b16 %v2825
    %v2983 = vunpack.c.l.b16 %v2826
    %v2984 = vunpack.c.h.b16 %v2826
    %v2985 = vunpack.c.l.b16 %v2827
    %v2986 = vunpack.c.h.b16 %v2827
    %v2987 = vunpack.c.l.b16 %v2828
    %v2988 = vunpack.c.h.b16 %v2828
    %v2989 = vunpack.c.l.b16 %v2829
    %v2990 = vunpack.c.h.b16 %v2829
    %v2991 = vunpack.c.l.b16 %v2830
    %v2992 = vunpack.c.h.b16 %v2830
    %v2993 = vunpack.c.l.b16 %v2831
    %v2994 = vunpack.c.h.b16 %v2831
    %v2995 = vunpack.c.l.b16 %v2832
    %v2996 = vunpack.c.h.b16 %v2832
    %v2997 = vunpack.c.l.b16 %v2833
    %v2998 = vunpack.c.h.b16 %v2833
    %v2999 = vunpack.c.l.b16 %v2834
    %v3000 = vunpack.c.h.b16 %v2834
    %v3001 = vunpack.c.l.b16 %v2835
    %v3002 = vunpack.c.h.b16 %v2835
    %v3003 = vunpack.c.l.b16 %v2836
    %v3004 = vunpack.c.h.b16 %v2836
    %v3005 = vunpack.c.l.b16 %v2837
    %v3006 = vunpack.c.h.b16 %v2837
    %v3007 = vunpack.c.l.b16 %v2838
    %v3008 = vunpack.c.h.b16 %v2838
    %v3009 = vunpack.c.l.b16 %v2839
    %v3010 = vunpack.c.h.b16 %v2839
    %v3011 = vunpack.c.l.b16 %v2840
    %v3012 = vunpack.c.h.b16 %v2840
    %v3013 = vunpack.c.l.b16 %v2841
    %v3014 = vunpack.c.h.b16 %v2841
    %v3015 = vunpack.c.l.b16 %v2842
    %v3016 = vunpack.c.h.b16 %v2842
    %v3017 = vunpack.c.l.b16 %v2843
    %v3018 = vunpack.c.h.b16 %v2843
    %v3019 = vunpack.c.l.b16 %v2844
    %v3020 = vunpack.c.h.b16 %v2844
    %v3021 = vunpack.c.l.b16 %v2845
    %v3022 = vunpack.c.h.b16 %v2845
    %v3023 = vunpack.c.l.b16 %v2846
    %v3024 = vunpack.c.h.b16 %v2846
    %v3025 = vunpack.c.l.b16 %v2847
    %v3026 = vunpack.c.h.b16 %v2847
    %v3027 = vunpack.c.l.b16 %v2848
    %v3028 = vunpack.c.h.b16 %v2848
    %v3029 = vunpack.c.l.b16 %v2849
    %v3030 = vunpack.c.h.b16 %v2849
    %v3031 = vpack.c.b16 %v2983, %v2967
    %v3032 = vpack.c.b16 %v2984, %v2968
    %v3033 = vpack.c.b16 %v2985, %v2969
    %v3034 = vpack.c.b16 %v2986, %v2970
    %v3035 = vpack.c.b16 %v2987, %v2971
    %v3036 = vpack.c.b16 %v2988, %v2972
    %v3037 = vpack.c.b16 %v2989, %v2973
    %v3038 = vpack.c.b16 %v2990, %v2974
    %v3039 = vpack.c.b16 %v2991, %v2975
    %v3040 = vpack.c.b16 %v2992, %v2976
    %v3041 = vpack.c.b16 %v2993, %v2977
    %v3042 = vpack.c.b16 %v2994, %v2978
    %v3043 = vpack.c.b16 %v2995, %v2979
    %v3044 = vpack.c.b16 %v2996, %v2980
    %v3045 = vpack.c.b16 %v2997, %v2981
    %v3046 = vpack.c.b16 %v2998, %v2982
    %v3047 = vpack.c.b16 %v3015, %v2999
    %v3048 = vpack.c.b16 %v3016, %v3000
    %v3049 = vpack.c.b16 %v3017, %v3001
    %v3050 = vpack.c.b16 %v3018, %v3002
    %v3051 = vpack.c.b16 %v3019, %v3003
    %v3052 = vpack.c.b16 %v3020, %v3004
    %v3053 = vpack.c.b16 %v3021, %v3005
    %v3054 = vpack.c.b16 %v3022, %v3006
    %v3055 = vpack.c.b16 %v3023, %v3007
    %v3056 = vpack.c.b16 %v3024, %v3008
    %v3057 = vpack.c.b16 %v3025, %v3009
    %v3058 = vpack.c.b16 %v3026, %v3010
    %v3059 = vpack.c.b16 %v3027, %v3011
    %v3060 = vpack.c.b16 %v3028, %v3012
    %v3061 = vpack.c.b16 %v3029, %v3013
    %v3062 = vpack.c.b16 %v3030, %v3014
    %v3096 = vsel %vm99, %v2816, 0
    %3098 = vmatprep.subr.bf16.mxu0 %v3032
    %3099 = vmatpush1.bf16.msra.mxu0 %v3031
    %3100 = vmatprep.subr.bf16.mxu0 %v3048
    %3101 = vmatpush1.bf16.msra.mxu0 %v3047
    %3102 = vmatprep.subr.bf16.mxu0 0
    %3103 = vmatpush1.bf16.msra.mxu0 0
    %3104 = vmatprep.subr.bf16.mxu0 0
    %3105 = vmatpush1.bf16.msra.mxu0 0
    %3106 = vmatprep.subr.bf16.mxu0 0
    %3107 = vmatpush1.bf16.msra.mxu0 0
    %3108 = vmatprep.subr.bf16.mxu0 0
    %3109 = vmatpush1.bf16.msra.mxu0 0
    %3110 = vmatprep.subr.bf16.mxu0 0
    %3111 = vmatpush1.bf16.msra.mxu0 0
    %3112 = vmatprep.subr.bf16.mxu0 0
    %3113 = vmatpush1.bf16.msra.mxu0 0
    %3114 = vmatprep.subr.bf16.mxu0 0
    %3115 = vmatpush1.bf16.msra.mxu0 0
    %3116 = vmatprep.subr.bf16.mxu0 0
    %3117 = vmatpush1.bf16.msra.mxu0 0
    %3118 = vmatprep.subr.bf16.mxu0 0
    %3119 = vmatpush1.bf16.msra.mxu0 0
    %3120 = vmatprep.subr.bf16.mxu0 0
    %3121 = vmatpush1.bf16.msra.mxu0 0
    %3122 = vmatprep.subr.bf16.mxu0 0
    %3123 = vmatpush1.bf16.msra.mxu0 0
    %3124 = vmatprep.subr.bf16.mxu0 0
    %3125 = vmatpush1.bf16.msra.mxu0 0
    %3126 = vmatprep.subr.bf16.mxu0 0
    %3127 = vmatpush1.bf16.msra.mxu0 0
    %3128 = vmatprep.subr.bf16.mxu0 0
    %3129 = vmatpush1.bf16.msra.mxu0 0
    %3130 = vmatprep.mubr.bf16.mxu0 0
    %3131 = vmatmul.mubr.bf16.gmra.mrb[0].mxu0 %v3096
    %v3132 = vpop.f32.mrb[0].mxu0
    %v3133 = vadd.f32 %v2858, %v3132
    %v3134 = vpop.f32.mrb[0].mxu0
    %v3135 = vadd.f32 %v2862, %v3134
    %v3136 = vpop.f32.mrb[0].mxu0
    %v3137 = vadd.f32 %v2858, %v3136
    %v3138 = vpop.f32.mrb[0].mxu0
    %v3139 = vadd.f32 %v2862, %v3138
    %3140 = vdwg.mxu0
    %3141 = vmatprep.subr.bf16.mxu0 %v3034
    %3142 = vmatpush1.bf16.msra.mxu0 %v3033
    %3143 = vmatprep.subr.bf16.mxu0 %v3050
    %3144 = vmatpush1.bf16.msra.mxu0 %v3049
    %3145 = vmatprep.subr.bf16.mxu0 0
    %3146 = vmatpush1.bf16.msra.mxu0 0
    %3147 = vmatprep.subr.bf16.mxu0 0
    %3148 = vmatpush1.bf16.msra.mxu0 0
    %3149 = vmatprep.subr.bf16.mxu0 0
    %3150 = vmatpush1.bf16.msra.mxu0 0
    %3151 = vmatprep.subr.bf16.mxu0 0
    %3152 = vmatpush1.bf16.msra.mxu0 0
    %3153 = vmatprep.subr.bf16.mxu0 0
    %3154 = vmatpush1.bf16.msra.mxu0 0
    %3155 = vmatprep.subr.bf16.mxu0 0
    %3156 = vmatpush1.bf16.msra.mxu0 0
    %3157 = vmatprep.subr.bf16.mxu0 0
    %3158 = vmatpush1.bf16.msra.mxu0 0
    %3159 = vmatprep.subr.bf16.mxu0 0
    %3160 = vmatpush1.bf16.msra.mxu0 0
    %3161 = vmatprep.subr.bf16.mxu0 0
    %3162 = vmatpush1.bf16.msra.mxu0 0
    %3163 = vmatprep.subr.bf16.mxu0 0
    %3164 = vmatpush1.bf16.msra.mxu0 0
    %3165 = vmatprep.subr.bf16.mxu0 0
    %3166 = vmatpush1.bf16.msra.mxu0 0
    %3167 = vmatprep.subr.bf16.mxu0 0
    %3168 = vmatpush1.bf16.msra.mxu0 0
    %3169 = vmatprep.subr.bf16.mxu0 0
    %3170 = vmatpush1.bf16.msra.mxu0 0
    %3171 = vmatprep.subr.bf16.mxu0 0
    %3172 = vmatpush1.bf16.msra.mxu0 0
    %3173 = vmatprep.mubr.bf16.mxu0 0
    %3174 = vmatmul.mubr.bf16.gmra.mrb[0].mxu0 %v3096
    %v3175 = vpop.f32.mrb[0].mxu0
    %v3176 = vadd.f32 %v2866, %v3175
    %v3177 = vpop.f32.mrb[0].mxu0
    %v3178 = vadd.f32 %v2870, %v3177
    %v3179 = vpop.f32.mrb[0].mxu0
    %v3180 = vadd.f32 %v2866, %v3179
    %v3181 = vpop.f32.mrb[0].mxu0
    %v3182 = vadd.f32 %v2870, %v3181
    %3183 = vdwg.mxu0
    %3184 = vmatprep.subr.bf16.mxu0 %v3036
    %3185 = vmatpush1.bf16.msra.mxu0 %v3035
    %3186 = vmatprep.subr.bf16.mxu0 %v3052
    %3187 = vmatpush1.bf16.msra.mxu0 %v3051
    %3188 = vmatprep.subr.bf16.mxu0 0
    %3189 = vmatpush1.bf16.msra.mxu0 0
    %3190 = vmatprep.subr.bf16.mxu0 0
    %3191 = vmatpush1.bf16.msra.mxu0 0
    %3192 = vmatprep.subr.bf16.mxu0 0
    %3193 = vmatpush1.bf16.msra.mxu0 0
    %3194 = vmatprep.subr.bf16.mxu0 0
    %3195 = vmatpush1.bf16.msra.mxu0 0
    %3196 = vmatprep.subr.bf16.mxu0 0
    %3197 = vmatpush1.bf16.msra.mxu0 0
    %3198 = vmatprep.subr.bf16.mxu0 0
    %3199 = vmatpush1.bf16.msra.mxu0 0
    %3200 = vmatprep.subr.bf16.mxu0 0
    %3201 = vmatpush1.bf16.msra.mxu0 0
    %3202 = vmatprep.subr.bf16.mxu0 0
    %3203 = vmatpush1.bf16.msra.mxu0 0
    %3204 = vmatprep.subr.bf16.mxu0 0
    %3205 = vmatpush1.bf16.msra.mxu0 0
    %3206 = vmatprep.subr.bf16.mxu0 0
    %3207 = vmatpush1.bf16.msra.mxu0 0
    %3208 = vmatprep.subr.bf16.mxu0 0
    %3209 = vmatpush1.bf16.msra.mxu0 0
    %3210 = vmatprep.subr.bf16.mxu0 0
    %3211 = vmatpush1.bf16.msra.mxu0 0
    %3212 = vmatprep.subr.bf16.mxu0 0
    %3213 = vmatpush1.bf16.msra.mxu0 0
    %3214 = vmatprep.subr.bf16.mxu0 0
    %3215 = vmatpush1.bf16.msra.mxu0 0
    %3216 = vmatprep.mubr.bf16.mxu0 0
    %3217 = vmatmul.mubr.bf16.gmra.mrb[0].mxu0 %v3096
    %v3218 = vpop.f32.mrb[0].mxu0
    %v3219 = vadd.f32 %v2874, %v3218
    %v3220 = vpop.f32.mrb[0].mxu0
    %v3221 = vadd.f32 %v2878, %v3220
    %v3222 = vpop.f32.mrb[0].mxu0
    %v3223 = vadd.f32 %v2874, %v3222
    %v3224 = vpop.f32.mrb[0].mxu0
    %v3225 = vadd.f32 %v2878, %v3224
    %3226 = vdwg.mxu0
    %3227 = vmatprep.subr.bf16.mxu0 %v3038
    %3228 = vmatpush1.bf16.msra.mxu0 %v3037
    %3229 = vmatprep.subr.bf16.mxu0 %v3054
    %3230 = vmatpush1.bf16.msra.mxu0 %v3053
    %3231 = vmatprep.subr.bf16.mxu0 0
    %3232 = vmatpush1.bf16.msra.mxu0 0
    %3233 = vmatprep.subr.bf16.mxu0 0
    %3234 = vmatpush1.bf16.msra.mxu0 0
    %3235 = vmatprep.subr.bf16.mxu0 0
    %3236 = vmatpush1.bf16.msra.mxu0 0
    %3237 = vmatprep.subr.bf16.mxu0 0
    %3238 = vmatpush1.bf16.msra.mxu0 0
    %3239 = vmatprep.subr.bf16.mxu0 0
    %3240 = vmatpush1.bf16.msra.mxu0 0
    %3241 = vmatprep.subr.bf16.mxu0 0
    %3242 = vmatpush1.bf16.msra.mxu0 0
    %3243 = vmatprep.subr.bf16.mxu0 0
    %3244 = vmatpush1.bf16.msra.mxu0 0
    %3245 = vmatprep.subr.bf16.mxu0 0
    %3246 = vmatpush1.bf16.msra.mxu0 0
    %3247 = vmatprep.subr.bf16.mxu0 0
    %3248 = vmatpush1.bf16.msra.mxu0 0
    %3249 = vmatprep.subr.bf16.mxu0 0
    %3250 = vmatpush1.bf16.msra.mxu0 0
    %3251 = vmatprep.subr.bf16.mxu0 0
    %3252 = vmatpush1.bf16.msra.mxu0 0
    %3253 = vmatprep.subr.bf16.mxu0 0
    %3254 = vmatpush1.bf16.msra.mxu0 0
    %3255 = vmatprep.subr.bf16.mxu0 0
    %3256 = vmatpush1.bf16.msra.mxu0 0
    %3257 = vmatprep.subr.bf16.mxu0 0
    %3258 = vmatpush1.bf16.msra.mxu0 0
    %3259 = vmatprep.mubr.bf16.mxu0 0
    %3260 = vmatmul.mubr.bf16.gmra.mrb[0].mxu0 %v3096
    %v3261 = vpop.f32.mrb[0].mxu0
    %v3262 = vadd.f32 %v2882, %v3261
    %v3263 = vpop.f32.mrb[0].mxu0
    %v3264 = vadd.f32 %v2886, %v3263
    %v3265 = vpop.f32.mrb[0].mxu0
    %v3266 = vadd.f32 %v2882, %v3265
    %v3267 = vpop.f32.mrb[0].mxu0
    %v3268 = vadd.f32 %v2886, %v3267
    %3269 = vdwg.mxu0
    %3270 = vmatprep.subr.bf16.mxu0 %v3040
    %3271 = vmatpush1.bf16.msra.mxu0 %v3039
    %3272 = vmatprep.subr.bf16.mxu0 %v3056
    %3273 = vmatpush1.bf16.msra.mxu0 %v3055
    %3274 = vmatprep.subr.bf16.mxu0 0
    %3275 = vmatpush1.bf16.msra.mxu0 0
    %3276 = vmatprep.subr.bf16.mxu0 0
    %3277 = vmatpush1.bf16.msra.mxu0 0
    %3278 = vmatprep.subr.bf16.mxu0 0
    %3279 = vmatpush1.bf16.msra.mxu0 0
    %3280 = vmatprep.subr.bf16.mxu0 0
    %3281 = vmatpush1.bf16.msra.mxu0 0
    %3282 = vmatprep.subr.bf16.mxu0 0
    %3283 = vmatpush1.bf16.msra.mxu0 0
    %3284 = vmatprep.subr.bf16.mxu0 0
    %3285 = vmatpush1.bf16.msra.mxu0 0
    %3286 = vmatprep.subr.bf16.mxu0 0
    %3287 = vmatpush1.bf16.msra.mxu0 0
    %3288 = vmatprep.subr.bf16.mxu0 0
    %3289 = vmatpush1.bf16.msra.mxu0 0
    %3290 = vmatprep.subr.bf16.mxu0 0
    %3291 = vmatpush1.bf16.msra.mxu0 0
    %3292 = vmatprep.subr.bf16.mxu0 0
    %3293 = vmatpush1.bf16.msra.mxu0 0
    %3294 = vmatprep.subr.bf16.mxu0 0
    %3295 = vmatpush1.bf16.msra.mxu0 0
    %3296 = vmatprep.subr.bf16.mxu0 0
    %3297 = vmatpush1.bf16.msra.mxu0 0
    %3298 = vmatprep.subr.bf16.mxu0 0
    %3299 = vmatpush1.bf16.msra.mxu0 0
    %3300 = vmatprep.subr.bf16.mxu0 0
    %3301 = vmatpush1.bf16.msra.mxu0 0
    %3302 = vmatprep.mubr.bf16.mxu0 0
    %3303 = vmatmul.mubr.bf16.gmra.mrb[0].mxu0 %v3096
    %v3304 = vpop.f32.mrb[0].mxu0
    %v3305 = vadd.f32 %v2890, %v3304
    %v3306 = vpop.f32.mrb[0].mxu0
    %v3307 = vadd.f32 %v2894, %v3306
    %v3308 = vpop.f32.mrb[0].mxu0
    %v3309 = vadd.f32 %v2890, %v3308
    %v3310 = vpop.f32.mrb[0].mxu0
    %v3311 = vadd.f32 %v2894, %v3310
    %3312 = vdwg.mxu0
    %3313 = vmatprep.subr.bf16.mxu0 %v3042
    %3314 = vmatpush1.bf16.msra.mxu0 %v3041
    %3315 = vmatprep.subr.bf16.mxu0 %v3058
    %3316 = vmatpush1.bf16.msra.mxu0 %v3057
    %3317 = vmatprep.subr.bf16.mxu0 0
    %3318 = vmatpush1.bf16.msra.mxu0 0
    %3319 = vmatprep.subr.bf16.mxu0 0
    %3320 = vmatpush1.bf16.msra.mxu0 0
    %3321 = vmatprep.subr.bf16.mxu0 0
    %3322 = vmatpush1.bf16.msra.mxu0 0
    %3323 = vmatprep.subr.bf16.mxu0 0
    %3324 = vmatpush1.bf16.msra.mxu0 0
    %3325 = vmatprep.subr.bf16.mxu0 0
    %3326 = vmatpush1.bf16.msra.mxu0 0
    %3327 = vmatprep.subr.bf16.mxu0 0
    %3328 = vmatpush1.bf16.msra.mxu0 0
    %3329 = vmatprep.subr.bf16.mxu0 0
    %3330 = vmatpush1.bf16.msra.mxu0 0
    %3331 = vmatprep.subr.bf16.mxu0 0
    %3332 = vmatpush1.bf16.msra.mxu0 0
    %3333 = vmatprep.subr.bf16.mxu0 0
    %3334 = vmatpush1.bf16.msra.mxu0 0
    %3335 = vmatprep.subr.bf16.mxu0 0
    %3336 = vmatpush1.bf16.msra.mxu0 0
    %3337 = vmatprep.subr.bf16.mxu0 0
    %3338 = vmatpush1.bf16.msra.mxu0 0
    %3339 = vmatprep.subr.bf16.mxu0 0
    %3340 = vmatpush1.bf16.msra.mxu0 0
    %3341 = vmatprep.subr.bf16.mxu0 0
    %3342 = vmatpush1.bf16.msra.mxu0 0
    %3343 = vmatprep.subr.bf16.mxu0 0
    %3344 = vmatpush1.bf16.msra.mxu0 0
    %3345 = vmatprep.mubr.bf16.mxu0 0
    %3346 = vmatmul.mubr.bf16.gmra.mrb[0].mxu0 %v3096
    %v3347 = vpop.f32.mrb[0].mxu0
    %v3348 = vadd.f32 %v2898, %v3347
    %v3349 = vpop.f32.mrb[0].mxu0
    %v3350 = vadd.f32 %v2902, %v3349
    %v3351 = vpop.f32.mrb[0].mxu0
    %v3352 = vadd.f32 %v2898, %v3351
    %v3353 = vpop.f32.mrb[0].mxu0
    %v3354 = vadd.f32 %v2902, %v3353
    %3355 = vdwg.mxu0
    %3356 = vmatprep.subr.bf16.mxu0 %v3044
    %3357 = vmatpush1.bf16.msra.mxu0 %v3043
    %3358 = vmatprep.subr.bf16.mxu0 %v3060
    %3359 = vmatpush1.bf16.msra.mxu0 %v3059
    %3360 = vmatprep.subr.bf16.mxu0 0
    %3361 = vmatpush1.bf16.msra.mxu0 0
    %3362 = vmatprep.subr.bf16.mxu0 0
    %3363 = vmatpush1.bf16.msra.mxu0 0
    %3364 = vmatprep.subr.bf16.mxu0 0
    %3365 = vmatpush1.bf16.msra.mxu0 0
    %3366 = vmatprep.subr.bf16.mxu0 0
    %3367 = vmatpush1.bf16.msra.mxu0 0
    %3368 = vmatprep.subr.bf16.mxu0 0
    %3369 = vmatpush1.bf16.msra.mxu0 0
    %3370 = vmatprep.subr.bf16.mxu0 0
    %3371 = vmatpush1.bf16.msra.mxu0 0
    %3372 = vmatprep.subr.bf16.mxu0 0
    %3373 = vmatpush1.bf16.msra.mxu0 0
    %3374 = vmatprep.subr.bf16.mxu0 0
    %3375 = vmatpush1.bf16.msra.mxu0 0
    %3376 = vmatprep.subr.bf16.mxu0 0
    %3377 = vmatpush1.bf16.msra.mxu0 0
    %3378 = vmatprep.subr.bf16.mxu0 0
    %3379 = vmatpush1.bf16.msra.mxu0 0
    %3380 = vmatprep.subr.bf16.mxu0 0
    %3381 = vmatpush1.bf16.msra.mxu0 0
    %3382 = vmatprep.subr.bf16.mxu0 0
    %3383 = vmatpush1.bf16.msra.mxu0 0
    %3384 = vmatprep.subr.bf16.mxu0 0
    %3385 = vmatpush1.bf16.msra.mxu0 0
    %3386 = vmatprep.subr.bf16.mxu0 0
    %3387 = vmatpush1.bf16.msra.mxu0 0
    %3388 = vmatprep.mubr.bf16.mxu0 0
    %3389 = vmatmul.mubr.bf16.gmra.mrb[0].mxu0 %v3096
    %v3390 = vpop.f32.mrb[0].mxu0
    %v3391 = vadd.f32 %v2906, %v3390
    %v3392 = vpop.f32.mrb[0].mxu0
    %v3393 = vadd.f32 %v2910, %v3392
    %v3394 = vpop.f32.mrb[0].mxu0
    %v3395 = vadd.f32 %v2906, %v3394
    %v3396 = vpop.f32.mrb[0].mxu0
    %v3397 = vadd.f32 %v2910, %v3396
    %3398 = vdwg.mxu0
    %3399 = vmatprep.subr.bf16.mxu0 %v3046
    %3400 = vmatpush1.bf16.msra.mxu0 %v3045
    %3401 = vmatprep.subr.bf16.mxu0 %v3062
    %3402 = vmatpush1.bf16.msra.mxu0 %v3061
    %3403 = vmatprep.subr.bf16.mxu0 0
    %3404 = vmatpush1.bf16.msra.mxu0 0
    %3405 = vmatprep.subr.bf16.mxu0 0
    %3406 = vmatpush1.bf16.msra.mxu0 0
    %3407 = vmatprep.subr.bf16.mxu0 0
    %3408 = vmatpush1.bf16.msra.mxu0 0
    %3409 = vmatprep.subr.bf16.mxu0 0
    %3410 = vmatpush1.bf16.msra.mxu0 0
    %3411 = vmatprep.subr.bf16.mxu0 0
    %3412 = vmatpush1.bf16.msra.mxu0 0
    %3413 = vmatprep.subr.bf16.mxu0 0
    %3414 = vmatpush1.bf16.msra.mxu0 0
    %3415 = vmatprep.subr.bf16.mxu0 0
    %3416 = vmatpush1.bf16.msra.mxu0 0
    %3417 = vmatprep.subr.bf16.mxu0 0
    %3418 = vmatpush1.bf16.msra.mxu0 0
    %3419 = vmatprep.subr.bf16.mxu0 0
    %3420 = vmatpush1.bf16.msra.mxu0 0
    %3421 = vmatprep.subr.bf16.mxu0 0
    %3422 = vmatpush1.bf16.msra.mxu0 0
    %3423 = vmatprep.subr.bf16.mxu0 0
    %3424 = vmatpush1.bf16.msra.mxu0 0
    %3425 = vmatprep.subr.bf16.mxu0 0
    %3426 = vmatpush1.bf16.msra.mxu0 0
    %3427 = vmatprep.subr.bf16.mxu0 0
    %3428 = vmatpush1.bf16.msra.mxu0 0
    %3429 = vmatprep.subr.bf16.mxu0 0
    %3430 = vmatpush1.bf16.msra.mxu0 0
    %3431 = vmatprep.mubr.bf16.mxu0 0
    %3432 = vmatmul.mubr.bf16.gmra.mrb[0].mxu0 %v3096
    %v3433 = vpop.f32.mrb[0].mxu0
    %v3434 = vadd.f32 %v2914, %v3433
    %v3435 = vpop.f32.mrb[0].mxu0
    %v3436 = vadd.f32 %v2918, %v3435
    %v3437 = vpop.f32.mrb[0].mxu0
    %v3438 = vadd.f32 %v2914, %v3437
    %v3439 = vpop.f32.mrb[0].mxu0
    %v3440 = vadd.f32 %v2918, %v3439
    %3441 = vdwg.mxu0
    %v3442 = vmax.f32 %v3133, 0.0
    %v3443 = vmax.f32 %v3135, 0.0
    %v3444 = vmax.f32 %v3176, 0.0
    %v3445 = vmax.f32 %v3178, 0.0
    %v3446 = vmax.f32 %v3219, 0.0
    %v3447 = vmax.f32 %v3221, 0.0
    %v3448 = vmax.f32 %v3262, 0.0
    %v3449 = vmax.f32 %v3264, 0.0
    %v3450 = vmax.f32 %v3305, 0.0
    %v3451 = vmax.f32 %v3307, 0.0
    %v3452 = vmax.f32 %v3348, 0.0
    %v3453 = vmax.f32 %v3350, 0.0
    %v3454 = vmax.f32 %v3391, 0.0
    %v3455 = vmax.f32 %v3393, 0.0
    %v3456 = vmax.f32 %v3434, 0.0
    %v3457 = vmax.f32 %v3436, 0.0
    %v3458 = vmax.f32 %v3137, 0.0
    %v3459 = vmax.f32 %v3139, 0.0
    %v3460 = vmax.f32 %v3180, 0.0
    %v3461 = vmax.f32 %v3182, 0.0
    %v3462 = vmax.f32 %v3223, 0.0
    %v3463 = vmax.f32 %v3225, 0.0
    %v3464 = vmax.f32 %v3266, 0.0
    %v3465 = vmax.f32 %v3268, 0.0
    %v3466 = vmax.f32 %v3309, 0.0
    %v3467 = vmax.f32 %v3311, 0.0
    %v3468 = vmax.f32 %v3352, 0.0
    %v3469 = vmax.f32 %v3354, 0.0
    %v3470 = vmax.f32 %v3395, 0.0
    %v3471 = vmax.f32 %v3397, 0.0
    %v3472 = vmax.f32 %v3438, 0.0
    %v3473 = vmax.f32 %v3440, 0.0
    %v3474 = vpack.c.bf16 %v3458, %v3442
    %v3475 = vpack.c.bf16 %v3459, %v3443
    %v3476 = vpack.c.bf16 %v3460, %v3444
    %v3477 = vpack.c.bf16 %v3461, %v3445
    %v3478 = vpack.c.bf16 %v3462, %v3446
    %v3479 = vpack.c.bf16 %v3463, %v3447
    %v3480 = vpack.c.bf16 %v3464, %v3448
    %v3481 = vpack.c.bf16 %v3465, %v3449
    %v3482 = vpack.c.bf16 %v3466, %v3450
    %v3483 = vpack.c.bf16 %v3467, %v3451
    %v3484 = vpack.c.bf16 %v3468, %v3452
    %v3485 = vpack.c.bf16 %v3469, %v3453
    %v3486 = vpack.c.bf16 %v3470, %v3454
    %v3487 = vpack.c.bf16 %v3471, %v3455
    %v3488 = vpack.c.bf16 %v3472, %v3456
    %v3489 = vpack.c.bf16 %v3473, %v3457
    %s3490 = scalar_lea.vmem %s10, 1024
    %v3491 = vld [vmem:[%s3490] sm:$0xf]
    %v3492 = vld [vmem:[%s3490 + $0x4] sm:$0xf]
    %v3493 = vld [vmem:[%s3490 + $0x8] sm:$0xf]
    %v3494 = vld [vmem:[%s3490 + $0xc] sm:$0xf]
    %v3495 = vld [vmem:[%s3490 + $0x10] sm:$0xf]
    %v3496 = vld [vmem:[%s3490 + $0x14] sm:$0xf]
    %v3497 = vld [vmem:[%s3490 + $0x18] sm:$0xf]
    %v3498 = vld [vmem:[%s3490 + $0x1c] sm:$0xf]
    %v3499 = vld [vmem:[%s3490 + $0x20] sm:$0xf]
    %v3500 = vld [vmem:[%s3490 + $0x24] sm:$0xf]
    %v3501 = vld [vmem:[%s3490 + $0x28] sm:$0xf]
    %v3502 = vld [vmem:[%s3490 + $0x2c] sm:$0xf]
    %v3503 = vld [vmem:[%s3490 + $0x30] sm:$0xf]
    %v3504 = vld [vmem:[%s3490 + $0x34] sm:$0xf]
    %v3505 = vld [vmem:[%s3490 + $0x38] sm:$0xf]
    %v3506 = vld [vmem:[%s3490 + $0x3c] sm:$0xf]
    %v3507 = vld [vmem:[%s3490 + $0x40] sm:$0xf]
    %v3508 = vld [vmem:[%s3490 + $0x44] sm:$0xf]
    %v3509 = vld [vmem:[%s3490 + $0x48] sm:$0xf]
    %v3510 = vld [vmem:[%s3490 + $0x4c] sm:$0xf]
    %v3511 = vld [vmem:[%s3490 + $0x50] sm:$0xf]
    %v3512 = vld [vmem:[%s3490 + $0x54] sm:$0xf]
    %v3513 = vld [vmem:[%s3490 + $0x58] sm:$0xf]
    %v3514 = vld [vmem:[%s3490 + $0x5c] sm:$0xf]
    %v3515 = vld [vmem:[%s3490 + $0x60] sm:$0xf]
    %v3516 = vld [vmem:[%s3490 + $0x64] sm:$0xf]
    %v3517 = vld [vmem:[%s3490 + $0x68] sm:$0xf]
    %v3518 = vld [vmem:[%s3490 + $0x6c] sm:$0xf]
    %v3519 = vld [vmem:[%s3490 + $0x70] sm:$0xf]
    %v3520 = vld [vmem:[%s3490 + $0x74] sm:$0xf]
    %v3521 = vld [vmem:[%s3490 + $0x78] sm:$0xf]
    %v3522 = vld [vmem:[%s3490 + $0x7c] sm:$0xf]
    %v3523 = vld [vmem:[%s3490 + $0x80] sm:$0xf]
    %v3524 = vld [vmem:[%s3490 + $0x84] sm:$0xf]
    %v3525 = vld [vmem:[%s3490 + $0x88] sm:$0xf]
    %v3526 = vld [vmem:[%s3490 + $0x8c] sm:$0xf]
    %v3527 = vld [vmem:[%s3490 + $0x90] sm:$0xf]
    %v3528 = vld [vmem:[%s3490 + $0x94] sm:$0xf]
    %v3529 = vld [vmem:[%s3490 + $0x98] sm:$0xf]
    %v3530 = vld [vmem:[%s3490 + $0x9c] sm:$0xf]
    %v3531 = vld [vmem:[%s3490 + $0xa0] sm:$0xf]
    %v3532 = vld [vmem:[%s3490 + $0xa4] sm:$0xf]
    %v3533 = vld [vmem:[%s3490 + $0xa8] sm:$0xf]
    %v3534 = vld [vmem:[%s3490 + $0xac] sm:$0xf]
    %v3535 = vld [vmem:[%s3490 + $0xb0] sm:$0xf]
    %v3536 = vld [vmem:[%s3490 + $0xb4] sm:$0xf]
    %v3537 = vld [vmem:[%s3490 + $0xb8] sm:$0xf]
    %v3538 = vld [vmem:[%s3490 + $0xbc] sm:$0xf]
    %v3539 = vld [vmem:[%s3490 + $0xc0] sm:$0xf]
    %v3540 = vld [vmem:[%s3490 + $0xc4] sm:$0xf]
    %v3541 = vld [vmem:[%s3490 + $0xc8] sm:$0xf]
    %v3542 = vld [vmem:[%s3490 + $0xcc] sm:$0xf]
    %v3543 = vld [vmem:[%s3490 + $0xd0] sm:$0xf]
    %v3544 = vld [vmem:[%s3490 + $0xd4] sm:$0xf]
    %v3545 = vld [vmem:[%s3490 + $0xd8] sm:$0xf]
    %v3546 = vld [vmem:[%s3490 + $0xdc] sm:$0xf]
    %v3547 = vld [vmem:[%s3490 + $0xe0] sm:$0xf]
    %v3548 = vld [vmem:[%s3490 + $0xe4] sm:$0xf]
    %v3549 = vld [vmem:[%s3490 + $0xe8] sm:$0xf]
    %v3550 = vld [vmem:[%s3490 + $0xec] sm:$0xf]
    %v3551 = vld [vmem:[%s3490 + $0xf0] sm:$0xf]
    %v3552 = vld [vmem:[%s3490 + $0xf4] sm:$0xf]
    %v3553 = vld [vmem:[%s3490 + $0xf8] sm:$0xf]
    %v3554 = vld [vmem:[%s3490 + $0xfc] sm:$0xf]
    %v3555 = vld [vmem:[%s3490 + $0x100] sm:$0xf]
    %v3556 = vld [vmem:[%s3490 + $0x104] sm:$0xf]
    %v3557 = vld [vmem:[%s3490 + $0x108] sm:$0xf]
    %v3558 = vld [vmem:[%s3490 + $0x10c] sm:$0xf]
    %v3559 = vld [vmem:[%s3490 + $0x110] sm:$0xf]
    %v3560 = vld [vmem:[%s3490 + $0x114] sm:$0xf]
    %v3561 = vld [vmem:[%s3490 + $0x118] sm:$0xf]
    %v3562 = vld [vmem:[%s3490 + $0x11c] sm:$0xf]
    %v3563 = vld [vmem:[%s3490 + $0x120] sm:$0xf]
    %v3564 = vld [vmem:[%s3490 + $0x124] sm:$0xf]
    %v3565 = vld [vmem:[%s3490 + $0x128] sm:$0xf]
    %v3566 = vld [vmem:[%s3490 + $0x12c] sm:$0xf]
    %v3567 = vld [vmem:[%s3490 + $0x130] sm:$0xf]
    %v3568 = vld [vmem:[%s3490 + $0x134] sm:$0xf]
    %v3569 = vld [vmem:[%s3490 + $0x138] sm:$0xf]
    %v3570 = vld [vmem:[%s3490 + $0x13c] sm:$0xf]
    %v3571 = vld [vmem:[%s3490 + $0x140] sm:$0xf]
    %v3572 = vld [vmem:[%s3490 + $0x144] sm:$0xf]
    %v3573 = vld [vmem:[%s3490 + $0x148] sm:$0xf]
    %v3574 = vld [vmem:[%s3490 + $0x14c] sm:$0xf]
    %v3575 = vld [vmem:[%s3490 + $0x150] sm:$0xf]
    %v3576 = vld [vmem:[%s3490 + $0x154] sm:$0xf]
    %v3577 = vld [vmem:[%s3490 + $0x158] sm:$0xf]
    %v3578 = vld [vmem:[%s3490 + $0x15c] sm:$0xf]
    %v3579 = vld [vmem:[%s3490 + $0x160] sm:$0xf]
    %v3580 = vld [vmem:[%s3490 + $0x164] sm:$0xf]
    %v3581 = vld [vmem:[%s3490 + $0x168] sm:$0xf]
    %v3582 = vld [vmem:[%s3490 + $0x16c] sm:$0xf]
    %v3583 = vld [vmem:[%s3490 + $0x170] sm:$0xf]
    %v3584 = vld [vmem:[%s3490 + $0x174] sm:$0xf]
    %v3585 = vld [vmem:[%s3490 + $0x178] sm:$0xf]
    %v3586 = vld [vmem:[%s3490 + $0x17c] sm:$0xf]
    %v3587 = vld [vmem:[%s3490 + $0x180] sm:$0xf]
    %v3588 = vld [vmem:[%s3490 + $0x184] sm:$0xf]
    %v3589 = vld [vmem:[%s3490 + $0x188] sm:$0xf]
    %v3590 = vld [vmem:[%s3490 + $0x18c] sm:$0xf]
    %v3591 = vld [vmem:[%s3490 + $0x190] sm:$0xf]
    %v3592 = vld [vmem:[%s3490 + $0x194] sm:$0xf]
    %v3593 = vld [vmem:[%s3490 + $0x198] sm:$0xf]
    %v3594 = vld [vmem:[%s3490 + $0x19c] sm:$0xf]
    %v3595 = vld [vmem:[%s3490 + $0x1a0] sm:$0xf]
    %v3596 = vld [vmem:[%s3490 + $0x1a4] sm:$0xf]
    %v3597 = vld [vmem:[%s3490 + $0x1a8] sm:$0xf]
    %v3598 = vld [vmem:[%s3490 + $0x1ac] sm:$0xf]
    %v3599 = vld [vmem:[%s3490 + $0x1b0] sm:$0xf]
    %v3600 = vld [vmem:[%s3490 + $0x1b4] sm:$0xf]
    %v3601 = vld [vmem:[%s3490 + $0x1b8] sm:$0xf]
    %v3602 = vld [vmem:[%s3490 + $0x1bc] sm:$0xf]
    %v3603 = vld [vmem:[%s3490 + $0x1c0] sm:$0xf]
    %v3604 = vld [vmem:[%s3490 + $0x1c4] sm:$0xf]
    %v3605 = vld [vmem:[%s3490 + $0x1c8] sm:$0xf]
    %v3606 = vld [vmem:[%s3490 + $0x1cc] sm:$0xf]
    %v3607 = vld [vmem:[%s3490 + $0x1d0] sm:$0xf]
    %v3608 = vld [vmem:[%s3490 + $0x1d4] sm:$0xf]
    %v3609 = vld [vmem:[%s3490 + $0x1d8] sm:$0xf]
    %v3610 = vld [vmem:[%s3490 + $0x1dc] sm:$0xf]
    %v3611 = vld [vmem:[%s3490 + $0x1e0] sm:$0xf]
    %v3612 = vld [vmem:[%s3490 + $0x1e4] sm:$0xf]
    %v3613 = vld [vmem:[%s3490 + $0x1e8] sm:$0xf]
    %v3614 = vld [vmem:[%s3490 + $0x1ec] sm:$0xf]
    %v3615 = vld [vmem:[%s3490 + $0x1f0] sm:$0xf]
    %v3616 = vld [vmem:[%s3490 + $0x1f4] sm:$0xf]
    %v3617 = vld [vmem:[%s3490 + $0x1f8] sm:$0xf]
    %v3618 = vld [vmem:[%s3490 + $0x1fc] sm:$0xf]
    %v3619 = vld [vmem:[%s3490 + $0x200] sm:$0xf]
    %v3620 = vld [vmem:[%s3490 + $0x204] sm:$0xf]
    %v3621 = vld [vmem:[%s3490 + $0x208] sm:$0xf]
    %v3622 = vld [vmem:[%s3490 + $0x20c] sm:$0xf]
    %v3623 = vld [vmem:[%s3490 + $0x210] sm:$0xf]
    %v3624 = vld [vmem:[%s3490 + $0x214] sm:$0xf]
    %v3625 = vld [vmem:[%s3490 + $0x218] sm:$0xf]
    %v3626 = vld [vmem:[%s3490 + $0x21c] sm:$0xf]
    %v3627 = vld [vmem:[%s3490 + $0x220] sm:$0xf]
    %v3628 = vld [vmem:[%s3490 + $0x224] sm:$0xf]
    %v3629 = vld [vmem:[%s3490 + $0x228] sm:$0xf]
    %v3630 = vld [vmem:[%s3490 + $0x22c] sm:$0xf]
    %v3631 = vld [vmem:[%s3490 + $0x230] sm:$0xf]
    %v3632 = vld [vmem:[%s3490 + $0x234] sm:$0xf]
    %v3633 = vld [vmem:[%s3490 + $0x238] sm:$0xf]
    %v3634 = vld [vmem:[%s3490 + $0x23c] sm:$0xf]
    %v3635 = vld [vmem:[%s3490 + $0x240] sm:$0xf]
    %v3636 = vld [vmem:[%s3490 + $0x244] sm:$0xf]
    %v3637 = vld [vmem:[%s3490 + $0x248] sm:$0xf]
    %v3638 = vld [vmem:[%s3490 + $0x24c] sm:$0xf]
    %v3639 = vld [vmem:[%s3490 + $0x250] sm:$0xf]
    %v3640 = vld [vmem:[%s3490 + $0x254] sm:$0xf]
    %v3641 = vld [vmem:[%s3490 + $0x258] sm:$0xf]
    %v3642 = vld [vmem:[%s3490 + $0x25c] sm:$0xf]
    %v3643 = vld [vmem:[%s3490 + $0x260] sm:$0xf]
    %v3644 = vld [vmem:[%s3490 + $0x264] sm:$0xf]
    %v3645 = vld [vmem:[%s3490 + $0x268] sm:$0xf]
    %v3646 = vld [vmem:[%s3490 + $0x26c] sm:$0xf]
    %v3647 = vld [vmem:[%s3490 + $0x270] sm:$0xf]
    %v3648 = vld [vmem:[%s3490 + $0x274] sm:$0xf]
    %v3649 = vld [vmem:[%s3490 + $0x278] sm:$0xf]
    %v3650 = vld [vmem:[%s3490 + $0x27c] sm:$0xf]
    %v3651 = vld [vmem:[%s3490 + $0x280] sm:$0xf]
    %v3652 = vld [vmem:[%s3490 + $0x284] sm:$0xf]
    %v3653 = vld [vmem:[%s3490 + $0x288] sm:$0xf]
    %v3654 = vld [vmem:[%s3490 + $0x28c] sm:$0xf]
    %v3655 = vld [vmem:[%s3490 + $0x290] sm:$0xf]
    %v3656 = vld [vmem:[%s3490 + $0x294] sm:$0xf]
    %v3657 = vld [vmem:[%s3490 + $0x298] sm:$0xf]
    %v3658 = vld [vmem:[%s3490 + $0x29c] sm:$0xf]
    %v3659 = vld [vmem:[%s3490 + $0x2a0] sm:$0xf]
    %v3660 = vld [vmem:[%s3490 + $0x2a4] sm:$0xf]
    %v3661 = vld [vmem:[%s3490 + $0x2a8] sm:$0xf]
    %v3662 = vld [vmem:[%s3490 + $0x2ac] sm:$0xf]
    %v3663 = vld [vmem:[%s3490 + $0x2b0] sm:$0xf]
    %v3664 = vld [vmem:[%s3490 + $0x2b4] sm:$0xf]
    %v3665 = vld [vmem:[%s3490 + $0x2b8] sm:$0xf]
    %v3666 = vld [vmem:[%s3490 + $0x2bc] sm:$0xf]
    %v3667 = vld [vmem:[%s3490 + $0x2c0] sm:$0xf]
    %v3668 = vld [vmem:[%s3490 + $0x2c4] sm:$0xf]
    %v3669 = vld [vmem:[%s3490 + $0x2c8] sm:$0xf]
    %v3670 = vld [vmem:[%s3490 + $0x2cc] sm:$0xf]
    %v3671 = vld [vmem:[%s3490 + $0x2d0] sm:$0xf]
    %v3672 = vld [vmem:[%s3490 + $0x2d4] sm:$0xf]
    %v3673 = vld [vmem:[%s3490 + $0x2d8] sm:$0xf]
    %v3674 = vld [vmem:[%s3490 + $0x2dc] sm:$0xf]
    %v3675 = vld [vmem:[%s3490 + $0x2e0] sm:$0xf]
    %v3676 = vld [vmem:[%s3490 + $0x2e4] sm:$0xf]
    %v3677 = vld [vmem:[%s3490 + $0x2e8] sm:$0xf]
    %v3678 = vld [vmem:[%s3490 + $0x2ec] sm:$0xf]
    %v3679 = vld [vmem:[%s3490 + $0x2f0] sm:$0xf]
    %v3680 = vld [vmem:[%s3490 + $0x2f4] sm:$0xf]
    %v3681 = vld [vmem:[%s3490 + $0x2f8] sm:$0xf]
    %v3682 = vld [vmem:[%s3490 + $0x2fc] sm:$0xf]
    %v3683 = vld [vmem:[%s3490 + $0x300] sm:$0xf]
    %v3684 = vld [vmem:[%s3490 + $0x304] sm:$0xf]
    %v3685 = vld [vmem:[%s3490 + $0x308] sm:$0xf]
    %v3686 = vld [vmem:[%s3490 + $0x30c] sm:$0xf]
    %v3687 = vld [vmem:[%s3490 + $0x310] sm:$0xf]
    %v3688 = vld [vmem:[%s3490 + $0x314] sm:$0xf]
    %v3689 = vld [vmem:[%s3490 + $0x318] sm:$0xf]
    %v3690 = vld [vmem:[%s3490 + $0x31c] sm:$0xf]
    %v3691 = vld [vmem:[%s3490 + $0x320] sm:$0xf]
    %v3692 = vld [vmem:[%s3490 + $0x324] sm:$0xf]
    %v3693 = vld [vmem:[%s3490 + $0x328] sm:$0xf]
    %v3694 = vld [vmem:[%s3490 + $0x32c] sm:$0xf]
    %v3695 = vld [vmem:[%s3490 + $0x330] sm:$0xf]
    %v3696 = vld [vmem:[%s3490 + $0x334] sm:$0xf]
    %v3697 = vld [vmem:[%s3490 + $0x338] sm:$0xf]
    %v3698 = vld [vmem:[%s3490 + $0x33c] sm:$0xf]
    %v3699 = vld [vmem:[%s3490 + $0x340] sm:$0xf]
    %v3700 = vld [vmem:[%s3490 + $0x344] sm:$0xf]
    %v3701 = vld [vmem:[%s3490 + $0x348] sm:$0xf]
    %v3702 = vld [vmem:[%s3490 + $0x34c] sm:$0xf]
    %v3703 = vld [vmem:[%s3490 + $0x350] sm:$0xf]
    %v3704 = vld [vmem:[%s3490 + $0x354] sm:$0xf]
    %v3705 = vld [vmem:[%s3490 + $0x358] sm:$0xf]
    %v3706 = vld [vmem:[%s3490 + $0x35c] sm:$0xf]
    %v3707 = vld [vmem:[%s3490 + $0x360] sm:$0xf]
    %v3708 = vld [vmem:[%s3490 + $0x364] sm:$0xf]
    %v3709 = vld [vmem:[%s3490 + $0x368] sm:$0xf]
    %v3710 = vld [vmem:[%s3490 + $0x36c] sm:$0xf]
    %v3711 = vld [vmem:[%s3490 + $0x370] sm:$0xf]
    %v3712 = vld [vmem:[%s3490 + $0x374] sm:$0xf]
    %v3713 = vld [vmem:[%s3490 + $0x378] sm:$0xf]
    %v3714 = vld [vmem:[%s3490 + $0x37c] sm:$0xf]
    %v3715 = vld [vmem:[%s3490 + $0x380] sm:$0xf]
    %v3716 = vld [vmem:[%s3490 + $0x384] sm:$0xf]
    %v3717 = vld [vmem:[%s3490 + $0x388] sm:$0xf]
    %v3718 = vld [vmem:[%s3490 + $0x38c] sm:$0xf]
    %v3719 = vld [vmem:[%s3490 + $0x390] sm:$0xf]
    %v3720 = vld [vmem:[%s3490 + $0x394] sm:$0xf]
    %v3721 = vld [vmem:[%s3490 + $0x398] sm:$0xf]
    %v3722 = vld [vmem:[%s3490 + $0x39c] sm:$0xf]
    %v3723 = vld [vmem:[%s3490 + $0x3a0] sm:$0xf]
    %v3724 = vld [vmem:[%s3490 + $0x3a4] sm:$0xf]
    %v3725 = vld [vmem:[%s3490 + $0x3a8] sm:$0xf]
    %v3726 = vld [vmem:[%s3490 + $0x3ac] sm:$0xf]
    %v3727 = vld [vmem:[%s3490 + $0x3b0] sm:$0xf]
    %v3728 = vld [vmem:[%s3490 + $0x3b4] sm:$0xf]
    %v3729 = vld [vmem:[%s3490 + $0x3b8] sm:$0xf]
    %v3730 = vld [vmem:[%s3490 + $0x3bc] sm:$0xf]
    %v3731 = vld [vmem:[%s3490 + $0x3c0] sm:$0xf]
    %v3732 = vld [vmem:[%s3490 + $0x3c4] sm:$0xf]
    %v3733 = vld [vmem:[%s3490 + $0x3c8] sm:$0xf]
    %v3734 = vld [vmem:[%s3490 + $0x3cc] sm:$0xf]
    %v3735 = vld [vmem:[%s3490 + $0x3d0] sm:$0xf]
    %v3736 = vld [vmem:[%s3490 + $0x3d4] sm:$0xf]
    %v3737 = vld [vmem:[%s3490 + $0x3d8] sm:$0xf]
    %v3738 = vld [vmem:[%s3490 + $0x3dc] sm:$0xf]
    %v3739 = vld [vmem:[%s3490 + $0x3e0] sm:$0xf]
    %v3740 = vld [vmem:[%s3490 + $0x3e4] sm:$0xf]
    %v3741 = vld [vmem:[%s3490 + $0x3e8] sm:$0xf]
    %v3742 = vld [vmem:[%s3490 + $0x3ec] sm:$0xf]
    %v3743 = vld [vmem:[%s3490 + $0x3f0] sm:$0xf]
    %v3744 = vld [vmem:[%s3490 + $0x3f4] sm:$0xf]
    %v3745 = vld [vmem:[%s3490 + $0x3f8] sm:$0xf]
    %v3746 = vld [vmem:[%s3490 + $0x3fc] sm:$0xf]
    %s3747 = scalar_lea.vmem %s11, 1
    %v3748 = vld [vmem:[%s3747] sm:$0x1]
    %v3750 = vlaneseq
    %v3751 = vshrl.u32 %v3750, 7
    %v3752 = vsub.s32 0, %v3751
    %v3753 = vrot.slane %v3748, %v3752
    %v4011 = vunpack.c.l.b16 %v3491
    %v4012 = vunpack.c.l.b16 %v3492
    %v4013 = vunpack.c.l.b16 %v3493
    %v4014 = vunpack.c.l.b16 %v3494
    %v4015 = vunpack.c.l.b16 %v3495
    %v4016 = vunpack.c.l.b16 %v3496
    %v4017 = vunpack.c.l.b16 %v3497
    %v4018 = vunpack.c.l.b16 %v3498
    %v4019 = vunpack.c.l.b16 %v3499
    %v4020 = vunpack.c.l.b16 %v3500
    %v4021 = vunpack.c.l.b16 %v3501
    %v4022 = vunpack.c.l.b16 %v3502
    %v4023 = vunpack.c.l.b16 %v3503
    %v4024 = vunpack.c.l.b16 %v3504
    %v4025 = vunpack.c.l.b16 %v3505
    %v4026 = vunpack.c.l.b16 %v3506
    %v4027 = vunpack.c.l.b16 %v3507
    %v4028 = vunpack.c.l.b16 %v3508
    %v4029 = vunpack.c.l.b16 %v3509
    %v4030 = vunpack.c.l.b16 %v3510
    %v4031 = vunpack.c.l.b16 %v3511
    %v4032 = vunpack.c.l.b16 %v3512
    %v4033 = vunpack.c.l.b16 %v3513
    %v4034 = vunpack.c.l.b16 %v3514
    %v4035 = vunpack.c.l.b16 %v3515
    %v4036 = vunpack.c.l.b16 %v3516
    %v4037 = vunpack.c.l.b16 %v3517
    %v4038 = vunpack.c.l.b16 %v3518
    %v4039 = vunpack.c.l.b16 %v3519
    %v4040 = vunpack.c.l.b16 %v3520
    %v4041 = vunpack.c.l.b16 %v3521
    %v4042 = vunpack.c.l.b16 %v3522
    %v4043 = vunpack.c.l.b16 %v3523
    %v4044 = vunpack.c.l.b16 %v3524
    %v4045 = vunpack.c.l.b16 %v3525
    %v4046 = vunpack.c.l.b16 %v3526
    %v4047 = vunpack.c.l.b16 %v3527
    %v4048 = vunpack.c.l.b16 %v3528
    %v4049 = vunpack.c.l.b16 %v3529
    %v4050 = vunpack.c.l.b16 %v3530
    %v4051 = vunpack.c.l.b16 %v3531
    %v4052 = vunpack.c.l.b16 %v3532
    %v4053 = vunpack.c.l.b16 %v3533
    %v4054 = vunpack.c.l.b16 %v3534
    %v4055 = vunpack.c.l.b16 %v3535
    %v4056 = vunpack.c.l.b16 %v3536
    %v4057 = vunpack.c.l.b16 %v3537
    %v4058 = vunpack.c.l.b16 %v3538
    %v4059 = vunpack.c.l.b16 %v3539
    %v4060 = vunpack.c.l.b16 %v3540
    %v4061 = vunpack.c.l.b16 %v3541
    %v4062 = vunpack.c.l.b16 %v3542
    %v4063 = vunpack.c.l.b16 %v3543
    %v4064 = vunpack.c.l.b16 %v3544
    %v4065 = vunpack.c.l.b16 %v3545
    %v4066 = vunpack.c.l.b16 %v3546
    %v4067 = vunpack.c.l.b16 %v3547
    %v4068 = vunpack.c.l.b16 %v3548
    %v4069 = vunpack.c.l.b16 %v3549
    %v4070 = vunpack.c.l.b16 %v3550
    %v4071 = vunpack.c.l.b16 %v3551
    %v4072 = vunpack.c.l.b16 %v3552
    %v4073 = vunpack.c.l.b16 %v3553
    %v4074 = vunpack.c.l.b16 %v3554
    %v4075 = vunpack.c.l.b16 %v3555
    %v4076 = vunpack.c.l.b16 %v3556
    %v4077 = vunpack.c.l.b16 %v3557
    %v4078 = vunpack.c.l.b16 %v3558
    %v4079 = vunpack.c.l.b16 %v3559
    %v4080 = vunpack.c.l.b16 %v3560
    %v4081 = vunpack.c.l.b16 %v3561
    %v4082 = vunpack.c.l.b16 %v3562
    %v4083 = vunpack.c.l.b16 %v3563
    %v4084 = vunpack.c.l.b16 %v3564
    %v4085 = vunpack.c.l.b16 %v3565
    %v4086 = vunpack.c.l.b16 %v3566
    %v4087 = vunpack.c.l.b16 %v3567
    %v4088 = vunpack.c.l.b16 %v3568
    %v4089 = vunpack.c.l.b16 %v3569
    %v4090 = vunpack.c.l.b16 %v3570
    %v4091 = vunpack.c.l.b16 %v3571
    %v4092 = vunpack.c.l.b16 %v3572
    %v4093 = vunpack.c.l.b16 %v3573
    %v4094 = vunpack.c.l.b16 %v3574
    %v4095 = vunpack.c.l.b16 %v3575
    %v4096 = vunpack.c.l.b16 %v3576
    %v4097 = vunpack.c.l.b16 %v3577
    %v4098 = vunpack.c.l.b16 %v3578
    %v4099 = vunpack.c.l.b16 %v3579
    %v4100 = vunpack.c.l.b16 %v3580
    %v4101 = vunpack.c.l.b16 %v3581
    %v4102 = vunpack.c.l.b16 %v3582
    %v4103 = vunpack.c.l.b16 %v3583
    %v4104 = vunpack.c.l.b16 %v3584
    %v4105 = vunpack.c.l.b16 %v3585
    %v4106 = vunpack.c.l.b16 %v3586
    %v4107 = vunpack.c.l.b16 %v3587
    %v4108 = vunpack.c.l.b16 %v3588
    %v4109 = vunpack.c.l.b16 %v3589
    %v4110 = vunpack.c.l.b16 %v3590
    %v4111 = vunpack.c.l.b16 %v3591
    %v4112 = vunpack.c.l.b16 %v3592
    %v4113 = vunpack.c.l.b16 %v3593
    %v4114 = vunpack.c.l.b16 %v3594
    %v4115 = vunpack.c.l.b16 %v3595
    %v4116 = vunpack.c.l.b16 %v3596
    %v4117 = vunpack.c.l.b16 %v3597
    %v4118 = vunpack.c.l.b16 %v3598
    %v4119 = vunpack.c.l.b16 %v3599
    %v4120 = vunpack.c.l.b16 %v3600
    %v4121 = vunpack.c.l.b16 %v3601
    %v4122 = vunpack.c.l.b16 %v3602
    %v4123 = vunpack.c.l.b16 %v3603
    %v4124 = vunpack.c.l.b16 %v3604
    %v4125 = vunpack.c.l.b16 %v3605
    %v4126 = vunpack.c.l.b16 %v3606
    %v4127 = vunpack.c.l.b16 %v3607
    %v4128 = vunpack.c.l.b16 %v3608
    %v4129 = vunpack.c.l.b16 %v3609
    %v4130 = vunpack.c.l.b16 %v3610
    %v4131 = vunpack.c.l.b16 %v3611
    %v4132 = vunpack.c.l.b16 %v3612
    %v4133 = vunpack.c.l.b16 %v3613
    %v4134 = vunpack.c.l.b16 %v3614
    %v4135 = vunpack.c.l.b16 %v3615
    %v4136 = vunpack.c.l.b16 %v3616
    %v4137 = vunpack.c.l.b16 %v3617
    %v4138 = vunpack.c.l.b16 %v3618
    %v4139 = vunpack.c.l.b16 %v3619
    %v4140 = vunpack.c.l.b16 %v3620
    %v4141 = vunpack.c.l.b16 %v3621
    %v4142 = vunpack.c.l.b16 %v3622
    %v4143 = vunpack.c.l.b16 %v3623
    %v4144 = vunpack.c.l.b16 %v3624
    %v4145 = vunpack.c.l.b16 %v3625
    %v4146 = vunpack.c.l.b16 %v3626
    %v4147 = vunpack.c.l.b16 %v3627
    %v4148 = vunpack.c.l.b16 %v3628
    %v4149 = vunpack.c.l.b16 %v3629
    %v4150 = vunpack.c.l.b16 %v3630
    %v4151 = vunpack.c.l.b16 %v3631
    %v4152 = vunpack.c.l.b16 %v3632
    %v4153 = vunpack.c.l.b16 %v3633
    %v4154 = vunpack.c.l.b16 %v3634
    %v4155 = vunpack.c.l.b16 %v3635
    %v4156 = vunpack.c.l.b16 %v3636
    %v4157 = vunpack.c.l.b16 %v3637
    %v4158 = vunpack.c.l.b16 %v3638
    %v4159 = vunpack.c.l.b16 %v3639
    %v4160 = vunpack.c.l.b16 %v3640
    %v4161 = vunpack.c.l.b16 %v3641
    %v4162 = vunpack.c.l.b16 %v3642
    %v4163 = vunpack.c.l.b16 %v3643
    %v4164 = vunpack.c.l.b16 %v3644
    %v4165 = vunpack.c.l.b16 %v3645
    %v4166 = vunpack.c.l.b16 %v3646
    %v4167 = vunpack.c.l.b16 %v3647
    %v4168 = vunpack.c.l.b16 %v3648
    %v4169 = vunpack.c.l.b16 %v3649
    %v4170 = vunpack.c.l.b16 %v3650
    %v4171 = vunpack.c.l.b16 %v3651
    %v4172 = vunpack.c.l.b16 %v3652
    %v4173 = vunpack.c.l.b16 %v3653
    %v4174 = vunpack.c.l.b16 %v3654
    %v4175 = vunpack.c.l.b16 %v3655
    %v4176 = vunpack.c.l.b16 %v3656
    %v4177 = vunpack.c.l.b16 %v3657
    %v4178 = vunpack.c.l.b16 %v3658
    %v4179 = vunpack.c.l.b16 %v3659
    %v4180 = vunpack.c.l.b16 %v3660
    %v4181 = vunpack.c.l.b16 %v3661
    %v4182 = vunpack.c.l.b16 %v3662
    %v4183 = vunpack.c.l.b16 %v3663
    %v4184 = vunpack.c.l.b16 %v3664
    %v4185 = vunpack.c.l.b16 %v3665
    %v4186 = vunpack.c.l.b16 %v3666
    %v4187 = vunpack.c.l.b16 %v3667
    %v4188 = vunpack.c.l.b16 %v3668
    %v4189 = vunpack.c.l.b16 %v3669
    %v4190 = vunpack.c.l.b16 %v3670
    %v4191 = vunpack.c.l.b16 %v3671
    %v4192 = vunpack.c.l.b16 %v3672
    %v4193 = vunpack.c.l.b16 %v3673
    %v4194 = vunpack.c.l.b16 %v3674
    %v4195 = vunpack.c.l.b16 %v3675
    %v4196 = vunpack.c.l.b16 %v3676
    %v4197 = vunpack.c.l.b16 %v3677
    %v4198 = vunpack.c.l.b16 %v3678
    %v4199 = vunpack.c.l.b16 %v3679
    %v4200 = vunpack.c.l.b16 %v3680
    %v4201 = vunpack.c.l.b16 %v3681
    %v4202 = vunpack.c.l.b16 %v3682
    %v4203 = vunpack.c.l.b16 %v3683
    %v4204 = vunpack.c.l.b16 %v3684
    %v4205 = vunpack.c.l.b16 %v3685
    %v4206 = vunpack.c.l.b16 %v3686
    %v4207 = vunpack.c.l.b16 %v3687
    %v4208 = vunpack.c.l.b16 %v3688
    %v4209 = vunpack.c.l.b16 %v3689
    %v4210 = vunpack.c.l.b16 %v3690
    %v4211 = vunpack.c.l.b16 %v3691
    %v4212 = vunpack.c.l.b16 %v3692
    %v4213 = vunpack.c.l.b16 %v3693
    %v4214 = vunpack.c.l.b16 %v3694
    %v4215 = vunpack.c.l.b16 %v3695
    %v4216 = vunpack.c.l.b16 %v3696
    %v4217 = vunpack.c.l.b16 %v3697
    %v4218 = vunpack.c.l.b16 %v3698
    %v4219 = vunpack.c.l.b16 %v3699
    %v4220 = vunpack.c.l.b16 %v3700
    %v4221 = vunpack.c.l.b16 %v3701
    %v4222 = vunpack.c.l.b16 %v3702
    %v4223 = vunpack.c.l.b16 %v3703
    %v4224 = vunpack.c.l.b16 %v3704
    %v4225 = vunpack.c.l.b16 %v3705
    %v4226 = vunpack.c.l.b16 %v3706
    %v4227 = vunpack.c.l.b16 %v3707
    %v4228 = vunpack.c.l.b16 %v3708
    %v4229 = vunpack.c.l.b16 %v3709
    %v4230 = vunpack.c.l.b16 %v3710
    %v4231 = vunpack.c.l.b16 %v3711
    %v4232 = vunpack.c.l.b16 %v3712
    %v4233 = vunpack.c.l.b16 %v3713
    %v4234 = vunpack.c.l.b16 %v3714
    %v4235 = vunpack.c.l.b16 %v3715
    %v4236 = vunpack.c.l.b16 %v3716
    %v4237 = vunpack.c.l.b16 %v3717
    %v4238 = vunpack.c.l.b16 %v3718
    %v4239 = vunpack.c.l.b16 %v3719
    %v4240 = vunpack.c.l.b16 %v3720
    %v4241 = vunpack.c.l.b16 %v3721
    %v4242 = vunpack.c.l.b16 %v3722
    %v4243 = vunpack.c.l.b16 %v3723
    %v4244 = vunpack.c.l.b16 %v3724
    %v4245 = vunpack.c.l.b16 %v3725
    %v4246 = vunpack.c.l.b16 %v3726
    %v4247 = vunpack.c.l.b16 %v3727
    %v4248 = vunpack.c.l.b16 %v3728
    %v4249 = vunpack.c.l.b16 %v3729
    %v4250 = vunpack.c.l.b16 %v3730
    %v4251 = vunpack.c.l.b16 %v3731
    %v4252 = vunpack.c.l.b16 %v3732
    %v4253 = vunpack.c.l.b16 %v3733
    %v4254 = vunpack.c.l.b16 %v3734
    %v4255 = vunpack.c.l.b16 %v3735
    %v4256 = vunpack.c.l.b16 %v3736
    %v4257 = vunpack.c.l.b16 %v3737
    %v4258 = vunpack.c.l.b16 %v3738
    %v4259 = vunpack.c.l.b16 %v3739
    %v4260 = vunpack.c.l.b16 %v3740
    %v4261 = vunpack.c.l.b16 %v3741
    %v4262 = vunpack.c.l.b16 %v3742
    %v4263 = vunpack.c.l.b16 %v3743
    %v4264 = vunpack.c.l.b16 %v3744
    %v4265 = vunpack.c.l.b16 %v3745
    %v4266 = vunpack.c.l.b16 %v3746
    %v4267 = vpack.c.b16 %v4012, %v4011
    %v4268 = vpack.c.b16 %v4014, %v4013
    %v4269 = vpack.c.b16 %v4016, %v4015
    %v4270 = vpack.c.b16 %v4018, %v4017
    %v4271 = vpack.c.b16 %v4020, %v4019
    %v4272 = vpack.c.b16 %v4022, %v4021
    %v4273 = vpack.c.b16 %v4024, %v4023
    %v4274 = vpack.c.b16 %v4026, %v4025
    %v4275 = vpack.c.b16 %v4028, %v4027
    %v4276 = vpack.c.b16 %v4030, %v4029
    %v4277 = vpack.c.b16 %v4032, %v4031
    %v4278 = vpack.c.b16 %v4034, %v4033
    %v4279 = vpack.c.b16 %v4036, %v4035
    %v4280 = vpack.c.b16 %v4038, %v4037
    %v4281 = vpack.c.b16 %v4040, %v4039
    %v4282 = vpack.c.b16 %v4042, %v4041
    %v4283 = vpack.c.b16 %v4044, %v4043
    %v4284 = vpack.c.b16 %v4046, %v4045
    %v4285 = vpack.c.b16 %v4048, %v4047
    %v4286 = vpack.c.b16 %v4050, %v4049
    %v4287 = vpack.c.b16 %v4052, %v4051
    %v4288 = vpack.c.b16 %v4054, %v4053
    %v4289 = vpack.c.b16 %v4056, %v4055
    %v4290 = vpack.c.b16 %v4058, %v4057
    %v4291 = vpack.c.b16 %v4060, %v4059
    %v4292 = vpack.c.b16 %v4062, %v4061
    %v4293 = vpack.c.b16 %v4064, %v4063
    %v4294 = vpack.c.b16 %v4066, %v4065
    %v4295 = vpack.c.b16 %v4068, %v4067
    %v4296 = vpack.c.b16 %v4070, %v4069
    %v4297 = vpack.c.b16 %v4072, %v4071
    %v4298 = vpack.c.b16 %v4074, %v4073
    %v4299 = vpack.c.b16 %v4076, %v4075
    %v4300 = vpack.c.b16 %v4078, %v4077
    %v4301 = vpack.c.b16 %v4080, %v4079
    %v4302 = vpack.c.b16 %v4082, %v4081
    %v4303 = vpack.c.b16 %v4084, %v4083
    %v4304 = vpack.c.b16 %v4086, %v4085
    %v4305 = vpack.c.b16 %v4088, %v4087
    %v4306 = vpack.c.b16 %v4090, %v4089
    %v4307 = vpack.c.b16 %v4092, %v4091
    %v4308 = vpack.c.b16 %v4094, %v4093
    %v4309 = vpack.c.b16 %v4096, %v4095
    %v4310 = vpack.c.b16 %v4098, %v4097
    %v4311 = vpack.c.b16 %v4100, %v4099
    %v4312 = vpack.c.b16 %v4102, %v4101
    %v4313 = vpack.c.b16 %v4104, %v4103
    %v4314 = vpack.c.b16 %v4106, %v4105
    %v4315 = vpack.c.b16 %v4108, %v4107
    %v4316 = vpack.c.b16 %v4110, %v4109
    %v4317 = vpack.c.b16 %v4112, %v4111
    %v4318 = vpack.c.b16 %v4114, %v4113
    %v4319 = vpack.c.b16 %v4116, %v4115
    %v4320 = vpack.c.b16 %v4118, %v4117
    %v4321 = vpack.c.b16 %v4120, %v4119
    %v4322 = vpack.c.b16 %v4122, %v4121
    %v4323 = vpack.c.b16 %v4124, %v4123
    %v4324 = vpack.c.b16 %v4126, %v4125
    %v4325 = vpack.c.b16 %v4128, %v4127
    %v4326 = vpack.c.b16 %v4130, %v4129
    %v4327 = vpack.c.b16 %v4132, %v4131
    %v4328 = vpack.c.b16 %v4134, %v4133
    %v4329 = vpack.c.b16 %v4136, %v4135
    %v4330 = vpack.c.b16 %v4138, %v4137
    %v4331 = vpack.c.b16 %v4140, %v4139
    %v4332 = vpack.c.b16 %v4142, %v4141
    %v4333 = vpack.c.b16 %v4144, %v4143
    %v4334 = vpack.c.b16 %v4146, %v4145
    %v4335 = vpack.c.b16 %v4148, %v4147
    %v4336 = vpack.c.b16 %v4150, %v4149
    %v4337 = vpack.c.b16 %v4152, %v4151
    %v4338 = vpack.c.b16 %v4154, %v4153
    %v4339 = vpack.c.b16 %v4156, %v4155
    %v4340 = vpack.c.b16 %v4158, %v4157
    %v4341 = vpack.c.b16 %v4160, %v4159
    %v4342 = vpack.c.b16 %v4162, %v4161
    %v4343 = vpack.c.b16 %v4164, %v4163
    %v4344 = vpack.c.b16 %v4166, %v4165
    %v4345 = vpack.c.b16 %v4168, %v4167
    %v4346 = vpack.c.b16 %v4170, %v4169
    %v4347 = vpack.c.b16 %v4172, %v4171
    %v4348 = vpack.c.b16 %v4174, %v4173
    %v4349 = vpack.c.b16 %v4176, %v4175
    %v4350 = vpack.c.b16 %v4178, %v4177
    %v4351 = vpack.c.b16 %v4180, %v4179
    %v4352 = vpack.c.b16 %v4182, %v4181
    %v4353 = vpack.c.b16 %v4184, %v4183
    %v4354 = vpack.c.b16 %v4186, %v4185
    %v4355 = vpack.c.b16 %v4188, %v4187
    %v4356 = vpack.c.b16 %v4190, %v4189
    %v4357 = vpack.c.b16 %v4192, %v4191
    %v4358 = vpack.c.b16 %v4194, %v4193
    %v4359 = vpack.c.b16 %v4196, %v4195
    %v4360 = vpack.c.b16 %v4198, %v4197
    %v4361 = vpack.c.b16 %v4200, %v4199
    %v4362 = vpack.c.b16 %v4202, %v4201
    %v4363 = vpack.c.b16 %v4204, %v4203
    %v4364 = vpack.c.b16 %v4206, %v4205
    %v4365 = vpack.c.b16 %v4208, %v4207
    %v4366 = vpack.c.b16 %v4210, %v4209
    %v4367 = vpack.c.b16 %v4212, %v4211
    %v4368 = vpack.c.b16 %v4214, %v4213
    %v4369 = vpack.c.b16 %v4216, %v4215
    %v4370 = vpack.c.b16 %v4218, %v4217
    %v4371 = vpack.c.b16 %v4220, %v4219
    %v4372 = vpack.c.b16 %v4222, %v4221
    %v4373 = vpack.c.b16 %v4224, %v4223
    %v4374 = vpack.c.b16 %v4226, %v4225
    %v4375 = vpack.c.b16 %v4228, %v4227
    %v4376 = vpack.c.b16 %v4230, %v4229
    %v4377 = vpack.c.b16 %v4232, %v4231
    %v4378 = vpack.c.b16 %v4234, %v4233
    %v4379 = vpack.c.b16 %v4236, %v4235
    %v4380 = vpack.c.b16 %v4238, %v4237
    %v4381 = vpack.c.b16 %v4240, %v4239
    %v4382 = vpack.c.b16 %v4242, %v4241
    %v4383 = vpack.c.b16 %v4244, %v4243
    %v4384 = vpack.c.b16 %v4246, %v4245
    %v4385 = vpack.c.b16 %v4248, %v4247
    %v4386 = vpack.c.b16 %v4250, %v4249
    %v4387 = vpack.c.b16 %v4252, %v4251
    %v4388 = vpack.c.b16 %v4254, %v4253
    %v4389 = vpack.c.b16 %v4256, %v4255
    %v4390 = vpack.c.b16 %v4258, %v4257
    %v4391 = vpack.c.b16 %v4260, %v4259
    %v4392 = vpack.c.b16 %v4262, %v4261
    %v4393 = vpack.c.b16 %v4264, %v4263
    %v4394 = vpack.c.b16 %v4266, %v4265
    %4523 = vmatprep.subr.bf16.mxu0 0
    %4524 = vmatpush1.bf16.msra.mxu0 %v4267
    %4525 = vmatprep.subr.bf16.mxu0 0
    %4526 = vmatpush1.bf16.msra.mxu0 %v4268
    %4527 = vmatprep.subr.bf16.mxu0 0
    %4528 = vmatpush1.bf16.msra.mxu0 %v4269
    %4529 = vmatprep.subr.bf16.mxu0 0
    %4530 = vmatpush1.bf16.msra.mxu0 %v4270
    %4531 = vmatprep.subr.bf16.mxu0 0
    %4532 = vmatpush1.bf16.msra.mxu0 %v4271
    %4533 = vmatprep.subr.bf16.mxu0 0
    %4534 = vmatpush1.bf16.msra.mxu0 %v4272
    %4535 = vmatprep.subr.bf16.mxu0 0
    %4536 = vmatpush1.bf16.msra.mxu0 %v4273
    %4537 = vmatprep.subr.bf16.mxu0 0
    %4538 = vmatpush1.bf16.msra.mxu0 %v4274
    %4539 = vmatprep.subr.bf16.mxu0 0
    %4540 = vmatpush1.bf16.msra.mxu0 %v4275
    %4541 = vmatprep.subr.bf16.mxu0 0
    %4542 = vmatpush1.bf16.msra.mxu0 %v4276
    %4543 = vmatprep.subr.bf16.mxu0 0
    %4544 = vmatpush1.bf16.msra.mxu0 %v4277
    %4545 = vmatprep.subr.bf16.mxu0 0
    %4546 = vmatpush1.bf16.msra.mxu0 %v4278
    %4547 = vmatprep.subr.bf16.mxu0 0
    %4548 = vmatpush1.bf16.msra.mxu0 %v4279
    %4549 = vmatprep.subr.bf16.mxu0 0
    %4550 = vmatpush1.bf16.msra.mxu0 %v4280
    %4551 = vmatprep.subr.bf16.mxu0 0
    %4552 = vmatpush1.bf16.msra.mxu0 %v4281
    %4553 = vmatprep.subr.bf16.mxu0 0
    %4554 = vmatpush1.bf16.msra.mxu0 %v4282
    %4555 = vmatprep.mubr.bf16.mxu0 %v3475
    %4556 = vmatmul.mubr.bf16.gmra.mrb[0].mxu0 %v3474
    %v4557 = vpop.f32.mrb[0].mxu0
    %v4558 = vadd.f32 %v3753, %v4557
    %v4559 = vpop.f32.mrb[0].mxu0
    %v4560 = vpop.f32.mrb[0].mxu0
    %v4561 = vadd.f32 %v3753, %v4560
    %v4562 = vpop.f32.mrb[0].mxu0
    %4563 = vdwg.mxu0
    %4564 = vmatprep.subr.bf16.mxu0 0
    %4565 = vmatpush1.bf16.msra.mxu0 %v4283
    %4566 = vmatprep.subr.bf16.mxu0 0
    %4567 = vmatpush1.bf16.msra.mxu0 %v4284
    %4568 = vmatprep.subr.bf16.mxu0 0
    %4569 = vmatpush1.bf16.msra.mxu0 %v4285
    %4570 = vmatprep.subr.bf16.mxu0 0
    %4571 = vmatpush1.bf16.msra.mxu0 %v4286
    %4572 = vmatprep.subr.bf16.mxu0 0
    %4573 = vmatpush1.bf16.msra.mxu0 %v4287
    %4574 = vmatprep.subr.bf16.mxu0 0
    %4575 = vmatpush1.bf16.msra.mxu0 %v4288
    %4576 = vmatprep.subr.bf16.mxu0 0
    %4577 = vmatpush1.bf16.msra.mxu0 %v4289
    %4578 = vmatprep.subr.bf16.mxu0 0
    %4579 = vmatpush1.bf16.msra.mxu0 %v4290
    %4580 = vmatprep.subr.bf16.mxu0 0
    %4581 = vmatpush1.bf16.msra.mxu0 %v4291
    %4582 = vmatprep.subr.bf16.mxu0 0
    %4583 = vmatpush1.bf16.msra.mxu0 %v4292
    %4584 = vmatprep.subr.bf16.mxu0 0
    %4585 = vmatpush1.bf16.msra.mxu0 %v4293
    %4586 = vmatprep.subr.bf16.mxu0 0
    %4587 = vmatpush1.bf16.msra.mxu0 %v4294
    %4588 = vmatprep.subr.bf16.mxu0 0
    %4589 = vmatpush1.bf16.msra.mxu0 %v4295
    %4590 = vmatprep.subr.bf16.mxu0 0
    %4591 = vmatpush1.bf16.msra.mxu0 %v4296
    %4592 = vmatprep.subr.bf16.mxu0 0
    %4593 = vmatpush1.bf16.msra.mxu0 %v4297
    %4594 = vmatprep.subr.bf16.mxu0 0
    %4595 = vmatpush1.bf16.msra.mxu0 %v4298
    %4596 = vmatprep.mubr.bf16.mxu0 %v3477
    %4597 = vmatmul.mubr.bf16.gmra.mrb[0].mxu0 %v3476
    %v4598 = vpop.f32.mrb[0].mxu0
    %v4599 = vadd.f32 %v4558, %v4598
    %v4600 = vpop.f32.mrb[0].mxu0
    %v4601 = vpop.f32.mrb[0].mxu0
    %v4602 = vadd.f32 %v4561, %v4601
    %v4603 = vpop.f32.mrb[0].mxu0
    %4604 = vdwg.mxu0
    %4605 = vmatprep.subr.bf16.mxu0 0
    %4606 = vmatpush1.bf16.msra.mxu0 %v4299
    %4607 = vmatprep.subr.bf16.mxu0 0
    %4608 = vmatpush1.bf16.msra.mxu0 %v4300
    %4609 = vmatprep.subr.bf16.mxu0 0
    %4610 = vmatpush1.bf16.msra.mxu0 %v4301
    %4611 = vmatprep.subr.bf16.mxu0 0
    %4612 = vmatpush1.bf16.msra.mxu0 %v4302
    %4613 = vmatprep.subr.bf16.mxu0 0
    %4614 = vmatpush1.bf16.msra.mxu0 %v4303
    %4615 = vmatprep.subr.bf16.mxu0 0
    %4616 = vmatpush1.bf16.msra.mxu0 %v4304
    %4617 = vmatprep.subr.bf16.mxu0 0
    %4618 = vmatpush1.bf16.msra.mxu0 %v4305
    %4619 = vmatprep.subr.bf16.mxu0 0
    %4620 = vmatpush1.bf16.msra.mxu0 %v4306
    %4621 = vmatprep.subr.bf16.mxu0 0
    %4622 = vmatpush1.bf16.msra.mxu0 %v4307
    %4623 = vmatprep.subr.bf16.mxu0 0
    %4624 = vmatpush1.bf16.msra.mxu0 %v4308
    %4625 = vmatprep.subr.bf16.mxu0 0
    %4626 = vmatpush1.bf16.msra.mxu0 %v4309
    %4627 = vmatprep.subr.bf16.mxu0 0
    %4628 = vmatpush1.bf16.msra.mxu0 %v4310
    %4629 = vmatprep.subr.bf16.mxu0 0
    %4630 = vmatpush1.bf16.msra.mxu0 %v4311
    %4631 = vmatprep.subr.bf16.mxu0 0
    %4632 = vmatpush1.bf16.msra.mxu0 %v4312
    %4633 = vmatprep.subr.bf16.mxu0 0
    %4634 = vmatpush1.bf16.msra.mxu0 %v4313
    %4635 = vmatprep.subr.bf16.mxu0 0
    %4636 = vmatpush1.bf16.msra.mxu0 %v4314
    %4637 = vmatprep.mubr.bf16.mxu0 %v3479
    %4638 = vmatmul.mubr.bf16.gmra.mrb[0].mxu0 %v3478
    %v4639 = vpop.f32.mrb[0].mxu0
    %v4640 = vadd.f32 %v4599, %v4639
    %v4641 = vpop.f32.mrb[0].mxu0
    %v4642 = vpop.f32.mrb[0].mxu0
    %v4643 = vadd.f32 %v4602, %v4642
    %v4644 = vpop.f32.mrb[0].mxu0
    %4645 = vdwg.mxu0
    %4646 = vmatprep.subr.bf16.mxu0 0
    %4647 = vmatpush1.bf16.msra.mxu0 %v4315
    %4648 = vmatprep.subr.bf16.mxu0 0
    %4649 = vmatpush1.bf16.msra.mxu0 %v4316
    %4650 = vmatprep.subr.bf16.mxu0 0
    %4651 = vmatpush1.bf16.msra.mxu0 %v4317
    %4652 = vmatprep.subr.bf16.mxu0 0
    %4653 = vmatpush1.bf16.msra.mxu0 %v4318
    %4654 = vmatprep.subr.bf16.mxu0 0
    %4655 = vmatpush1.bf16.msra.mxu0 %v4319
    %4656 = vmatprep.subr.bf16.mxu0 0
    %4657 = vmatpush1.bf16.msra.mxu0 %v4320
    %4658 = vmatprep.subr.bf16.mxu0 0
    %4659 = vmatpush1.bf16.msra.mxu0 %v4321
    %4660 = vmatprep.subr.bf16.mxu0 0
    %4661 = vmatpush1.bf16.msra.mxu0 %v4322
    %4662 = vmatprep.subr.bf16.mxu0 0
    %4663 = vmatpush1.bf16.msra.mxu0 %v4323
    %4664 = vmatprep.subr.bf16.mxu0 0
    %4665 = vmatpush1.bf16.msra.mxu0 %v4324
    %4666 = vmatprep.subr.bf16.mxu0 0
    %4667 = vmatpush1.bf16.msra.mxu0 %v4325
    %4668 = vmatprep.subr.bf16.mxu0 0
    %4669 = vmatpush1.bf16.msra.mxu0 %v4326
    %4670 = vmatprep.subr.bf16.mxu0 0
    %4671 = vmatpush1.bf16.msra.mxu0 %v4327
    %4672 = vmatprep.subr.bf16.mxu0 0
    %4673 = vmatpush1.bf16.msra.mxu0 %v4328
    %4674 = vmatprep.subr.bf16.mxu0 0
    %4675 = vmatpush1.bf16.msra.mxu0 %v4329
    %4676 = vmatprep.subr.bf16.mxu0 0
    %4677 = vmatpush1.bf16.msra.mxu0 %v4330
    %4678 = vmatprep.mubr.bf16.mxu0 %v3481
    %4679 = vmatmul.mubr.bf16.gmra.mrb[0].mxu0 %v3480
    %v4680 = vpop.f32.mrb[0].mxu0
    %v4681 = vadd.f32 %v4640, %v4680
    %v4682 = vpop.f32.mrb[0].mxu0
    %v4683 = vpop.f32.mrb[0].mxu0
    %v4684 = vadd.f32 %v4643, %v4683
    %v4685 = vpop.f32.mrb[0].mxu0
    %4686 = vdwg.mxu0
    %4687 = vmatprep.subr.bf16.mxu0 0
    %4688 = vmatpush1.bf16.msra.mxu0 %v4331
    %4689 = vmatprep.subr.bf16.mxu0 0
    %4690 = vmatpush1.bf16.msra.mxu0 %v4332
    %4691 = vmatprep.subr.bf16.mxu0 0
    %4692 = vmatpush1.bf16.msra.mxu0 %v4333
    %4693 = vmatprep.subr.bf16.mxu0 0
    %4694 = vmatpush1.bf16.msra.mxu0 %v4334
    %4695 = vmatprep.subr.bf16.mxu0 0
    %4696 = vmatpush1.bf16.msra.mxu0 %v4335
    %4697 = vmatprep.subr.bf16.mxu0 0
    %4698 = vmatpush1.bf16.msra.mxu0 %v4336
    %4699 = vmatprep.subr.bf16.mxu0 0
    %4700 = vmatpush1.bf16.msra.mxu0 %v4337
    %4701 = vmatprep.subr.bf16.mxu0 0
    %4702 = vmatpush1.bf16.msra.mxu0 %v4338
    %4703 = vmatprep.subr.bf16.mxu0 0
    %4704 = vmatpush1.bf16.msra.mxu0 %v4339
    %4705 = vmatprep.subr.bf16.mxu0 0
    %4706 = vmatpush1.bf16.msra.mxu0 %v4340
    %4707 = vmatprep.subr.bf16.mxu0 0
    %4708 = vmatpush1.bf16.msra.mxu0 %v4341
    %4709 = vmatprep.subr.bf16.mxu0 0
    %4710 = vmatpush1.bf16.msra.mxu0 %v4342
    %4711 = vmatprep.subr.bf16.mxu0 0
    %4712 = vmatpush1.bf16.msra.mxu0 %v4343
    %4713 = vmatprep.subr.bf16.mxu0 0
    %4714 = vmatpush1.bf16.msra.mxu0 %v4344
    %4715 = vmatprep.subr.bf16.mxu0 0
    %4716 = vmatpush1.bf16.msra.mxu0 %v4345
    %4717 = vmatprep.subr.bf16.mxu0 0
    %4718 = vmatpush1.bf16.msra.mxu0 %v4346
    %4719 = vmatprep.mubr.bf16.mxu0 %v3483
    %4720 = vmatmul.mubr.bf16.gmra.mrb[0].mxu0 %v3482
    %v4721 = vpop.f32.mrb[0].mxu0
    %v4722 = vadd.f32 %v4681, %v4721
    %v4723 = vpop.f32.mrb[0].mxu0
    %v4724 = vpop.f32.mrb[0].mxu0
    %v4725 = vadd.f32 %v4684, %v4724
    %v4726 = vpop.f32.mrb[0].mxu0
    %4727 = vdwg.mxu0
    %4728 = vmatprep.subr.bf16.mxu0 0
    %4729 = vmatpush1.bf16.msra.mxu0 %v4347
    %4730 = vmatprep.subr.bf16.mxu0 0
    %4731 = vmatpush1.bf16.msra.mxu0 %v4348
    %4732 = vmatprep.subr.bf16.mxu0 0
    %4733 = vmatpush1.bf16.msra.mxu0 %v4349
    %4734 = vmatprep.subr.bf16.mxu0 0
    %4735 = vmatpush1.bf16.msra.mxu0 %v4350
    %4736 = vmatprep.subr.bf16.mxu0 0
    %4737 = vmatpush1.bf16.msra.mxu0 %v4351
    %4738 = vmatprep.subr.bf16.mxu0 0
    %4739 = vmatpush1.bf16.msra.mxu0 %v4352
    %4740 = vmatprep.subr.bf16.mxu0 0
    %4741 = vmatpush1.bf16.msra.mxu0 %v4353
    %4742 = vmatprep.subr.bf16.mxu0 0
    %4743 = vmatpush1.bf16.msra.mxu0 %v4354
    %4744 = vmatprep.subr.bf16.mxu0 0
    %4745 = vmatpush1.bf16.msra.mxu0 %v4355
    %4746 = vmatprep.subr.bf16.mxu0 0
    %4747 = vmatpush1.bf16.msra.mxu0 %v4356
    %4748 = vmatprep.subr.bf16.mxu0 0
    %4749 = vmatpush1.bf16.msra.mxu0 %v4357
    %4750 = vmatprep.subr.bf16.mxu0 0
    %4751 = vmatpush1.bf16.msra.mxu0 %v4358
    %4752 = vmatprep.subr.bf16.mxu0 0
    %4753 = vmatpush1.bf16.msra.mxu0 %v4359
    %4754 = vmatprep.subr.bf16.mxu0 0
    %4755 = vmatpush1.bf16.msra.mxu0 %v4360
    %4756 = vmatprep.subr.bf16.mxu0 0
    %4757 = vmatpush1.bf16.msra.mxu0 %v4361
    %4758 = vmatprep.subr.bf16.mxu0 0
    %4759 = vmatpush1.bf16.msra.mxu0 %v4362
    %4760 = vmatprep.mubr.bf16.mxu0 %v3485
    %4761 = vmatmul.mubr.bf16.gmra.mrb[0].mxu0 %v3484
    %v4762 = vpop.f32.mrb[0].mxu0
    %v4763 = vadd.f32 %v4722, %v4762
    %v4764 = vpop.f32.mrb[0].mxu0
    %v4765 = vpop.f32.mrb[0].mxu0
    %v4766 = vadd.f32 %v4725, %v4765
    %v4767 = vpop.f32.mrb[0].mxu0
    %4768 = vdwg.mxu0
    %4769 = vmatprep.subr.bf16.mxu0 0
    %4770 = vmatpush1.bf16.msra.mxu0 %v4363
    %4771 = vmatprep.subr.bf16.mxu0 0
    %4772 = vmatpush1.bf16.msra.mxu0 %v4364
    %4773 = vmatprep.subr.bf16.mxu0 0
    %4774 = vmatpush1.bf16.msra.mxu0 %v4365
    %4775 = vmatprep.subr.bf16.mxu0 0
    %4776 = vmatpush1.bf16.msra.mxu0 %v4366
    %4777 = vmatprep.subr.bf16.mxu0 0
    %4778 = vmatpush1.bf16.msra.mxu0 %v4367
    %4779 = vmatprep.subr.bf16.mxu0 0
    %4780 = vmatpush1.bf16.msra.mxu0 %v4368
    %4781 = vmatprep.subr.bf16.mxu0 0
    %4782 = vmatpush1.bf16.msra.mxu0 %v4369
    %4783 = vmatprep.subr.bf16.mxu0 0
    %4784 = vmatpush1.bf16.msra.mxu0 %v4370
    %4785 = vmatprep.subr.bf16.mxu0 0
    %4786 = vmatpush1.bf16.msra.mxu0 %v4371
    %4787 = vmatprep.subr.bf16.mxu0 0
    %4788 = vmatpush1.bf16.msra.mxu0 %v4372
    %4789 = vmatprep.subr.bf16.mxu0 0
    %4790 = vmatpush1.bf16.msra.mxu0 %v4373
    %4791 = vmatprep.subr.bf16.mxu0 0
    %4792 = vmatpush1.bf16.msra.mxu0 %v4374
    %4793 = vmatprep.subr.bf16.mxu0 0
    %4794 = vmatpush1.bf16.msra.mxu0 %v4375
    %4795 = vmatprep.subr.bf16.mxu0 0
    %4796 = vmatpush1.bf16.msra.mxu0 %v4376
    %4797 = vmatprep.subr.bf16.mxu0 0
    %4798 = vmatpush1.bf16.msra.mxu0 %v4377
    %4799 = vmatprep.subr.bf16.mxu0 0
    %4800 = vmatpush1.bf16.msra.mxu0 %v4378
    %4801 = vmatprep.mubr.bf16.mxu0 %v3487
    %4802 = vmatmul.mubr.bf16.gmra.mrb[0].mxu0 %v3486
    %v4803 = vpop.f32.mrb[0].mxu0
    %v4804 = vadd.f32 %v4763, %v4803
    %v4805 = vpop.f32.mrb[0].mxu0
    %v4806 = vpop.f32.mrb[0].mxu0
    %v4807 = vadd.f32 %v4766, %v4806
    %v4808 = vpop.f32.mrb[0].mxu0
    %4809 = vdwg.mxu0
    %4810 = vmatprep.subr.bf16.mxu0 0
    %4811 = vmatpush1.bf16.msra.mxu0 %v4379
    %4812 = vmatprep.subr.bf16.mxu0 0
    %4813 = vmatpush1.bf16.msra.mxu0 %v4380
    %4814 = vmatprep.subr.bf16.mxu0 0
    %4815 = vmatpush1.bf16.msra.mxu0 %v4381
    %4816 = vmatprep.subr.bf16.mxu0 0
    %4817 = vmatpush1.bf16.msra.mxu0 %v4382
    %4818 = vmatprep.subr.bf16.mxu0 0
    %4819 = vmatpush1.bf16.msra.mxu0 %v4383
    %4820 = vmatprep.subr.bf16.mxu0 0
    %4821 = vmatpush1.bf16.msra.mxu0 %v4384
    %4822 = vmatprep.subr.bf16.mxu0 0
    %4823 = vmatpush1.bf16.msra.mxu0 %v4385
    %4824 = vmatprep.subr.bf16.mxu0 0
    %4825 = vmatpush1.bf16.msra.mxu0 %v4386
    %4826 = vmatprep.subr.bf16.mxu0 0
    %4827 = vmatpush1.bf16.msra.mxu0 %v4387
    %4828 = vmatprep.subr.bf16.mxu0 0
    %4829 = vmatpush1.bf16.msra.mxu0 %v4388
    %4830 = vmatprep.subr.bf16.mxu0 0
    %4831 = vmatpush1.bf16.msra.mxu0 %v4389
    %4832 = vmatprep.subr.bf16.mxu0 0
    %4833 = vmatpush1.bf16.msra.mxu0 %v4390
    %4834 = vmatprep.subr.bf16.mxu0 0
    %4835 = vmatpush1.bf16.msra.mxu0 %v4391
    %4836 = vmatprep.subr.bf16.mxu0 0
    %4837 = vmatpush1.bf16.msra.mxu0 %v4392
    %4838 = vmatprep.subr.bf16.mxu0 0
    %4839 = vmatpush1.bf16.msra.mxu0 %v4393
    %4840 = vmatprep.subr.bf16.mxu0 0
    %4841 = vmatpush1.bf16.msra.mxu0 %v4394
    %4842 = vmatprep.mubr.bf16.mxu0 %v3489
    %4843 = vmatmul.mubr.bf16.gmra.mrb[0].mxu0 %v3488
    %v4844 = vpop.f32.mrb[0].mxu0
    %v4845 = vadd.f32 %v4804, %v4844
    %v4846 = vpop.f32.mrb[0].mxu0
    %v4847 = vpop.f32.mrb[0].mxu0
    %v4848 = vadd.f32 %v4807, %v4847
    %v4849 = vpop.f32.mrb[0].mxu0
    %4850 = vdwg.mxu0
    %v4851 = vadd.f32 %v2814, %v4845
    %v4852 = vadd.f32 %v2815, %v4848
    %s4853 = scalar_lea.vmem %s12, 1
    %v4854 = vld [vmem:[%s4853] sm:$0x1]
    %s4855 = scalar_lea.vmem %s13, 1
    %v4856 = vld [vmem:[%s4855] sm:$0x1]
    %v4857 = vsel %vm99, %v4851, 0.0
    %4858 = vadd.xlane.f32.xlu0 %v4857
    %v4859 = vpop.xlane.xlu0 %4858
    %v4860 = vsel %vm99, %v4852, 0.0
    %4861 = vadd.xlane.f32.xlu0 %v4860
    %v4862 = vpop.xlane.xlu0 %4861
    %v4863 = vmul.f32 %v4859, %v379
    %v4864 = vmul.f32 %v4862, %v379
    %v4865 = vsub.f32 %v4851, %v4863
    %v4866 = vsub.f32 %v4852, %v4864
    %v4867 = vmul.f32 %v4865, %v4865
    %v4868 = vmul.f32 %v4866, %v4866
    %v4869 = vsel %vm99, %v4867, 0.0
    %4870 = vadd.xlane.f32.xlu0 %v4869
    %v4871 = vpop.xlane.xlu0 %4870
    %v4872 = vsel %vm99, %v4868, 0.0
    %4873 = vadd.xlane.f32.xlu0 %v4872
    %v4874 = vpop.xlane.xlu0 %4873
    %v4875 = vmul.f32 %v4871, %v379
    %v4876 = vmul.f32 %v4874, %v379
    %v4877 = vadd.f32 %v4875, 1e-05
    %v4878 = vadd.f32 %v4876, 1e-05
    %v4879 = vrsqrt.pop %v4877
    %v4880 = vrsqrt.pop %v4878
    %v4881 = vmul.f32 %v4865, %v4879
    %v4882 = vmul.f32 %v4866, %v4880
    %v4884 = vlaneseq
    %v4885 = vshrl.u32 %v4884, 7
    %v4886 = vsub.s32 0, %v4885
    %v4887 = vrot.slane %v4854, %v4886
    %v4889 = vmul.f32 %v4881, %v4887
    %v4890 = vmul.f32 %v4882, %v4887
    %v4892 = vlaneseq
    %v4893 = vshrl.u32 %v4892, 7
    %v4894 = vsub.s32 0, %v4893
    %v4895 = vrot.slane %v4856, %v4894
    %v4897 = vadd.f32 %v4889, %v4895
    %v4898 = vadd.f32 %v4890, %v4895
    %v4899 = vld [vmem:[%s1] sm:$0x1]
    %v4900 = vpack.c.bf16 %v4898, %v4897
    %vm4901 = vcmask 130048
    %v4903 = vsel %vm4901, %v4899, 0
    %4905 = vmatprep.subr.bf16.mxu0 0
    %4906 = vmatpush1.bf16.msra.mxu0 %v4900
    %4907 = vmatprep.subr.bf16.mxu0 0
    %4908 = vmatpush1.bf16.msra.mxu0 0
    %4909 = vmatprep.subr.bf16.mxu0 0
    %4910 = vmatpush1.bf16.msra.mxu0 0
    %4911 = vmatprep.subr.bf16.mxu0 0
    %4912 = vmatpush1.bf16.msra.mxu0 0
    %4913 = vmatprep.subr.bf16.mxu0 0
    %4914 = vmatpush1.bf16.msra.mxu0 0
    %4915 = vmatprep.subr.bf16.mxu0 0
    %4916 = vmatpush1.bf16.msra.mxu0 0
    %4917 = vmatprep.subr.bf16.mxu0 0
    %4918 = vmatpush1.bf16.msra.mxu0 0
    %4919 = vmatprep.subr.bf16.mxu0 0
    %4920 = vmatpush1.bf16.msra.mxu0 0
    %4921 = vmatprep.subr.bf16.mxu0 0
    %4922 = vmatpush1.bf16.msra.mxu0 0
    %4923 = vmatprep.subr.bf16.mxu0 0
    %4924 = vmatpush1.bf16.msra.mxu0 0
    %4925 = vmatprep.subr.bf16.mxu0 0
    %4926 = vmatpush1.bf16.msra.mxu0 0
    %4927 = vmatprep.subr.bf16.mxu0 0
    %4928 = vmatpush1.bf16.msra.mxu0 0
    %4929 = vmatprep.subr.bf16.mxu0 0
    %4930 = vmatpush1.bf16.msra.mxu0 0
    %4931 = vmatprep.subr.bf16.mxu0 0
    %4932 = vmatpush1.bf16.msra.mxu0 0
    %4933 = vmatprep.subr.bf16.mxu0 0
    %4934 = vmatpush1.bf16.msra.mxu0 0
    %4935 = vmatprep.subr.bf16.mxu0 0
    %4936 = vmatpush1.bf16.msra.mxu0 0
    %4937 = vmatprep.mubr.bf16.mxu0 0
    %4938 = vmatmul.mubr.bf16.gmra.mrb[0].mxu0 %v4903
    %v4939 = vpop.f32.mrb[0].mxu0
    %v4940 = vadd.f32 0.0, %v4939
    %v4941 = vpop.f32.mrb[0].mxu0
    %v4942 = vpop.f32.mrb[0].mxu0
    %v4943 = vpop.f32.mrb[0].mxu0
    %4944 = vdwg.mxu0
    %v4945 = vpack.c.bf16 %v4940, %v4940
    %v4946 = vld [vmem:[%s16] sm:$0xf]
    %v4947 = vld [vmem:[%s16 + $0x4] sm:$0xf]
    %v4948 = vld [vmem:[%s16 + $0x8] sm:$0xf]
    %v4949 = vld [vmem:[%s16 + $0xc] sm:$0xf]
    %v4950 = vld [vmem:[%s17] sm:$0x1]
    %v4952 = vlaneseq
    %v4953 = vshrl.u32 %v4952, 7
    %v4954 = vsub.s32 0, %v4953
    %v4955 = vrot.slane %v4950, %v4954
    %v4961 = vunpack.c.l.b16 %v4946
    %v4962 = vunpack.c.l.b16 %v4947
    %v4963 = vunpack.c.l.b16 %v4948
    %v4964 = vunpack.c.l.b16 %v4949
    %v4965 = vpack.c.b16 %v4962, %v4961
    %v4966 = vpack.c.b16 %v4964, %v4963
    %v4970 = vsel %vm99, %v4945, 0
    %4972 = vmatprep.subr.bf16.mxu0 0
    %4973 = vmatpush1.bf16.msra.mxu0 %v4965
    %4974 = vmatprep.subr.bf16.mxu0 0
    %4975 = vmatpush1.bf16.msra.mxu0 %v4966
    %4976 = vmatprep.subr.bf16.mxu0 0
    %4977 = vmatpush1.bf16.msra.mxu0 0
    %4978 = vmatprep.subr.bf16.mxu0 0
    %4979 = vmatpush1.bf16.msra.mxu0 0
    %4980 = vmatprep.subr.bf16.mxu0 0
    %4981 = vmatpush1.bf16.msra.mxu0 0
    %4982 = vmatprep.subr.bf16.mxu0 0
    %4983 = vmatpush1.bf16.msra.mxu0 0
    %4984 = vmatprep.subr.bf16.mxu0 0
    %4985 = vmatpush1.bf16.msra.mxu0 0
    %4986 = vmatprep.subr.bf16.mxu0 0
    %4987 = vmatpush1.bf16.msra.mxu0 0
    %4988 = vmatprep.subr.bf16.mxu0 0
    %4989 = vmatpush1.bf16.msra.mxu0 0
    %4990 = vmatprep.subr.bf16.mxu0 0
    %4991 = vmatpush1.bf16.msra.mxu0 0
    %4992 = vmatprep.subr.bf16.mxu0 0
    %4993 = vmatpush1.bf16.msra.mxu0 0
    %4994 = vmatprep.subr.bf16.mxu0 0
    %4995 = vmatpush1.bf16.msra.mxu0 0
    %4996 = vmatprep.subr.bf16.mxu0 0
    %4997 = vmatpush1.bf16.msra.mxu0 0
    %4998 = vmatprep.subr.bf16.mxu0 0
    %4999 = vmatpush1.bf16.msra.mxu0 0
    %5000 = vmatprep.subr.bf16.mxu0 0
    %5001 = vmatpush1.bf16.msra.mxu0 0
    %5002 = vmatprep.subr.bf16.mxu0 0
    %5003 = vmatpush1.bf16.msra.mxu0 0
    %5004 = vmatprep.mubr.bf16.mxu0 0
    %5005 = vmatmul.mubr.bf16.gmra.mrb[0].mxu0 %v4970
    %v5006 = vpop.f32.mrb[0].mxu0
    %v5007 = vadd.f32 %v4955, %v5006
    %v5008 = vpop.f32.mrb[0].mxu0
    %v5009 = vpop.f32.mrb[0].mxu0
    %v5010 = vpop.f32.mrb[0].mxu0
    %5011 = vdwg.mxu0
    %vm5012 = vcmask 25600
    %v5013 = vsel %vm5012, %v5007, -inf
    %5014 = vmax.xlane.f32.xlu0 %v5013
    %v5015 = vpop.xlane.xlu0 %5014
    %v5016 = vsub.f32 %v5007, %v5015
    %v5017 = vmul.f32 %v5016, 1.442695
    %v5018 = vpow.pop %v5017
    %v5019 = vsel %vm5012, %v5018, 0.0
    %5020 = vadd.xlane.f32.xlu0 %v5019
    %v5021 = vpop.xlane.xlu0 %5020
    %v5022 = vrcp.pop %v5021
    %v5023 = vmul.f32 %v5018, %v5022
    %v5024 = vld [vmem:[%s18] sm:$0xf]
    %v5025 = vld [vmem:[%s18 + $0x4] sm:$0xf]
    %v5026 = vld [vmem:[%s18 + $0x8] sm:$0xf]
    %v5027 = vld [vmem:[%s18 + $0xc] sm:$0xf]
    %v5028 = vld [vmem:[%s19] sm:$0x1]
    %v5030 = vlaneseq
    %v5031 = vshrl.u32 %v5030, 7
    %v5032 = vsub.s32 0, %v5031
    %v5033 = vrot.slane %v5028, %v5032
    %v5039 = vunpack.c.l.b16 %v5024
    %v5040 = vunpack.c.l.b16 %v5025
    %v5041 = vunpack.c.l.b16 %v5026
    %v5042 = vunpack.c.l.b16 %v5027
    %v5043 = vpack.c.b16 %v5040, %v5039
    %v5044 = vpack.c.b16 %v5042, %v5041
    %5047 = vmatprep.subr.bf16.mxu0 0
    %5048 = vmatpush1.bf16.msra.mxu0 %v5043
    %5049 = vmatprep.subr.bf16.mxu0 0
    %5050 = vmatpush1.bf16.msra.mxu0 %v5044
    %5051 = vmatprep.subr.bf16.mxu0 0
    %5052 = vmatpush1.bf16.msra.mxu0 0
    %5053 = vmatprep.subr.bf16.mxu0 0
    %5054 = vmatpush1.bf16.msra.mxu0 0
    %5055 = vmatprep.subr.bf16.mxu0 0
    %5056 = vmatpush1.bf16.msra.mxu0 0
    %5057 = vmatprep.subr.bf16.mxu0 0
    %5058 = vmatpush1.bf16.msra.mxu0 0
    %5059 = vmatprep.subr.bf16.mxu0 0
    %5060 = vmatpush1.bf16.msra.mxu0 0
    %5061 = vmatprep.subr.bf16.mxu0 0
    %5062 = vmatpush1.bf16.msra.mxu0 0
    %5063 = vmatprep.subr.bf16.mxu0 0
    %5064 = vmatpush1.bf16.msra.mxu0 0
    %5065 = vmatprep.subr.bf16.mxu0 0
    %5066 = vmatpush1.bf16.msra.mxu0 0
    %5067 = vmatprep.subr.bf16.mxu0 0
    %5068 = vmatpush1.bf16.msra.mxu0 0
    %5069 = vmatprep.subr.bf16.mxu0 0
    %5070 = vmatpush1.bf16.msra.mxu0 0
    %5071 = vmatprep.subr.bf16.mxu0 0
    %5072 = vmatpush1.bf16.msra.mxu0 0
    %5073 = vmatprep.subr.bf16.mxu0 0
    %5074 = vmatpush1.bf16.msra.mxu0 0
    %5075 = vmatprep.subr.bf16.mxu0 0
    %5076 = vmatpush1.bf16.msra.mxu0 0
    %5077 = vmatprep.subr.bf16.mxu0 0
    %5078 = vmatpush1.bf16.msra.mxu0 0
    %5079 = vmatprep.mubr.bf16.mxu0 0
    %5080 = vmatmul.mubr.bf16.gmra.mrb[0].mxu0 %v4970
    %v5081 = vpop.f32.mrb[0].mxu0
    %v5082 = vadd.f32 %v5033, %v5081
    %v5083 = vpop.f32.mrb[0].mxu0
    %v5084 = vpop.f32.mrb[0].mxu0
    %v5085 = vpop.f32.mrb[0].mxu0
    %5086 = vdwg.mxu0
    %v5087 = vpack.c.bf16 %v5023, %v5023
    %v5088 = vld [vmem:[%s20] sm:$0x3]
    %v5090 = vsel %vm231, %v5087, 0
    %v5093 = vsel %vm235, %v5088, 0
    %5095 = vmatprep.subr.bf16.mxu0 0
    %5096 = vmatpush1.bf16.msra.mxu0 %v5093
    %5097 = vmatprep.subr.bf16.mxu0 0
    %5098 = vmatpush1.bf16.msra.mxu0 0
    %5099 = vmatprep.subr.bf16.mxu0 0
    %5100 = vmatpush1.bf16.msra.mxu0 0
    %5101 = vmatprep.subr.bf16.mxu0 0
    %5102 = vmatpush1.bf16.msra.mxu0 0
    %5103 = vmatprep.subr.bf16.mxu0 0
    %5104 = vmatpush1.bf16.msra.mxu0 0
    %5105 = vmatprep.subr.bf16.mxu0 0
    %5106 = vmatpush1.bf16.msra.mxu0 0
    %5107 = vmatprep.subr.bf16.mxu0 0
    %5108 = vmatpush1.bf16.msra.mxu0 0
    %5109 = vmatprep.subr.bf16.mxu0 0
    %5110 = vmatpush1.bf16.msra.mxu0 0
    %5111 = vmatprep.subr.bf16.mxu0 0
    %5112 = vmatpush1.bf16.msra.mxu0 0
    %5113 = vmatprep.subr.bf16.mxu0 0
    %5114 = vmatpush1.bf16.msra.mxu0 0
    %5115 = vmatprep.subr.bf16.mxu0 0
    %5116 = vmatpush1.bf16.msra.mxu0 0
    %5117 = vmatprep.subr.bf16.mxu0 0
    %5118 = vmatpush1.bf16.msra.mxu0 0
    %5119 = vmatprep.subr.bf16.mxu0 0
    %5120 = vmatpush1.bf16.msra.mxu0 0
    %5121 = vmatprep.subr.bf16.mxu0 0
    %5122 = vmatpush1.bf16.msra.mxu0 0
    %5123 = vmatprep.subr.bf16.mxu0 0
    %5124 = vmatpush1.bf16.msra.mxu0 0
    %5125 = vmatprep.subr.bf16.mxu0 0
    %5126 = vmatpush1.bf16.msra.mxu0 0
    %5127 = vmatprep.mubr.bf16.mxu0 0
    %5128 = vmatmul.mubr.bf16.gmra.mrb[0].mxu0 %v5090
    %v5129 = vpop.f32.mrb[0].mxu0
    %v5130 = vadd.f32 0.0, %v5129
    %v5131 = vpop.f32.mrb[0].mxu0
    %v5132 = vpop.f32.mrb[0].mxu0
    %v5133 = vpop.f32.mrb[0].mxu0
    %5134 = vdwg.mxu0
    %v5135 = vmul.f32 %v5130, %v5082
    %v5136 = vpack.c.bf16 %v5135, %v5135
    %v5137 = vld [vmem:[%s21] sm:$0xf]
    %v5138 = vld [vmem:[%s21 + $0x4] sm:$0xf]
    %v5141 = vunpack.c.l.b16 %v5137
    %v5142 = vunpack.c.l.b16 %v5138
    %v5143 = vpack.c.b16 %v5142, %v5141
    %v5146 = vsel %vm4901, %v5136, 0
    %5148 = vmatprep.subr.bf16.mxu0 0
    %5149 = vmatpush1.bf16.msra.mxu0 %v5143
    %5150 = vmatprep.subr.bf16.mxu0 0
    %5151 = vmatpush1.bf16.msra.mxu0 0
    %5152 = vmatprep.subr.bf16.mxu0 0
    %5153 = vmatpush1.bf16.msra.mxu0 0
    %5154 = vmatprep.subr.bf16.mxu0 0
    %5155 = vmatpush1.bf16.msra.mxu0 0
    %5156 = vmatprep.subr.bf16.mxu0 0
    %5157 = vmatpush1.bf16.msra.mxu0 0
    %5158 = vmatprep.subr.bf16.mxu0 0
    %5159 = vmatpush1.bf16.msra.mxu0 0
    %5160 = vmatprep.subr.bf16.mxu0 0
    %5161 = vmatpush1.bf16.msra.mxu0 0
    %5162 = vmatprep.subr.bf16.mxu0 0
    %5163 = vmatpush1.bf16.msra.mxu0 0
    %5164 = vmatprep.subr.bf16.mxu0 0
    %5165 = vmatpush1.bf16.msra.mxu0 0
    %5166 = vmatprep.subr.bf16.mxu0 0
    %5167 = vmatpush1.bf16.msra.mxu0 0
    %5168 = vmatprep.subr.bf16.mxu0 0
    %5169 = vmatpush1.bf16.msra.mxu0 0
    %5170 = vmatprep.subr.bf16.mxu0 0
    %5171 = vmatpush1.bf16.msra.mxu0 0
    %5172 = vmatprep.subr.bf16.mxu0 0
    %5173 = vmatpush1.bf16.msra.mxu0 0
    %5174 = vmatprep.subr.bf16.mxu0 0
    %5175 = vmatpush1.bf16.msra.mxu0 0
    %5176 = vmatprep.subr.bf16.mxu0 0
    %5177 = vmatpush1.bf16.msra.mxu0 0
    %5178 = vmatprep.subr.bf16.mxu0 0
    %5179 = vmatpush1.bf16.msra.mxu0 0
    %5180 = vmatprep.mubr.bf16.mxu0 0
    %5181 = vmatmul.mubr.bf16.gmra.mrb[0].mxu0 %v5146
    %v5182 = vpop.f32.mrb[0].mxu0
    %v5183 = vadd.f32 0.0, %v5182
    %v5184 = vpop.f32.mrb[0].mxu0
    %v5185 = vpop.f32.mrb[0].mxu0
    %v5186 = vpop.f32.mrb[0].mxu0
    %5187 = vdwg.mxu0
    %5188 = vst [vmem:[#allocation2] sm:$0x3] %v5183
    // Predicated region
    $region90: #{tpu_custom_call.1} parent=1 // pred_check
      _
    $region91: #{tpu_custom_call.1} parent=1 // pred_check_branch
      %5190 = sbr.rel (0) target = $region93
    $region92: #{tpu_custom_call.1} parent=1 // pred_region
      %s5192 = ssub.s32 32, 32
      %5193 = vsyncadd [#allocation3], %s5192
      %s5195 = sshll.u32 [#allocation2], 4
      %s5196 = int_to_ptr.vmem [resolvable:$true] %s5195
      %5198 = dma.vmem_to_hbm [thread:$0]  %s5196, 32, %s22, [#allocation3]
    $region93: #{tpu_custom_call.1} parent=1 // pred_fallthru
      _
    // Predicated region
    $region94: #{tpu_custom_call.1} parent=1 // pred_check
      _
    $region95: #{tpu_custom_call.1} parent=1 // pred_check_branch
      %5200 = sbr.rel (0) target = $region97
    $region96: #{tpu_custom_call.1} parent=1 // pred_region
      %5201 = dma.done [#allocation3], 32
    $region97: #{tpu_custom_call.1} parent=1 // pred_fallthru
      _
    %5202 = vsyncpa [#allocation3], 1

</llo_original>
